<compile_context>
chip_gen: v7x
topology: tpu7x:2x2x1
jax: 0.10.0
libtpu: 0.0.40
codegen_flags: <defaults>
</compile_context>

<pallas_src>
import functools

import jax
import jax.numpy as jnp
from jax.experimental import pallas as pl
from jax.experimental.pallas import tpu as pltpu

# ---------------------------------------------------------------------------
# Architecture constants (input (N, 1, 21, 2))
# ---------------------------------------------------------------------------
H_IN, W_IN = 21, 2
C1, C2, C3 = 64, 128, 256
H1, W1 = 22, 3          # conv1 output (k=2, pad=1)
HP1 = 11                # pool1 output height (width -> 1, col 2 dropped by floor mode)
H2, W2 = 12, 2          # conv2 output
HP2 = 6                 # pool2 output height (width -> 1)
H3, W3 = 4, 3           # conv3 output (k=(5,1), pad=1)
FC1_IN = C3 * H3 * W3   # 3072
FC1_OUT = 256


def _relu(x):
    return jnp.maximum(x, 0.0)


def _dot(a, b):
    # bf16 x bf16 MXU matmul with f32 accumulation.
    return jnp.dot(a.astype(jnp.bfloat16), b, preferred_element_type=jnp.float32)


# ---------------------------------------------------------------------------
# Fused kernel: one grid step == one sample, everything VMEM-resident.
# ---------------------------------------------------------------------------
def _fused_cnn_kernel(xp_ref, w1_ref, b1_ref, w2_ref, b2_ref, w3_ref, b3_ref,
                      w4_ref, b4_ref, w5_ref, b5_ref, out_ref,
                      s2_ref, s3_ref, s4_ref):
    """SimpleCNN forward for one sample.

    xp_ref : (23, 4)   f32  zero-padded input (H+2, W+2), Cin == 1
    w1_ref : (4, 64)   f32  conv1 taps, row = dh*2 + dw   (VPU path, K=4)
    w2_ref : (256, 128) bf16 conv2 taps stacked: rows [(dh*2+dw)*64, +64)
    w3_ref : (640, 256) bf16 conv3 taps stacked: rows [dh*128, +128)
    w4_ref : (3072, 256) bf16 FC1 weight, rows pre-permuted to NHWC flatten order
    w5_ref : (256, NCP) bf16 FC2 weight, lane-padded to a multiple of 128
    b*_ref : (1, C)    f32
    s2_ref : (13, 64)  f32 scratch: pool1 output with zero row-pad (conv2 input)
    s3_ref : (8, 128)  f32 scratch: pool2 output with zero row-pad (conv3 input)
    s4_ref : (1, 3072) f32 scratch: lane-dense flattened FC1 input
    """
    b1 = b1_ref[...]
    b2 = b2_ref[...]
    b3 = b3_ref[...]
    b4 = b4_ref[...]
    b5 = b5_ref[...]

    # ---- conv1 (1->64, k=2, pad=1) + ReLU: K=4 -> VPU broadcast-MACs (no MXU).
    # Only output width columns 0 and 1 are needed (col 2 is dropped by the 2x2 pool).
    def conv1_col(ow):
        acc = None
        for dh in range(2):
            for dw in range(2):
                xs = xp_ref[dh:dh + H1, ow + dw:ow + dw + 1]        # (22, 1)
                wk = w1_ref[2 * dh + dw:2 * dh + dw + 1, :]         # (1, 64)
                t = xs * wk                                         # (22, 64)
                acc = t if acc is None else acc + t
        return _relu(acc + b1)

    m1 = jnp.maximum(conv1_col(0), conv1_col(1))                    # (22, 64)

    # ---- maxpool 2x2 (fused): compact row pairs into the zero-padded conv2 input.
    s2_ref[...] = jnp.zeros_like(s2_ref)
    for i in range(HP1):
        s2_ref[1 + i:2 + i, :] = jnp.maximum(m1[2 * i:2 * i + 1, :],
                                             m1[2 * i + 1:2 * i + 2, :])

    # ---- conv2 (64->128, k=2, pad=1) + ReLU: four (12,64)@(64,128) MXU matmuls.
    # Width-pad columns are zero, so output col 0 uses the dw=1 taps and col 1 the dw=0 taps.
    def w2_tap(dh, dw):
        r = (2 * dh + dw) * C1
        return w2_ref[r:r + C1, :]

    x_top = s2_ref[0:H2, :]          # rows 0..11  (dh = 0)
    x_bot = s2_ref[1:H2 + 1, :]      # rows 1..12  (dh = 1)
    c2_0 = _relu(b2 + _dot(x_top, w2_tap(0, 1)) + _dot(x_bot, w2_tap(1, 1)))
    c2_1 = _relu(b2 + _dot(x_top, w2_tap(0, 0)) + _dot(x_bot, w2_tap(1, 0)))

    # ---- maxpool 2x2 (fused) into the zero-padded conv3 input.
    m2 = jnp.maximum(c2_0, c2_1)                                    # (12, 128)
    s3_ref[...] = jnp.zeros_like(s3_ref)
    for j in range(HP2):
        s3_ref[1 + j:2 + j, :] = jnp.maximum(m2[2 * j:2 * j + 1, :],
                                             m2[2 * j + 1:2 * j + 2, :])

    # ---- conv3 (128->256, k=(5,1), pad=1) + ReLU.
    # Width-pad columns only ever see zeros -> output cols 0 and 2 equal relu(b3).
    acc3 = b3
    for dh in range(5):
        acc3 = acc3 + _dot(s3_ref[dh:dh + H3, :], w3_ref[dh * C2:(dh + 1) * C2, :])
    c3_mid = _relu(acc3)                                            # (4, 256) -> width col 1
    c3_pad = _relu(b3)                                              # (1, 256) -> width cols 0, 2

    # ---- flatten (NHWC order; w4 rows were permuted to match) into lane-dense staging.
    for h in range(H3):
        base = h * W3 * C3
        s4_ref[:, base:base + C3] = c3_pad
        s4_ref[:, base + C3:base + 2 * C3] = c3_mid[h:h + 1, :]
        s4_ref[:, base + 2 * C3:base + 3 * C3] = c3_pad

    # ---- FC1 + ReLU.
    h1 = _relu(_dot(s4_ref[...], w4_ref[...]) + b4)                 # (1, 256)

    # Dropout(0.5) is identity at inference time.
    # TODO(synk): training-mode stochastic dropout not implemented (inference semantics).

    # ---- FC2 (output lane-padded; wrapper slices the real classes).
    out_ref[...] = _dot(h1, w5_ref[...]) + b5                       # (1, NCP)


# ---------------------------------------------------------------------------
# Parameter preparation (one-time layout / dtype conversion for the kernel)
# ---------------------------------------------------------------------------
def init_params(num_classes, key):
    ks = jax.random.split(key, 10)
    s = 0.05
    return {
        "w1": jax.random.normal(ks[0], (C1, 1, 2, 2), jnp.float32) * s,
        "b1": jax.random.normal(ks[1], (C1,), jnp.float32) * s,
        "w2": jax.random.normal(ks[2], (C2, C1, 2, 2), jnp.float32) * s,
        "b2": jax.random.normal(ks[3], (C2,), jnp.float32) * s,
        "w3": jax.random.normal(ks[4], (C3, C2, 5, 1), jnp.float32) * s,
        "b3": jax.random.normal(ks[5], (C3,), jnp.float32) * s,
        "w4": jax.random.normal(ks[6], (FC1_IN, FC1_OUT), jnp.float32) * s,   # (in, out), NCHW flatten
        "b4": jax.random.normal(ks[7], (FC1_OUT,), jnp.float32) * s,
        "w5": jax.random.normal(ks[8], (FC1_OUT, num_classes), jnp.float32) * s,
        "b5": jax.random.normal(ks[9], (num_classes,), jnp.float32) * s,
    }


def prepare_params(params):
    """Convert PyTorch-layout params into the kernel's stacked / permuted / bf16 layout."""
    num_classes = params["w5"].shape[1]
    ncp = ((num_classes + 127) // 128) * 128
    w5p = jnp.zeros((FC1_OUT, ncp), jnp.float32).at[:, :num_classes].set(params["w5"])
    b5p = jnp.zeros((1, ncp), jnp.float32).at[0, :num_classes].set(params["b5"])
    return {
        # conv1: (Cout,1,2,2) -> (4, 64), row = dh*2+dw
        "w1": params["w1"].reshape(C1, 4).T.astype(jnp.float32),
        "b1": params["b1"].reshape(1, C1).astype(jnp.float32),
        # conv2: (Cout,Cin,2,2) -> (4*64, 128), row = (dh*2+dw)*64 + ci
        "w2": params["w2"].transpose(2, 3, 1, 0).reshape(4 * C1, C2).astype(jnp.bfloat16),
        "b2": params["b2"].reshape(1, C2).astype(jnp.float32),
        # conv3: (Cout,Cin,5,1) -> (5*128, 256), row = dh*128 + ci
        "w3": params["w3"].transpose(2, 3, 1, 0).reshape(5 * C2, C3).astype(jnp.bfloat16),
        "b3": params["b3"].reshape(1, C3).astype(jnp.float32),
        # FC1: permute rows from NCHW flatten (c*12+h*3+w) to NHWC flatten (h*768+w*256+c)
        "w4": params["w4"].reshape(C3, H3, W3, FC1_OUT).transpose(1, 2, 0, 3)
                          .reshape(FC1_IN, FC1_OUT).astype(jnp.bfloat16),
        "b4": params["b4"].reshape(1, FC1_OUT).astype(jnp.float32),
        # FC2: lane-padded to a multiple of 128
        "w5": w5p.astype(jnp.bfloat16),
        "b5": b5p,
    }


# ---------------------------------------------------------------------------
# Forward wrapper: single fused pallas_call
# ---------------------------------------------------------------------------
@functools.partial(jax.jit, static_argnames=("num_classes",))
def simple_cnn_forward(prep, x, *, num_classes):
    n = x.shape[0]
    assert x.shape[1:] == (1, H_IN, W_IN), x.shape
    xp = jnp.pad(x[:, 0, :, :], ((0, 0), (1, 1), (1, 1)))           # (N, 23, 4)

    ncp = prep["w5"].shape[1]
    weight_args = (prep["w1"], prep["b1"], prep["w2"], prep["b2"],
                   prep["w3"], prep["b3"], prep["w4"], prep["b4"],
                   prep["w5"], prep["b5"])

    def wspec(a):
        return pl.BlockSpec(a.shape, lambda b: (0, 0))              # whole array, VMEM-resident

    in_specs = [pl.BlockSpec((None, H_IN + 2, W_IN + 2), lambda b: (b, 0, 0))]
    in_specs += [wspec(a) for a in weight_args]

    macs = n * (H1 * 2 * C1 * 4                 # conv1 (2 width cols actually computed)
                + H2 * W2 * C2 * (C1 * 2)       # conv2 (2 live taps per column)
                + H3 * C3 * (C2 * 5)            # conv3 (center column)
                + FC1_IN * FC1_OUT
                + FC1_OUT * ncp)
    bytes_accessed = int(sum(int(a.size) * a.dtype.itemsize for a in weight_args)
                         + xp.size * 4 + n * ncp * 4)

    out = pl.pallas_call(
        _fused_cnn_kernel,
        grid=(n,),
        in_specs=in_specs,
        out_specs=pl.BlockSpec((None, 1, ncp), lambda b: (b, 0, 0)),
        out_shape=jax.ShapeDtypeStruct((n, 1, ncp), jnp.float32),
        scratch_shapes=[
            pltpu.VMEM((HP1 + 2, C1), jnp.float32),   # padded pool1 (conv2 input)
            pltpu.VMEM((HP2 + 2, C2), jnp.float32),   # padded pool2 (conv3 input)
            pltpu.VMEM((1, FC1_IN), jnp.float32),     # lane-dense FC1 input
        ],
        compiler_params=pltpu.CompilerParams(dimension_semantics=("parallel",)),
        cost_estimate=pl.CostEstimate(flops=2 * macs, transcendentals=0,
                                      bytes_accessed=bytes_accessed),
    )(xp, *weight_args)
    return out[:, 0, :num_classes]


# ---------------------------------------------------------------------------
# Pure-XLA f32 reference (PyTorch semantics) for validation
# ---------------------------------------------------------------------------
def reference_forward(params, x):
    def conv(z, w, b, pad):
        z = jax.lax.conv_general_dilated(z, w, (1, 1), [(pad, pad), (pad, pad)],
                                         dimension_numbers=("NCHW", "OIHW", "NCHW"))
        return jax.nn.relu(z + b.reshape(1, -1, 1, 1))

    def pool(z):
        return jax.lax.reduce_window(z, -jnp.inf, jax.lax.max,
                                     (1, 1, 2, 2), (1, 1, 2, 2), "VALID")

    z = conv(x, params["w1"], params["b1"], 1)
    z = pool(z)
    z = conv(z, params["w2"], params["b2"], 1)
    z = pool(z)
    z = conv(z, params["w3"], params["b3"], 1)
    z = z.reshape(z.shape[0], -1)                                   # NCHW flatten -> 3072
    z = jax.nn.relu(z @ params["w4"] + params["b4"])
    return z @ params["w5"] + params["b5"]


if __name__ == "__main__":
    num_classes = 10
    batch = 2
    key = jax.random.PRNGKey(0)
    pkey, xkey = jax.random.split(key)
    params = init_params(num_classes, pkey)
    prep = prepare_params(params)
    x = jax.random.normal(xkey, (batch, 1, H_IN, W_IN), jnp.float32)

    logits = simple_cnn_forward(prep, x, num_classes=num_classes)
    jax.block_until_ready(logits)
    assert logits.shape == (batch, num_classes), logits.shape

    # Validate the fused bf16 kernel against the f32 XLA reference (loose tol for bf16).
    ref = reference_forward(params, x)
    err = float(jnp.max(jnp.abs(logits - ref)))
    tol = 1e-2 + 5e-2 * float(jnp.max(jnp.abs(ref)))
    assert err <= tol, (err, tol)

    print("KERNEL_OK")
</pallas_src>

<mosaic_0001>
module attributes {stable_mosaic.version = 11 : i64} {
  func.func @_fused_cnn_kernel(%arg0: i32, %arg1: memref<1x23x4xf32, #tpu.memory_space<vmem>>, %arg2: memref<4x64xf32, #tpu.memory_space<vmem>>, %arg3: memref<1x64xf32, #tpu.memory_space<vmem>>, %arg4: memref<256x128xbf16, #tpu.memory_space<vmem>>, %arg5: memref<1x128xf32, #tpu.memory_space<vmem>>, %arg6: memref<640x256xbf16, #tpu.memory_space<vmem>>, %arg7: memref<1x256xf32, #tpu.memory_space<vmem>>, %arg8: memref<3072x256xbf16, #tpu.memory_space<vmem>>, %arg9: memref<1x256xf32, #tpu.memory_space<vmem>>, %arg10: memref<256x128xbf16, #tpu.memory_space<vmem>>, %arg11: memref<1x128xf32, #tpu.memory_space<vmem>>, %arg12: memref<1x1x128xf32, #tpu.memory_space<vmem>>, %arg13: memref<13x64xf32, #tpu.memory_space<vmem>>, %arg14: memref<8x128xf32, #tpu.memory_space<vmem>>, %arg15: memref<1x3072xf32, #tpu.memory_space<vmem>>) attributes {dimension_semantics = [#tpu.dimension_semantics<parallel>], iteration_bounds = array<i64: 2>, scalar_prefetch = 0 : i64, scratch_operands = 3 : i64, tpu.core_type = #tpu.core_type<tc>, window_params = [{transform_indices = @transform_0, window_bounds = array<i64: 1, 23, 4>}, {pipeline_mode = #tpu.pipeline_mode<synchronous>, transform_indices = @transform_1, window_bounds = array<i64: 4, 64>}, {pipeline_mode = #tpu.pipeline_mode<synchronous>, transform_indices = @transform_2, window_bounds = array<i64: 1, 64>}, {pipeline_mode = #tpu.pipeline_mode<synchronous>, transform_indices = @transform_3, window_bounds = array<i64: 256, 128>}, {pipeline_mode = #tpu.pipeline_mode<synchronous>, transform_indices = @transform_4, window_bounds = array<i64: 1, 128>}, {pipeline_mode = #tpu.pipeline_mode<synchronous>, transform_indices = @transform_5, window_bounds = array<i64: 640, 256>}, {pipeline_mode = #tpu.pipeline_mode<synchronous>, transform_indices = @transform_6, window_bounds = array<i64: 1, 256>}, {pipeline_mode = #tpu.pipeline_mode<synchronous>, transform_indices = @transform_7, window_bounds = array<i64: 3072, 256>}, {pipeline_mode = #tpu.pipeline_mode<synchronous>, transform_indices = @transform_8, window_bounds = array<i64: 1, 256>}, {pipeline_mode = #tpu.pipeline_mode<synchronous>, transform_indices = @transform_9, window_bounds = array<i64: 256, 128>}, {pipeline_mode = #tpu.pipeline_mode<synchronous>, transform_indices = @transform_10, window_bounds = array<i64: 1, 128>}, {transform_indices = @transform_11, window_bounds = array<i64: 1, 1, 128>}]} {
    %c0 = arith.constant 0 : index
    %c0_0 = arith.constant 0 : index
    %0 = vector.load %arg3[%c0, %c0_0] : memref<1x64xf32, #tpu.memory_space<vmem>>, vector<1x64xf32>
    %c0_1 = arith.constant 0 : index
    %c0_2 = arith.constant 0 : index
    %1 = vector.load %arg5[%c0_1, %c0_2] : memref<1x128xf32, #tpu.memory_space<vmem>>, vector<1x128xf32>
    %c0_3 = arith.constant 0 : index
    %c0_4 = arith.constant 0 : index
    %2 = vector.load %arg7[%c0_3, %c0_4] : memref<1x256xf32, #tpu.memory_space<vmem>>, vector<1x256xf32>
    %c0_5 = arith.constant 0 : index
    %c0_6 = arith.constant 0 : index
    %3 = vector.load %arg9[%c0_5, %c0_6] : memref<1x256xf32, #tpu.memory_space<vmem>>, vector<1x256xf32>
    %c0_7 = arith.constant 0 : index
    %c0_8 = arith.constant 0 : index
    %4 = vector.load %arg11[%c0_7, %c0_8] : memref<1x128xf32, #tpu.memory_space<vmem>>, vector<1x128xf32>
    %c0_9 = arith.constant 0 : index
    %c0_10 = arith.constant 0 : index
    %c0_11 = arith.constant 0 : index
    %5 = vector.load %arg1[%c0_9, %c0_10, %c0_11] : memref<1x23x4xf32, #tpu.memory_space<vmem>>, vector<1x22x1xf32>
    %6 = vector.shape_cast %5 : vector<1x22x1xf32> to vector<22x1xf32>
    %c0_12 = arith.constant 0 : index
    %c0_13 = arith.constant 0 : index
    %7 = vector.load %arg2[%c0_12, %c0_13] : memref<4x64xf32, #tpu.memory_space<vmem>>, vector<1x64xf32>
    %8 = vector.broadcast %6 : vector<22x1xf32> to vector<22x64xf32>
    %9 = vector.broadcast %7 : vector<1x64xf32> to vector<22x64xf32>
    %10 = arith.mulf %8, %9 : vector<22x64xf32>
    %c0_14 = arith.constant 0 : index
    %c0_15 = arith.constant 0 : index
    %c1 = arith.constant 1 : index
    %11 = vector.load %arg1[%c0_14, %c0_15, %c1] : memref<1x23x4xf32, #tpu.memory_space<vmem>>, vector<1x22x1xf32>
    %12 = vector.shape_cast %11 : vector<1x22x1xf32> to vector<22x1xf32>
    %c1_16 = arith.constant 1 : index
    %c0_17 = arith.constant 0 : index
    %13 = vector.load %arg2[%c1_16, %c0_17] : memref<4x64xf32, #tpu.memory_space<vmem>>, vector<1x64xf32>
    %14 = vector.broadcast %12 : vector<22x1xf32> to vector<22x64xf32>
    %15 = vector.broadcast %13 : vector<1x64xf32> to vector<22x64xf32>
    %16 = arith.mulf %14, %15 : vector<22x64xf32>
    %17 = arith.addf %10, %16 : vector<22x64xf32>
    %c0_18 = arith.constant 0 : index
    %c1_19 = arith.constant 1 : index
    %c0_20 = arith.constant 0 : index
    %18 = vector.load %arg1[%c0_18, %c1_19, %c0_20] : memref<1x23x4xf32, #tpu.memory_space<vmem>>, vector<1x22x1xf32>
    %19 = vector.shape_cast %18 : vector<1x22x1xf32> to vector<22x1xf32>
    %c2 = arith.constant 2 : index
    %c0_21 = arith.constant 0 : index
    %20 = vector.load %arg2[%c2, %c0_21] : memref<4x64xf32, #tpu.memory_space<vmem>>, vector<1x64xf32>
    %21 = vector.broadcast %19 : vector<22x1xf32> to vector<22x64xf32>
    %22 = vector.broadcast %20 : vector<1x64xf32> to vector<22x64xf32>
    %23 = arith.mulf %21, %22 : vector<22x64xf32>
    %24 = arith.addf %17, %23 : vector<22x64xf32>
    %c0_22 = arith.constant 0 : index
    %c1_23 = arith.constant 1 : index
    %c1_24 = arith.constant 1 : index
    %25 = vector.load %arg1[%c0_22, %c1_23, %c1_24] : memref<1x23x4xf32, #tpu.memory_space<vmem>>, vector<1x22x1xf32>
    %26 = vector.shape_cast %25 : vector<1x22x1xf32> to vector<22x1xf32>
    %c3 = arith.constant 3 : index
    %c0_25 = arith.constant 0 : index
    %27 = vector.load %arg2[%c3, %c0_25] : memref<4x64xf32, #tpu.memory_space<vmem>>, vector<1x64xf32>
    %28 = vector.broadcast %26 : vector<22x1xf32> to vector<22x64xf32>
    %29 = vector.broadcast %27 : vector<1x64xf32> to vector<22x64xf32>
    %30 = arith.mulf %28, %29 : vector<22x64xf32>
    %31 = arith.addf %24, %30 : vector<22x64xf32>
    %32 = vector.broadcast %0 : vector<1x64xf32> to vector<22x64xf32>
    %33 = arith.addf %31, %32 : vector<22x64xf32>
    %cst = arith.constant 0.000000e+00 : f32
    %34 = vector.broadcast %cst : f32 to vector<22x64xf32>
    %35 = arith.maximumf %33, %34 : vector<22x64xf32>
    %c0_26 = arith.constant 0 : index
    %c0_27 = arith.constant 0 : index
    %c1_28 = arith.constant 1 : index
    %36 = vector.load %arg1[%c0_26, %c0_27, %c1_28] : memref<1x23x4xf32, #tpu.memory_space<vmem>>, vector<1x22x1xf32>
    %37 = vector.shape_cast %36 : vector<1x22x1xf32> to vector<22x1xf32>
    %c0_29 = arith.constant 0 : index
    %c0_30 = arith.constant 0 : index
    %38 = vector.load %arg2[%c0_29, %c0_30] : memref<4x64xf32, #tpu.memory_space<vmem>>, vector<1x64xf32>
    %39 = vector.broadcast %37 : vector<22x1xf32> to vector<22x64xf32>
    %40 = vector.broadcast %38 : vector<1x64xf32> to vector<22x64xf32>
    %41 = arith.mulf %39, %40 : vector<22x64xf32>
    %c0_31 = arith.constant 0 : index
    %c0_32 = arith.constant 0 : index
    %c2_33 = arith.constant 2 : index
    %42 = vector.load %arg1[%c0_31, %c0_32, %c2_33] : memref<1x23x4xf32, #tpu.memory_space<vmem>>, vector<1x22x1xf32>
    %43 = vector.shape_cast %42 : vector<1x22x1xf32> to vector<22x1xf32>
    %c1_34 = arith.constant 1 : index
    %c0_35 = arith.constant 0 : index
    %44 = vector.load %arg2[%c1_34, %c0_35] : memref<4x64xf32, #tpu.memory_space<vmem>>, vector<1x64xf32>
    %45 = vector.broadcast %43 : vector<22x1xf32> to vector<22x64xf32>
    %46 = vector.broadcast %44 : vector<1x64xf32> to vector<22x64xf32>
    %47 = arith.mulf %45, %46 : vector<22x64xf32>
    %48 = arith.addf %41, %47 : vector<22x64xf32>
    %c0_36 = arith.constant 0 : index
    %c1_37 = arith.constant 1 : index
    %c1_38 = arith.constant 1 : index
    %49 = vector.load %arg1[%c0_36, %c1_37, %c1_38] : memref<1x23x4xf32, #tpu.memory_space<vmem>>, vector<1x22x1xf32>
    %50 = vector.shape_cast %49 : vector<1x22x1xf32> to vector<22x1xf32>
    %c2_39 = arith.constant 2 : index
    %c0_40 = arith.constant 0 : index
    %51 = vector.load %arg2[%c2_39, %c0_40] : memref<4x64xf32, #tpu.memory_space<vmem>>, vector<1x64xf32>
    %52 = vector.broadcast %50 : vector<22x1xf32> to vector<22x64xf32>
    %53 = vector.broadcast %51 : vector<1x64xf32> to vector<22x64xf32>
    %54 = arith.mulf %52, %53 : vector<22x64xf32>
    %55 = arith.addf %48, %54 : vector<22x64xf32>
    %c0_41 = arith.constant 0 : index
    %c1_42 = arith.constant 1 : index
    %c2_43 = arith.constant 2 : index
    %56 = vector.load %arg1[%c0_41, %c1_42, %c2_43] : memref<1x23x4xf32, #tpu.memory_space<vmem>>, vector<1x22x1xf32>
    %57 = vector.shape_cast %56 : vector<1x22x1xf32> to vector<22x1xf32>
    %c3_44 = arith.constant 3 : index
    %c0_45 = arith.constant 0 : index
    %58 = vector.load %arg2[%c3_44, %c0_45] : memref<4x64xf32, #tpu.memory_space<vmem>>, vector<1x64xf32>
    %59 = vector.broadcast %57 : vector<22x1xf32> to vector<22x64xf32>
    %60 = vector.broadcast %58 : vector<1x64xf32> to vector<22x64xf32>
    %61 = arith.mulf %59, %60 : vector<22x64xf32>
    %62 = arith.addf %55, %61 : vector<22x64xf32>
    %63 = vector.broadcast %0 : vector<1x64xf32> to vector<22x64xf32>
    %64 = arith.addf %62, %63 : vector<22x64xf32>
    %cst_46 = arith.constant 0.000000e+00 : f32
    %65 = vector.broadcast %cst_46 : f32 to vector<22x64xf32>
    %66 = arith.maximumf %64, %65 : vector<22x64xf32>
    %67 = arith.maximumf %35, %66 : vector<22x64xf32>
    %cst_47 = arith.constant 0.000000e+00 : f32
    %68 = vector.broadcast %cst_47 : f32 to vector<13x64xf32>
    %c0_48 = arith.constant 0 : index
    %c0_49 = arith.constant 0 : index
    %69 = vector.load %arg13[%c0_48, %c0_49] : memref<13x64xf32, #tpu.memory_space<vmem>>, vector<13x64xf32>
    tpu.vector_store %arg13[%c0_48, %c0_49], %68 {strides = array<i32>} : memref<13x64xf32, #tpu.memory_space<vmem>>, vector<13x64xf32>,
    %70 = vector.extract_strided_slice %67 {offsets = [0, 0], sizes = [1, 64], strides = [1, 1]} : vector<22x64xf32> to vector<1x64xf32>
    %71 = vector.extract_strided_slice %67 {offsets = [1, 0], sizes = [1, 64], strides = [1, 1]} : vector<22x64xf32> to vector<1x64xf32>
    %72 = arith.maximumf %70, %71 : vector<1x64xf32>
    %c1_50 = arith.constant 1 : index
    %c0_51 = arith.constant 0 : index
    %73 = vector.load %arg13[%c1_50, %c0_51] : memref<13x64xf32, #tpu.memory_space<vmem>>, vector<1x64xf32>
    tpu.vector_store %arg13[%c1_50, %c0_51], %72 {strides = array<i32>} : memref<13x64xf32, #tpu.memory_space<vmem>>, vector<1x64xf32>,
    %74 = vector.extract_strided_slice %67 {offsets = [2, 0], sizes = [1, 64], strides = [1, 1]} : vector<22x64xf32> to vector<1x64xf32>
    %75 = vector.extract_strided_slice %67 {offsets = [3, 0], sizes = [1, 64], strides = [1, 1]} : vector<22x64xf32> to vector<1x64xf32>
    %76 = arith.maximumf %74, %75 : vector<1x64xf32>
    %c2_52 = arith.constant 2 : index
    %c0_53 = arith.constant 0 : index
    %77 = vector.load %arg13[%c2_52, %c0_53] : memref<13x64xf32, #tpu.memory_space<vmem>>, vector<1x64xf32>
    tpu.vector_store %arg13[%c2_52, %c0_53], %76 {strides = array<i32>} : memref<13x64xf32, #tpu.memory_space<vmem>>, vector<1x64xf32>,
    %78 = vector.extract_strided_slice %67 {offsets = [4, 0], sizes = [1, 64], strides = [1, 1]} : vector<22x64xf32> to vector<1x64xf32>
    %79 = vector.extract_strided_slice %67 {offsets = [5, 0], sizes = [1, 64], strides = [1, 1]} : vector<22x64xf32> to vector<1x64xf32>
    %80 = arith.maximumf %78, %79 : vector<1x64xf32>
    %c3_54 = arith.constant 3 : index
    %c0_55 = arith.constant 0 : index
    %81 = vector.load %arg13[%c3_54, %c0_55] : memref<13x64xf32, #tpu.memory_space<vmem>>, vector<1x64xf32>
    tpu.vector_store %arg13[%c3_54, %c0_55], %80 {strides = array<i32>} : memref<13x64xf32, #tpu.memory_space<vmem>>, vector<1x64xf32>,
    %82 = vector.extract_strided_slice %67 {offsets = [6, 0], sizes = [1, 64], strides = [1, 1]} : vector<22x64xf32> to vector<1x64xf32>
    %83 = vector.extract_strided_slice %67 {offsets = [7, 0], sizes = [1, 64], strides = [1, 1]} : vector<22x64xf32> to vector<1x64xf32>
    %84 = arith.maximumf %82, %83 : vector<1x64xf32>
    %c4 = arith.constant 4 : index
    %c0_56 = arith.constant 0 : index
    %85 = vector.load %arg13[%c4, %c0_56] : memref<13x64xf32, #tpu.memory_space<vmem>>, vector<1x64xf32>
    tpu.vector_store %arg13[%c4, %c0_56], %84 {strides = array<i32>} : memref<13x64xf32, #tpu.memory_space<vmem>>, vector<1x64xf32>,
    %86 = vector.extract_strided_slice %67 {offsets = [8, 0], sizes = [1, 64], strides = [1, 1]} : vector<22x64xf32> to vector<1x64xf32>
    %87 = vector.extract_strided_slice %67 {offsets = [9, 0], sizes = [1, 64], strides = [1, 1]} : vector<22x64xf32> to vector<1x64xf32>
    %88 = arith.maximumf %86, %87 : vector<1x64xf32>
    %c5 = arith.constant 5 : index
    %c0_57 = arith.constant 0 : index
    %89 = vector.load %arg13[%c5, %c0_57] : memref<13x64xf32, #tpu.memory_space<vmem>>, vector<1x64xf32>
    tpu.vector_store %arg13[%c5, %c0_57], %88 {strides = array<i32>} : memref<13x64xf32, #tpu.memory_space<vmem>>, vector<1x64xf32>,
    %90 = vector.extract_strided_slice %67 {offsets = [10, 0], sizes = [1, 64], strides = [1, 1]} : vector<22x64xf32> to vector<1x64xf32>
    %91 = vector.extract_strided_slice %67 {offsets = [11, 0], sizes = [1, 64], strides = [1, 1]} : vector<22x64xf32> to vector<1x64xf32>
    %92 = arith.maximumf %90, %91 : vector<1x64xf32>
    %c6 = arith.constant 6 : index
    %c0_58 = arith.constant 0 : index
    %93 = vector.load %arg13[%c6, %c0_58] : memref<13x64xf32, #tpu.memory_space<vmem>>, vector<1x64xf32>
    tpu.vector_store %arg13[%c6, %c0_58], %92 {strides = array<i32>} : memref<13x64xf32, #tpu.memory_space<vmem>>, vector<1x64xf32>,
    %94 = vector.extract_strided_slice %67 {offsets = [12, 0], sizes = [1, 64], strides = [1, 1]} : vector<22x64xf32> to vector<1x64xf32>
    %95 = vector.extract_strided_slice %67 {offsets = [13, 0], sizes = [1, 64], strides = [1, 1]} : vector<22x64xf32> to vector<1x64xf32>
    %96 = arith.maximumf %94, %95 : vector<1x64xf32>
    %c7 = arith.constant 7 : index
    %c0_59 = arith.constant 0 : index
    %97 = vector.load %arg13[%c7, %c0_59] : memref<13x64xf32, #tpu.memory_space<vmem>>, vector<1x64xf32>
    tpu.vector_store %arg13[%c7, %c0_59], %96 {strides = array<i32>} : memref<13x64xf32, #tpu.memory_space<vmem>>, vector<1x64xf32>,
    %98 = vector.extract_strided_slice %67 {offsets = [14, 0], sizes = [1, 64], strides = [1, 1]} : vector<22x64xf32> to vector<1x64xf32>
    %99 = vector.extract_strided_slice %67 {offsets = [15, 0], sizes = [1, 64], strides = [1, 1]} : vector<22x64xf32> to vector<1x64xf32>
    %100 = arith.maximumf %98, %99 : vector<1x64xf32>
    %c8 = arith.constant 8 : index
    %c0_60 = arith.constant 0 : index
    %101 = vector.load %arg13[%c8, %c0_60] : memref<13x64xf32, #tpu.memory_space<vmem>>, vector<1x64xf32>
    tpu.vector_store %arg13[%c8, %c0_60], %100 {strides = array<i32>} : memref<13x64xf32, #tpu.memory_space<vmem>>, vector<1x64xf32>,
    %102 = vector.extract_strided_slice %67 {offsets = [16, 0], sizes = [1, 64], strides = [1, 1]} : vector<22x64xf32> to vector<1x64xf32>
    %103 = vector.extract_strided_slice %67 {offsets = [17, 0], sizes = [1, 64], strides = [1, 1]} : vector<22x64xf32> to vector<1x64xf32>
    %104 = arith.maximumf %102, %103 : vector<1x64xf32>
    %c9 = arith.constant 9 : index
    %c0_61 = arith.constant 0 : index
    %105 = vector.load %arg13[%c9, %c0_61] : memref<13x64xf32, #tpu.memory_space<vmem>>, vector<1x64xf32>
    tpu.vector_store %arg13[%c9, %c0_61], %104 {strides = array<i32>} : memref<13x64xf32, #tpu.memory_space<vmem>>, vector<1x64xf32>,
    %106 = vector.extract_strided_slice %67 {offsets = [18, 0], sizes = [1, 64], strides = [1, 1]} : vector<22x64xf32> to vector<1x64xf32>
    %107 = vector.extract_strided_slice %67 {offsets = [19, 0], sizes = [1, 64], strides = [1, 1]} : vector<22x64xf32> to vector<1x64xf32>
    %108 = arith.maximumf %106, %107 : vector<1x64xf32>
    %c10 = arith.constant 10 : index
    %c0_62 = arith.constant 0 : index
    %109 = vector.load %arg13[%c10, %c0_62] : memref<13x64xf32, #tpu.memory_space<vmem>>, vector<1x64xf32>
    tpu.vector_store %arg13[%c10, %c0_62], %108 {strides = array<i32>} : memref<13x64xf32, #tpu.memory_space<vmem>>, vector<1x64xf32>,
    %110 = vector.extract_strided_slice %67 {offsets = [20, 0], sizes = [1, 64], strides = [1, 1]} : vector<22x64xf32> to vector<1x64xf32>
    %111 = vector.extract_strided_slice %67 {offsets = [21, 0], sizes = [1, 64], strides = [1, 1]} : vector<22x64xf32> to vector<1x64xf32>
    %112 = arith.maximumf %110, %111 : vector<1x64xf32>
    %c11 = arith.constant 11 : index
    %c0_63 = arith.constant 0 : index
    %113 = vector.load %arg13[%c11, %c0_63] : memref<13x64xf32, #tpu.memory_space<vmem>>, vector<1x64xf32>
    tpu.vector_store %arg13[%c11, %c0_63], %112 {strides = array<i32>} : memref<13x64xf32, #tpu.memory_space<vmem>>, vector<1x64xf32>,
    %c0_64 = arith.constant 0 : index
    %c0_65 = arith.constant 0 : index
    %114 = vector.load %arg13[%c0_64, %c0_65] : memref<13x64xf32, #tpu.memory_space<vmem>>, vector<12x64xf32>
    %c1_66 = arith.constant 1 : index
    %c0_67 = arith.constant 0 : index
    %115 = vector.load %arg13[%c1_66, %c0_67] : memref<13x64xf32, #tpu.memory_space<vmem>>, vector<12x64xf32>
    %c64 = arith.constant 64 : index
    %c0_68 = arith.constant 0 : index
    %116 = vector.load %arg4[%c64, %c0_68] : memref<256x128xbf16, #tpu.memory_space<vmem>>, vector<64x128xbf16>
    %117 = arith.truncf %114 : vector<12x64xf32> to vector<12x64xbf16>
    %cst_69 = arith.constant dense<0.000000e+00> : vector<12x128xf32>
    %118 = tpu.matmul %117, %116, %cst_69 {dimension_numbers = #tpu.dot_dimension_numbers<[1], [0], [0], [1], [0, 0, 1, 1], [], []>} : vector<12x64xbf16>, vector<64x128xbf16>, vector<12x128xf32> -> vector<12x128xf32>
    %119 = vector.broadcast %1 : vector<1x128xf32> to vector<12x128xf32>
    %120 = arith.addf %119, %118 : vector<12x128xf32>
    %c192 = arith.constant 192 : index
    %c0_70 = arith.constant 0 : index
    %121 = vector.load %arg4[%c192, %c0_70] : memref<256x128xbf16, #tpu.memory_space<vmem>>, vector<64x128xbf16>
    %122 = arith.truncf %115 : vector<12x64xf32> to vector<12x64xbf16>
    %cst_71 = arith.constant dense<0.000000e+00> : vector<12x128xf32>
    %123 = tpu.matmul %122, %121, %cst_71 {dimension_numbers = #tpu.dot_dimension_numbers<[1], [0], [0], [1], [0, 0, 1, 1], [], []>} : vector<12x64xbf16>, vector<64x128xbf16>, vector<12x128xf32> -> vector<12x128xf32>
    %124 = arith.addf %120, %123 : vector<12x128xf32>
    %cst_72 = arith.constant 0.000000e+00 : f32
    %125 = vector.broadcast %cst_72 : f32 to vector<12x128xf32>
    %126 = arith.maximumf %124, %125 : vector<12x128xf32>
    %c0_73 = arith.constant 0 : index
    %c0_74 = arith.constant 0 : index
    %127 = vector.load %arg4[%c0_73, %c0_74] : memref<256x128xbf16, #tpu.memory_space<vmem>>, vector<64x128xbf16>
    %128 = arith.truncf %114 : vector<12x64xf32> to vector<12x64xbf16>
    %cst_75 = arith.constant dense<0.000000e+00> : vector<12x128xf32>
    %129 = tpu.matmul %128, %127, %cst_75 {dimension_numbers = #tpu.dot_dimension_numbers<[1], [0], [0], [1], [0, 0, 1, 1], [], []>} : vector<12x64xbf16>, vector<64x128xbf16>, vector<12x128xf32> -> vector<12x128xf32>
    %130 = vector.broadcast %1 : vector<1x128xf32> to vector<12x128xf32>
    %131 = arith.addf %130, %129 : vector<12x128xf32>
    %c128 = arith.constant 128 : index
    %c0_76 = arith.constant 0 : index
    %132 = vector.load %arg4[%c128, %c0_76] : memref<256x128xbf16, #tpu.memory_space<vmem>>, vector<64x128xbf16>
    %133 = arith.truncf %115 : vector<12x64xf32> to vector<12x64xbf16>
    %cst_77 = arith.constant dense<0.000000e+00> : vector<12x128xf32>
    %134 = tpu.matmul %133, %132, %cst_77 {dimension_numbers = #tpu.dot_dimension_numbers<[1], [0], [0], [1], [0, 0, 1, 1], [], []>} : vector<12x64xbf16>, vector<64x128xbf16>, vector<12x128xf32> -> vector<12x128xf32>
    %135 = arith.addf %131, %134 : vector<12x128xf32>
    %cst_78 = arith.constant 0.000000e+00 : f32
    %136 = vector.broadcast %cst_78 : f32 to vector<12x128xf32>
    %137 = arith.maximumf %135, %136 : vector<12x128xf32>
    %138 = arith.maximumf %126, %137 : vector<12x128xf32>
    %cst_79 = arith.constant 0.000000e+00 : f32
    %139 = vector.broadcast %cst_79 : f32 to vector<8x128xf32>
    %c0_80 = arith.constant 0 : index
    %c0_81 = arith.constant 0 : index
    %140 = vector.load %arg14[%c0_80, %c0_81] : memref<8x128xf32, #tpu.memory_space<vmem>>, vector<8x128xf32>
    tpu.vector_store %arg14[%c0_80, %c0_81], %139 {strides = array<i32>} : memref<8x128xf32, #tpu.memory_space<vmem>>, vector<8x128xf32>,
    %141 = vector.extract_strided_slice %138 {offsets = [0, 0], sizes = [1, 128], strides = [1, 1]} : vector<12x128xf32> to vector<1x128xf32>
    %142 = vector.extract_strided_slice %138 {offsets = [1, 0], sizes = [1, 128], strides = [1, 1]} : vector<12x128xf32> to vector<1x128xf32>
    %143 = arith.maximumf %141, %142 : vector<1x128xf32>
    %c1_82 = arith.constant 1 : index
    %c0_83 = arith.constant 0 : index
    %144 = vector.load %arg14[%c1_82, %c0_83] : memref<8x128xf32, #tpu.memory_space<vmem>>, vector<1x128xf32>
    tpu.vector_store %arg14[%c1_82, %c0_83], %143 {strides = array<i32>} : memref<8x128xf32, #tpu.memory_space<vmem>>, vector<1x128xf32>,
    %145 = vector.extract_strided_slice %138 {offsets = [2, 0], sizes = [1, 128], strides = [1, 1]} : vector<12x128xf32> to vector<1x128xf32>
    %146 = vector.extract_strided_slice %138 {offsets = [3, 0], sizes = [1, 128], strides = [1, 1]} : vector<12x128xf32> to vector<1x128xf32>
    %147 = arith.maximumf %145, %146 : vector<1x128xf32>
    %c2_84 = arith.constant 2 : index
    %c0_85 = arith.constant 0 : index
    %148 = vector.load %arg14[%c2_84, %c0_85] : memref<8x128xf32, #tpu.memory_space<vmem>>, vector<1x128xf32>
    tpu.vector_store %arg14[%c2_84, %c0_85], %147 {strides = array<i32>} : memref<8x128xf32, #tpu.memory_space<vmem>>, vector<1x128xf32>,
    %149 = vector.extract_strided_slice %138 {offsets = [4, 0], sizes = [1, 128], strides = [1, 1]} : vector<12x128xf32> to vector<1x128xf32>
    %150 = vector.extract_strided_slice %138 {offsets = [5, 0], sizes = [1, 128], strides = [1, 1]} : vector<12x128xf32> to vector<1x128xf32>
    %151 = arith.maximumf %149, %150 : vector<1x128xf32>
    %c3_86 = arith.constant 3 : index
    %c0_87 = arith.constant 0 : index
    %152 = vector.load %arg14[%c3_86, %c0_87] : memref<8x128xf32, #tpu.memory_space<vmem>>, vector<1x128xf32>
    tpu.vector_store %arg14[%c3_86, %c0_87], %151 {strides = array<i32>} : memref<8x128xf32, #tpu.memory_space<vmem>>, vector<1x128xf32>,
    %153 = vector.extract_strided_slice %138 {offsets = [6, 0], sizes = [1, 128], strides = [1, 1]} : vector<12x128xf32> to vector<1x128xf32>
    %154 = vector.extract_strided_slice %138 {offsets = [7, 0], sizes = [1, 128], strides = [1, 1]} : vector<12x128xf32> to vector<1x128xf32>
    %155 = arith.maximumf %153, %154 : vector<1x128xf32>
    %c4_88 = arith.constant 4 : index
    %c0_89 = arith.constant 0 : index
    %156 = vector.load %arg14[%c4_88, %c0_89] : memref<8x128xf32, #tpu.memory_space<vmem>>, vector<1x128xf32>
    tpu.vector_store %arg14[%c4_88, %c0_89], %155 {strides = array<i32>} : memref<8x128xf32, #tpu.memory_space<vmem>>, vector<1x128xf32>,
    %157 = vector.extract_strided_slice %138 {offsets = [8, 0], sizes = [1, 128], strides = [1, 1]} : vector<12x128xf32> to vector<1x128xf32>
    %158 = vector.extract_strided_slice %138 {offsets = [9, 0], sizes = [1, 128], strides = [1, 1]} : vector<12x128xf32> to vector<1x128xf32>
    %159 = arith.maximumf %157, %158 : vector<1x128xf32>
    %c5_90 = arith.constant 5 : index
    %c0_91 = arith.constant 0 : index
    %160 = vector.load %arg14[%c5_90, %c0_91] : memref<8x128xf32, #tpu.memory_space<vmem>>, vector<1x128xf32>
    tpu.vector_store %arg14[%c5_90, %c0_91], %159 {strides = array<i32>} : memref<8x128xf32, #tpu.memory_space<vmem>>, vector<1x128xf32>,
    %161 = vector.extract_strided_slice %138 {offsets = [10, 0], sizes = [1, 128], strides = [1, 1]} : vector<12x128xf32> to vector<1x128xf32>
    %162 = vector.extract_strided_slice %138 {offsets = [11, 0], sizes = [1, 128], strides = [1, 1]} : vector<12x128xf32> to vector<1x128xf32>
    %163 = arith.maximumf %161, %162 : vector<1x128xf32>
    %c6_92 = arith.constant 6 : index
    %c0_93 = arith.constant 0 : index
    %164 = vector.load %arg14[%c6_92, %c0_93] : memref<8x128xf32, #tpu.memory_space<vmem>>, vector<1x128xf32>
    tpu.vector_store %arg14[%c6_92, %c0_93], %163 {strides = array<i32>} : memref<8x128xf32, #tpu.memory_space<vmem>>, vector<1x128xf32>,
    %c0_94 = arith.constant 0 : index
    %c0_95 = arith.constant 0 : index
    %165 = vector.load %arg14[%c0_94, %c0_95] : memref<8x128xf32, #tpu.memory_space<vmem>>, vector<4x128xf32>
    %c0_96 = arith.constant 0 : index
    %c0_97 = arith.constant 0 : index
    %166 = vector.load %arg6[%c0_96, %c0_97] : memref<640x256xbf16, #tpu.memory_space<vmem>>, vector<128x256xbf16>
    %167 = arith.truncf %165 : vector<4x128xf32> to vector<4x128xbf16>
    %cst_98 = arith.constant dense<0.000000e+00> : vector<4x256xf32>
    %168 = tpu.matmul %167, %166, %cst_98 {dimension_numbers = #tpu.dot_dimension_numbers<[1], [0], [0], [1], [0, 0, 1, 1], [], []>} : vector<4x128xbf16>, vector<128x256xbf16>, vector<4x256xf32> -> vector<4x256xf32>
    %169 = vector.broadcast %2 : vector<1x256xf32> to vector<4x256xf32>
    %170 = arith.addf %169, %168 : vector<4x256xf32>
    %c1_99 = arith.constant 1 : index
    %c0_100 = arith.constant 0 : index
    %171 = vector.load %arg14[%c1_99, %c0_100] : memref<8x128xf32, #tpu.memory_space<vmem>>, vector<4x128xf32>
    %c128_101 = arith.constant 128 : index
    %c0_102 = arith.constant 0 : index
    %172 = vector.load %arg6[%c128_101, %c0_102] : memref<640x256xbf16, #tpu.memory_space<vmem>>, vector<128x256xbf16>
    %173 = arith.truncf %171 : vector<4x128xf32> to vector<4x128xbf16>
    %cst_103 = arith.constant dense<0.000000e+00> : vector<4x256xf32>
    %174 = tpu.matmul %173, %172, %cst_103 {dimension_numbers = #tpu.dot_dimension_numbers<[1], [0], [0], [1], [0, 0, 1, 1], [], []>} : vector<4x128xbf16>, vector<128x256xbf16>, vector<4x256xf32> -> vector<4x256xf32>
    %175 = arith.addf %170, %174 : vector<4x256xf32>
    %c2_104 = arith.constant 2 : index
    %c0_105 = arith.constant 0 : index
    %176 = vector.load %arg14[%c2_104, %c0_105] : memref<8x128xf32, #tpu.memory_space<vmem>>, vector<4x128xf32>
    %c256 = arith.constant 256 : index
    %c0_106 = arith.constant 0 : index
    %177 = vector.load %arg6[%c256, %c0_106] : memref<640x256xbf16, #tpu.memory_space<vmem>>, vector<128x256xbf16>
    %178 = arith.truncf %176 : vector<4x128xf32> to vector<4x128xbf16>
    %cst_107 = arith.constant dense<0.000000e+00> : vector<4x256xf32>
    %179 = tpu.matmul %178, %177, %cst_107 {dimension_numbers = #tpu.dot_dimension_numbers<[1], [0], [0], [1], [0, 0, 1, 1], [], []>} : vector<4x128xbf16>, vector<128x256xbf16>, vector<4x256xf32> -> vector<4x256xf32>
    %180 = arith.addf %175, %179 : vector<4x256xf32>
    %c3_108 = arith.constant 3 : index
    %c0_109 = arith.constant 0 : index
    %181 = vector.load %arg14[%c3_108, %c0_109] : memref<8x128xf32, #tpu.memory_space<vmem>>, vector<4x128xf32>
    %c384 = arith.constant 384 : index
    %c0_110 = arith.constant 0 : index
    %182 = vector.load %arg6[%c384, %c0_110] : memref<640x256xbf16, #tpu.memory_space<vmem>>, vector<128x256xbf16>
    %183 = arith.truncf %181 : vector<4x128xf32> to vector<4x128xbf16>
    %cst_111 = arith.constant dense<0.000000e+00> : vector<4x256xf32>
    %184 = tpu.matmul %183, %182, %cst_111 {dimension_numbers = #tpu.dot_dimension_numbers<[1], [0], [0], [1], [0, 0, 1, 1], [], []>} : vector<4x128xbf16>, vector<128x256xbf16>, vector<4x256xf32> -> vector<4x256xf32>
    %185 = arith.addf %180, %184 : vector<4x256xf32>
    %c4_112 = arith.constant 4 : index
    %c0_113 = arith.constant 0 : index
    %186 = vector.load %arg14[%c4_112, %c0_113] : memref<8x128xf32, #tpu.memory_space<vmem>>, vector<4x128xf32>
    %c512 = arith.constant 512 : index
    %c0_114 = arith.constant 0 : index
    %187 = vector.load %arg6[%c512, %c0_114] : memref<640x256xbf16, #tpu.memory_space<vmem>>, vector<128x256xbf16>
    %188 = arith.truncf %186 : vector<4x128xf32> to vector<4x128xbf16>
    %cst_115 = arith.constant dense<0.000000e+00> : vector<4x256xf32>
    %189 = tpu.matmul %188, %187, %cst_115 {dimension_numbers = #tpu.dot_dimension_numbers<[1], [0], [0], [1], [0, 0, 1, 1], [], []>} : vector<4x128xbf16>, vector<128x256xbf16>, vector<4x256xf32> -> vector<4x256xf32>
    %190 = arith.addf %185, %189 : vector<4x256xf32>
    %cst_116 = arith.constant 0.000000e+00 : f32
    %191 = vector.broadcast %cst_116 : f32 to vector<4x256xf32>
    %192 = arith.maximumf %190, %191 : vector<4x256xf32>
    %cst_117 = arith.constant 0.000000e+00 : f32
    %193 = vector.broadcast %cst_117 : f32 to vector<1x256xf32>
    %194 = arith.maximumf %2, %193 : vector<1x256xf32>
    %c0_118 = arith.constant 0 : index
    %c0_119 = arith.constant 0 : index
    %195 = vector.load %arg15[%c0_118, %c0_119] : memref<1x3072xf32, #tpu.memory_space<vmem>>, vector<1x256xf32>
    tpu.vector_store %arg15[%c0_118, %c0_119], %194 {strides = array<i32>} : memref<1x3072xf32, #tpu.memory_space<vmem>>, vector<1x256xf32>,
    %196 = vector.extract_strided_slice %192 {offsets = [0, 0], sizes = [1, 256], strides = [1, 1]} : vector<4x256xf32> to vector<1x256xf32>
    %c0_120 = arith.constant 0 : index
    %c256_121 = arith.constant 256 : index
    %197 = vector.load %arg15[%c0_120, %c256_121] : memref<1x3072xf32, #tpu.memory_space<vmem>>, vector<1x256xf32>
    tpu.vector_store %arg15[%c0_120, %c256_121], %196 {strides = array<i32>} : memref<1x3072xf32, #tpu.memory_space<vmem>>, vector<1x256xf32>,
    %c0_122 = arith.constant 0 : index
    %c512_123 = arith.constant 512 : index
    %198 = vector.load %arg15[%c0_122, %c512_123] : memref<1x3072xf32, #tpu.memory_space<vmem>>, vector<1x256xf32>
    tpu.vector_store %arg15[%c0_122, %c512_123], %194 {strides = array<i32>} : memref<1x3072xf32, #tpu.memory_space<vmem>>, vector<1x256xf32>,
    %c0_124 = arith.constant 0 : index
    %c768 = arith.constant 768 : index
    %199 = vector.load %arg15[%c0_124, %c768] : memref<1x3072xf32, #tpu.memory_space<vmem>>, vector<1x256xf32>
    tpu.vector_store %arg15[%c0_124, %c768], %194 {strides = array<i32>} : memref<1x3072xf32, #tpu.memory_space<vmem>>, vector<1x256xf32>,
    %200 = vector.extract_strided_slice %192 {offsets = [1, 0], sizes = [1, 256], strides = [1, 1]} : vector<4x256xf32> to vector<1x256xf32>
    %c0_125 = arith.constant 0 : index
    %c1024 = arith.constant 1024 : index
    %201 = vector.load %arg15[%c0_125, %c1024] : memref<1x3072xf32, #tpu.memory_space<vmem>>, vector<1x256xf32>
    tpu.vector_store %arg15[%c0_125, %c1024], %200 {strides = array<i32>} : memref<1x3072xf32, #tpu.memory_space<vmem>>, vector<1x256xf32>,
    %c0_126 = arith.constant 0 : index
    %c1280 = arith.constant 1280 : index
    %202 = vector.load %arg15[%c0_126, %c1280] : memref<1x3072xf32, #tpu.memory_space<vmem>>, vector<1x256xf32>
    tpu.vector_store %arg15[%c0_126, %c1280], %194 {strides = array<i32>} : memref<1x3072xf32, #tpu.memory_space<vmem>>, vector<1x256xf32>,
    %c0_127 = arith.constant 0 : index
    %c1536 = arith.constant 1536 : index
    %203 = vector.load %arg15[%c0_127, %c1536] : memref<1x3072xf32, #tpu.memory_space<vmem>>, vector<1x256xf32>
    tpu.vector_store %arg15[%c0_127, %c1536], %194 {strides = array<i32>} : memref<1x3072xf32, #tpu.memory_space<vmem>>, vector<1x256xf32>,
    %204 = vector.extract_strided_slice %192 {offsets = [2, 0], sizes = [1, 256], strides = [1, 1]} : vector<4x256xf32> to vector<1x256xf32>
    %c0_128 = arith.constant 0 : index
    %c1792 = arith.constant 1792 : index
    %205 = vector.load %arg15[%c0_128, %c1792] : memref<1x3072xf32, #tpu.memory_space<vmem>>, vector<1x256xf32>
    tpu.vector_store %arg15[%c0_128, %c1792], %204 {strides = array<i32>} : memref<1x3072xf32, #tpu.memory_space<vmem>>, vector<1x256xf32>,
    %c0_129 = arith.constant 0 : index
    %c2048 = arith.constant 2048 : index
    %206 = vector.load %arg15[%c0_129, %c2048] : memref<1x3072xf32, #tpu.memory_space<vmem>>, vector<1x256xf32>
    tpu.vector_store %arg15[%c0_129, %c2048], %194 {strides = array<i32>} : memref<1x3072xf32, #tpu.memory_space<vmem>>, vector<1x256xf32>,
    %c0_130 = arith.constant 0 : index
    %c2304 = arith.constant 2304 : index
    %207 = vector.load %arg15[%c0_130, %c2304] : memref<1x3072xf32, #tpu.memory_space<vmem>>, vector<1x256xf32>
    tpu.vector_store %arg15[%c0_130, %c2304], %194 {strides = array<i32>} : memref<1x3072xf32, #tpu.memory_space<vmem>>, vector<1x256xf32>,
    %208 = vector.extract_strided_slice %192 {offsets = [3, 0], sizes = [1, 256], strides = [1, 1]} : vector<4x256xf32> to vector<1x256xf32>
    %c0_131 = arith.constant 0 : index
    %c2560 = arith.constant 2560 : index
    %209 = vector.load %arg15[%c0_131, %c2560] : memref<1x3072xf32, #tpu.memory_space<vmem>>, vector<1x256xf32>
    tpu.vector_store %arg15[%c0_131, %c2560], %208 {strides = array<i32>} : memref<1x3072xf32, #tpu.memory_space<vmem>>, vector<1x256xf32>,
    %c0_132 = arith.constant 0 : index
    %c2816 = arith.constant 2816 : index
    %210 = vector.load %arg15[%c0_132, %c2816] : memref<1x3072xf32, #tpu.memory_space<vmem>>, vector<1x256xf32>
    tpu.vector_store %arg15[%c0_132, %c2816], %194 {strides = array<i32>} : memref<1x3072xf32, #tpu.memory_space<vmem>>, vector<1x256xf32>,
    %c0_133 = arith.constant 0 : index
    %c0_134 = arith.constant 0 : index
    %211 = vector.load %arg15[%c0_133, %c0_134] : memref<1x3072xf32, #tpu.memory_space<vmem>>, vector<1x3072xf32>
    %c0_135 = arith.constant 0 : index
    %c0_136 = arith.constant 0 : index
    %212 = vector.load %arg8[%c0_135, %c0_136] : memref<3072x256xbf16, #tpu.memory_space<vmem>>, vector<3072x256xbf16>
    %213 = arith.truncf %211 : vector<1x3072xf32> to vector<1x3072xbf16>
    %cst_137 = arith.constant dense<0.000000e+00> : vector<1x256xf32>
    %214 = tpu.matmul %213, %212, %cst_137 {dimension_numbers = #tpu.dot_dimension_numbers<[1], [0], [0], [1], [0, 0, 1, 1], [], []>} : vector<1x3072xbf16>, vector<3072x256xbf16>, vector<1x256xf32> -> vector<1x256xf32>
    %215 = arith.addf %214, %3 : vector<1x256xf32>
    %cst_138 = arith.constant 0.000000e+00 : f32
    %216 = vector.broadcast %cst_138 : f32 to vector<1x256xf32>
    %217 = arith.maximumf %215, %216 : vector<1x256xf32>
    %c0_139 = arith.constant 0 : index
    %c0_140 = arith.constant 0 : index
    %218 = vector.load %arg10[%c0_139, %c0_140] : memref<256x128xbf16, #tpu.memory_space<vmem>>, vector<256x128xbf16>
    %219 = arith.truncf %217 : vector<1x256xf32> to vector<1x256xbf16>
    %cst_141 = arith.constant dense<0.000000e+00> : vector<1x128xf32>
    %220 = tpu.matmul %219, %218, %cst_141 {dimension_numbers = #tpu.dot_dimension_numbers<[1], [0], [0], [1], [0, 0, 1, 1], [], []>} : vector<1x256xbf16>, vector<256x128xbf16>, vector<1x128xf32> -> vector<1x128xf32>
    %221 = arith.addf %220, %4 : vector<1x128xf32>
    %c0_142 = arith.constant 0 : index
    %c0_143 = arith.constant 0 : index
    %c0_144 = arith.constant 0 : index
    %222 = vector.load %arg12[%c0_142, %c0_143, %c0_144] : memref<1x1x128xf32, #tpu.memory_space<vmem>>, vector<1x1x128xf32>
    %223 = vector.shape_cast %222 : vector<1x1x128xf32> to vector<1x128xf32>
    %224 = vector.shape_cast %221 : vector<1x128xf32> to vector<1x1x128xf32>
    tpu.vector_store %arg12[%c0_142, %c0_143, %c0_144], %224 {strides = array<i32>} : memref<1x1x128xf32, #tpu.memory_space<vmem>>, vector<1x1x128xf32>,
    return
  }
  func.func @transform_0(%arg0: i32) -> (i32, i32, i32) {
    %c0_i32 = arith.constant 0 : i32
    %c0_i32_0 = arith.constant 0 : i32
    %c0_i32_1 = arith.constant 0 : i32
    return %arg0, %c0_i32, %c0_i32_0 : i32, i32, i32
  }
  func.func @transform_1(%arg0: i32) -> (i32, i32) {
    %c0_i32 = arith.constant 0 : i32
    %c0_i32_0 = arith.constant 0 : i32
    %c0_i32_1 = arith.constant 0 : i32
    return %c0_i32, %c0_i32_0 : i32, i32
  }
  func.func @transform_2(%arg0: i32) -> (i32, i32) {
    %c0_i32 = arith.constant 0 : i32
    %c0_i32_0 = arith.constant 0 : i32
    %c0_i32_1 = arith.constant 0 : i32
    return %c0_i32, %c0_i32_0 : i32, i32
  }
  func.func @transform_3(%arg0: i32) -> (i32, i32) {
    %c0_i32 = arith.constant 0 : i32
    %c0_i32_0 = arith.constant 0 : i32
    %c0_i32_1 = arith.constant 0 : i32
    return %c0_i32, %c0_i32_0 : i32, i32
  }
  func.func @transform_4(%arg0: i32) -> (i32, i32) {
    %c0_i32 = arith.constant 0 : i32
    %c0_i32_0 = arith.constant 0 : i32
    %c0_i32_1 = arith.constant 0 : i32
    return %c0_i32, %c0_i32_0 : i32, i32
  }
  func.func @transform_5(%arg0: i32) -> (i32, i32) {
    %c0_i32 = arith.constant 0 : i32
    %c0_i32_0 = arith.constant 0 : i32
    %c0_i32_1 = arith.constant 0 : i32
    return %c0_i32, %c0_i32_0 : i32, i32
  }
  func.func @transform_6(%arg0: i32) -> (i32, i32) {
    %c0_i32 = arith.constant 0 : i32
    %c0_i32_0 = arith.constant 0 : i32
    %c0_i32_1 = arith.constant 0 : i32
    return %c0_i32, %c0_i32_0 : i32, i32
  }
  func.func @transform_7(%arg0: i32) -> (i32, i32) {
    %c0_i32 = arith.constant 0 : i32
    %c0_i32_0 = arith.constant 0 : i32
    %c0_i32_1 = arith.constant 0 : i32
    return %c0_i32, %c0_i32_0 : i32, i32
  }
  func.func @transform_8(%arg0: i32) -> (i32, i32) {
    %c0_i32 = arith.constant 0 : i32
    %c0_i32_0 = arith.constant 0 : i32
    %c0_i32_1 = arith.constant 0 : i32
    return %c0_i32, %c0_i32_0 : i32, i32
  }
  func.func @transform_9(%arg0: i32) -> (i32, i32) {
    %c0_i32 = arith.constant 0 : i32
    %c0_i32_0 = arith.constant 0 : i32
    %c0_i32_1 = arith.constant 0 : i32
    return %c0_i32, %c0_i32_0 : i32, i32
  }
  func.func @transform_10(%arg0: i32) -> (i32, i32) {
    %c0_i32 = arith.constant 0 : i32
    %c0_i32_0 = arith.constant 0 : i32
    %c0_i32_1 = arith.constant 0 : i32
    return %c0_i32, %c0_i32_0 : i32, i32
  }
  func.func @transform_11(%arg0: i32) -> (i32, i32, i32) {
    %c0_i32 = arith.constant 0 : i32
    %c0_i32_0 = arith.constant 0 : i32
    %c0_i32_1 = arith.constant 0 : i32
    return %arg0, %c0_i32, %c0_i32_0 : i32, i32, i32
  }
}

</mosaic_0001>

<llo_original>
// kernel: simple_cnn_forward.1
$region0: #{simple_cnn_forward.1}
  #allocation0 [shape = 'u32[]', space=smem, size = 0x4, offset = 0x4, fixed_abs, tag = 'smem constant byte address 0x4 - core index']
  #allocation1 [shape = 'u32[144,128]{1,0:T(1,128)}', space=vmem, size = 0x12000, scoped, tag = 'internal scratch']
  #allocation2 [shape = 'f32[13,64]{1,0:T(8,128)}', space=vmem, size = 0x2000, scoped, tag = 'scratch operand']
  #allocation3 [shape = 'f32[8,128]{1,0:T(8,128)}', space=vmem, size = 0x1000, scoped, tag = 'scratch operand']
  #allocation4 [shape = 'f32[1,3072]{1,0:T(1,128)}', space=vmem, size = 0x3000, scoped, tag = 'scratch operand']
  %s0 = inlined_call_operand.vmem [shape: f32[2,23,4], index: 0, kind: input, shape index: {}]
  %s1 = inlined_call_operand.hbm [shape: f32[4,64], index: 1, kind: input, shape index: {}]
  %s2 = inlined_call_operand.hbm [shape: f32[1,64], index: 2, kind: input, shape index: {}]
  %s3 = inlined_call_operand.hbm [shape: bf16[256,128], index: 3, kind: input, shape index: {}]
  %s4 = inlined_call_operand.hbm [shape: f32[1,128], index: 4, kind: input, shape index: {}]
  %s5 = inlined_call_operand.hbm [shape: bf16[640,256], index: 5, kind: input, shape index: {}]
  %s6 = inlined_call_operand.hbm [shape: f32[1,256], index: 6, kind: input, shape index: {}]
  %s7 = inlined_call_operand.hbm [shape: bf16[3072,256], index: 7, kind: input, shape index: {}]
  %s8 = inlined_call_operand.hbm [shape: f32[1,256], index: 8, kind: input, shape index: {}]
  %s9 = inlined_call_operand.hbm [shape: bf16[256,128], index: 9, kind: input, shape index: {}]
  %s10 = inlined_call_operand.hbm [shape: f32[1,128], index: 10, kind: input, shape index: {}]
  %s11 = inlined_call_operand.hbm [shape: f32[2,1,128], index: 11, kind: output, shape index: {}]
  %s12 = sld [smem:[#allocation0]]
  $region117: #{simple_cnn_forward.1} parent=0
    _
  %s14 = ssub.s32 1, %s12
  %s15 = scalar_select 0, %s14, %s12
  $region1: #{simple_cnn_forward.1} parent=0
    #allocation5 [shape = 'u8[2048]{0}', space=vmem, size = 0x800, scoped, tag = 'input window, operand 1, single buffered']
    #allocation6 [shape = 's32[2]{0}', space=sflag, size = 0x8, scoped, tag = 'scoped memory for simple_cnn_forward.1']
    #allocation7 [shape = 's32[2]{0}', space=sflag, size = 0x8, scoped, tag = 'scoped memory for simple_cnn_forward.1']
    #allocation8 [shape = 'u8[512]{0}', space=vmem, size = 0x400, scoped, tag = 'input window, operand 2, single buffered']
    #allocation9 [shape = 's32[1]{0}', space=sflag, size = 0x4, scoped, tag = 'scoped memory for simple_cnn_forward.1']
    #allocation10 [shape = 'u8[65536]{0}', space=vmem, size = 0x10000, scoped, tag = 'input window, operand 3, single buffered']
    #allocation11 [shape = 'u8[512]{0}', space=vmem, size = 0x400, scoped, tag = 'input window, operand 4, single buffered']
    #allocation12 [shape = 's32[1]{0}', space=sflag, size = 0x4, scoped, tag = 'scoped memory for simple_cnn_forward.1']
    #allocation13 [shape = 'u8[327680]{0}', space=vmem, size = 0x50000, scoped, tag = 'input window, operand 5, single buffered']
    #allocation14 [shape = 'u8[1024]{0}', space=vmem, size = 0x400, scoped, tag = 'input window, operand 6, single buffered']
    #allocation15 [shape = 's32[1]{0}', space=sflag, size = 0x4, scoped, tag = 'scoped memory for simple_cnn_forward.1']
    #allocation16 [shape = 'u8[1572864]{0}', space=vmem, size = 0x180000, scoped, tag = 'input window, operand 7, single buffered']
    #allocation17 [shape = 'u8[1024]{0}', space=vmem, size = 0x400, scoped, tag = 'input window, operand 8, single buffered']
    #allocation18 [shape = 's32[1]{0}', space=sflag, size = 0x4, scoped, tag = 'scoped memory for simple_cnn_forward.1']
    #allocation19 [shape = 'u8[65536]{0}', space=vmem, size = 0x10000, scoped, tag = 'input window, operand 9, single buffered']
    #allocation20 [shape = 'u8[512]{0}', space=vmem, size = 0x400, scoped, tag = 'input window, operand 10, single buffered']
    #allocation21 [shape = 's32[1]{0}', space=sflag, size = 0x4, scoped, tag = 'scoped memory for simple_cnn_forward.1']
    #allocation22 [shape = 'u8[1024]{0}', space=vmem, size = 0x400, scoped, tag = 'output window, operand 0']
    %16 = vsyncpa [#allocation6], 0
    %17 = vsyncpa [#allocation9], 0
    %18 = vsyncpa [#allocation12], 0
    %19 = vsyncpa [#allocation15], 0
    %20 = vsyncpa [#allocation18], 0
    %21 = vsyncpa [#allocation21], 0
    %22 = vsyncpa [#allocation7], 0
    %s23 = scalar_lea.sflag [#allocation7], 1
    %24 = vsyncpa %s23, 0
    loop: start=0, step=1, limit=4
    $region2: #{simple_cnn_forward.1} parent=1 // loop_pre_header
      _
    $region3: #{simple_cnn_forward.1} parent=1 // loop_header
      %s26 = sphi 0, %s30
      %p27 = scmp.ge.s32.totalorder %s26, 4
      %s36 = sphi 0, %s38
      %s39 = sphi 0, %s36
      %s40 = sphi 0, %s39
      %s56 = sphi 0, %s40
      %s60 = sphi 0, %s60
      %s62 = sphi 0, %s60
      %s63 = sphi 0, %s62
      %s77 = sphi 0, %s63
      %s81 = sphi 0, %s81
      %s83 = sphi 0, %s81
      %s84 = sphi 0, %s83
      %s98 = sphi 0, %s84
      %s102 = sphi 0, %s102
      %s104 = sphi 0, %s102
      %s105 = sphi 0, %s104
      %s119 = sphi 0, %s105
      %s123 = sphi 0, %s123
      %s125 = sphi 0, %s123
      %s126 = sphi 0, %s125
      %s140 = sphi 0, %s126
      %s144 = sphi 0, %s144
      %s146 = sphi 0, %s144
      %s147 = sphi 0, %s146
      %s161 = sphi 0, %s147
      %s165 = sphi 0, %s165
      %s167 = sphi 0, %s165
      %s168 = sphi 0, %s167
      %s182 = sphi 0, %s168
      %s186 = sphi 0, %s186
      %s188 = sphi 0, %s186
      %s189 = sphi 0, %s188
      %s203 = sphi 0, %s189
      %s207 = sphi 0, %s207
      %s209 = sphi 0, %s207
      %s210 = sphi 0, %s209
      %s224 = sphi 0, %s210
      %s228 = sphi 0, %s228
      %s230 = sphi 0, %s228
      %s231 = sphi 0, %s230
      %s245 = sphi 0, %s231
      %s249 = sphi 0, %s249
      %s251 = sphi 0, %s249
      %s252 = sphi 0, %s251
      %s266 = sphi 0, %s252
      %s272 = sphi 0, %s274
      %s275 = sphi 0, %s272
      %s276 = sphi 0, %s275
      %s292 = sphi 0, %s276
    $region4: #{simple_cnn_forward.1} parent=1 // loop_header_branch
      %29 = sbr.rel (%p27) target = $region8
    $region5: #{simple_cnn_forward.1} parent=1 // loop_body
      %s31 = ssub.s32 %s26, 1
      %s32 = ssub.s32 %s26, 2
      %s33 = sadd.s32 %s26, 1
      %s34 = ssub.s32 %s26, %s33
      %p35 = scmp.eq.s32.totalorder %s34, 0
      %s37 = sadd.s32 %s36, 1
      %s38 = scalar_select %p35, %s36, %s37
      %p41 = pneg %p35
      %p42 = scmp.eq.s32.totalorder %s26, 1
      %p43 = por %p41, %p42
      %p44 = scmp.ne.s32.totalorder %s36, %s39
      %p45 = scmp.eq.s32.totalorder %s26, 0
      %p46 = por %p44, %p45
      %p47 = scmp.ne.s32.totalorder %s36, %s39
      %p48 = scmp.eq.s32.totalorder %s31, 1
      %p49 = por %p47, %p48
      %p50 = scmp.ne.s32.totalorder %s39, %s40
      %p51 = scmp.eq.s32.totalorder %s31, 0
      %p52 = por %p50, %p51
      %p53 = scmp.ne.s32.totalorder %s39, %s40
      %p54 = scmp.eq.s32.totalorder %s32, 1
      %p55 = por %p53, %p54
      %p57 = scmp.ne.s32.totalorder %s40, %s56
      %p58 = scmp.eq.s32.totalorder %s32, 0
      %p59 = por %p57, %p58
      %s61 = sadd.s32 %s60, 1
      %p64 = scmp.eq.s32.totalorder %s26, 1
      %p65 = scmp.ne.s32.totalorder %s60, %s62
      %p66 = scmp.eq.s32.totalorder %s26, 0
      %p67 = por %p65, %p66
      %p68 = scmp.ne.s32.totalorder %s60, %s62
      %p69 = scmp.eq.s32.totalorder %s31, 1
      %p70 = por %p68, %p69
      %p71 = scmp.ne.s32.totalorder %s62, %s63
      %p72 = scmp.eq.s32.totalorder %s31, 0
      %p73 = por %p71, %p72
      %p74 = scmp.ne.s32.totalorder %s62, %s63
      %p75 = scmp.eq.s32.totalorder %s32, 1
      %p76 = por %p74, %p75
      %p78 = scmp.ne.s32.totalorder %s63, %s77
      %p79 = scmp.eq.s32.totalorder %s32, 0
      %p80 = por %p78, %p79
      %s82 = sadd.s32 %s81, 1
      %p85 = scmp.eq.s32.totalorder %s26, 1
      %p86 = scmp.ne.s32.totalorder %s81, %s83
      %p87 = scmp.eq.s32.totalorder %s26, 0
      %p88 = por %p86, %p87
      %p89 = scmp.ne.s32.totalorder %s81, %s83
      %p90 = scmp.eq.s32.totalorder %s31, 1
      %p91 = por %p89, %p90
      %p92 = scmp.ne.s32.totalorder %s83, %s84
      %p93 = scmp.eq.s32.totalorder %s31, 0
      %p94 = por %p92, %p93
      %p95 = scmp.ne.s32.totalorder %s83, %s84
      %p96 = scmp.eq.s32.totalorder %s32, 1
      %p97 = por %p95, %p96
      %p99 = scmp.ne.s32.totalorder %s84, %s98
      %p100 = scmp.eq.s32.totalorder %s32, 0
      %p101 = por %p99, %p100
      %s103 = sadd.s32 %s102, 1
      %p106 = scmp.eq.s32.totalorder %s26, 1
      %p107 = scmp.ne.s32.totalorder %s102, %s104
      %p108 = scmp.eq.s32.totalorder %s26, 0
      %p109 = por %p107, %p108
      %p110 = scmp.ne.s32.totalorder %s102, %s104
      %p111 = scmp.eq.s32.totalorder %s31, 1
      %p112 = por %p110, %p111
      %p113 = scmp.ne.s32.totalorder %s104, %s105
      %p114 = scmp.eq.s32.totalorder %s31, 0
      %p115 = por %p113, %p114
      %p116 = scmp.ne.s32.totalorder %s104, %s105
      %p117 = scmp.eq.s32.totalorder %s32, 1
      %p118 = por %p116, %p117
      %p120 = scmp.ne.s32.totalorder %s105, %s119
      %p121 = scmp.eq.s32.totalorder %s32, 0
      %p122 = por %p120, %p121
      %s124 = sadd.s32 %s123, 1
      %p127 = scmp.eq.s32.totalorder %s26, 1
      %p128 = scmp.ne.s32.totalorder %s123, %s125
      %p129 = scmp.eq.s32.totalorder %s26, 0
      %p130 = por %p128, %p129
      %p131 = scmp.ne.s32.totalorder %s123, %s125
      %p132 = scmp.eq.s32.totalorder %s31, 1
      %p133 = por %p131, %p132
      %p134 = scmp.ne.s32.totalorder %s125, %s126
      %p135 = scmp.eq.s32.totalorder %s31, 0
      %p136 = por %p134, %p135
      %p137 = scmp.ne.s32.totalorder %s125, %s126
      %p138 = scmp.eq.s32.totalorder %s32, 1
      %p139 = por %p137, %p138
      %p141 = scmp.ne.s32.totalorder %s126, %s140
      %p142 = scmp.eq.s32.totalorder %s32, 0
      %p143 = por %p141, %p142
      %s145 = sadd.s32 %s144, 1
      %p148 = scmp.eq.s32.totalorder %s26, 1
      %p149 = scmp.ne.s32.totalorder %s144, %s146
      %p150 = scmp.eq.s32.totalorder %s26, 0
      %p151 = por %p149, %p150
      %p152 = scmp.ne.s32.totalorder %s144, %s146
      %p153 = scmp.eq.s32.totalorder %s31, 1
      %p154 = por %p152, %p153
      %p155 = scmp.ne.s32.totalorder %s146, %s147
      %p156 = scmp.eq.s32.totalorder %s31, 0
      %p157 = por %p155, %p156
      %p158 = scmp.ne.s32.totalorder %s146, %s147
      %p159 = scmp.eq.s32.totalorder %s32, 1
      %p160 = por %p158, %p159
      %p162 = scmp.ne.s32.totalorder %s147, %s161
      %p163 = scmp.eq.s32.totalorder %s32, 0
      %p164 = por %p162, %p163
      %s166 = sadd.s32 %s165, 1
      %p169 = scmp.eq.s32.totalorder %s26, 1
      %p170 = scmp.ne.s32.totalorder %s165, %s167
      %p171 = scmp.eq.s32.totalorder %s26, 0
      %p172 = por %p170, %p171
      %p173 = scmp.ne.s32.totalorder %s165, %s167
      %p174 = scmp.eq.s32.totalorder %s31, 1
      %p175 = por %p173, %p174
      %p176 = scmp.ne.s32.totalorder %s167, %s168
      %p177 = scmp.eq.s32.totalorder %s31, 0
      %p178 = por %p176, %p177
      %p179 = scmp.ne.s32.totalorder %s167, %s168
      %p180 = scmp.eq.s32.totalorder %s32, 1
      %p181 = por %p179, %p180
      %p183 = scmp.ne.s32.totalorder %s168, %s182
      %p184 = scmp.eq.s32.totalorder %s32, 0
      %p185 = por %p183, %p184
      %s187 = sadd.s32 %s186, 1
      %p190 = scmp.eq.s32.totalorder %s26, 1
      %p191 = scmp.ne.s32.totalorder %s186, %s188
      %p192 = scmp.eq.s32.totalorder %s26, 0
      %p193 = por %p191, %p192
      %p194 = scmp.ne.s32.totalorder %s186, %s188
      %p195 = scmp.eq.s32.totalorder %s31, 1
      %p196 = por %p194, %p195
      %p197 = scmp.ne.s32.totalorder %s188, %s189
      %p198 = scmp.eq.s32.totalorder %s31, 0
      %p199 = por %p197, %p198
      %p200 = scmp.ne.s32.totalorder %s188, %s189
      %p201 = scmp.eq.s32.totalorder %s32, 1
      %p202 = por %p200, %p201
      %p204 = scmp.ne.s32.totalorder %s189, %s203
      %p205 = scmp.eq.s32.totalorder %s32, 0
      %p206 = por %p204, %p205
      %s208 = sadd.s32 %s207, 1
      %p211 = scmp.eq.s32.totalorder %s26, 1
      %p212 = scmp.ne.s32.totalorder %s207, %s209
      %p213 = scmp.eq.s32.totalorder %s26, 0
      %p214 = por %p212, %p213
      %p215 = scmp.ne.s32.totalorder %s207, %s209
      %p216 = scmp.eq.s32.totalorder %s31, 1
      %p217 = por %p215, %p216
      %p218 = scmp.ne.s32.totalorder %s209, %s210
      %p219 = scmp.eq.s32.totalorder %s31, 0
      %p220 = por %p218, %p219
      %p221 = scmp.ne.s32.totalorder %s209, %s210
      %p222 = scmp.eq.s32.totalorder %s32, 1
      %p223 = por %p221, %p222
      %p225 = scmp.ne.s32.totalorder %s210, %s224
      %p226 = scmp.eq.s32.totalorder %s32, 0
      %p227 = por %p225, %p226
      %s229 = sadd.s32 %s228, 1
      %p232 = scmp.eq.s32.totalorder %s26, 1
      %p233 = scmp.ne.s32.totalorder %s228, %s230
      %p234 = scmp.eq.s32.totalorder %s26, 0
      %p235 = por %p233, %p234
      %p236 = scmp.ne.s32.totalorder %s228, %s230
      %p237 = scmp.eq.s32.totalorder %s31, 1
      %p238 = por %p236, %p237
      %p239 = scmp.ne.s32.totalorder %s230, %s231
      %p240 = scmp.eq.s32.totalorder %s31, 0
      %p241 = por %p239, %p240
      %p242 = scmp.ne.s32.totalorder %s230, %s231
      %p243 = scmp.eq.s32.totalorder %s32, 1
      %p244 = por %p242, %p243
      %p246 = scmp.ne.s32.totalorder %s231, %s245
      %p247 = scmp.eq.s32.totalorder %s32, 0
      %p248 = por %p246, %p247
      %s250 = sadd.s32 %s249, 1
      %p253 = scmp.eq.s32.totalorder %s26, 1
      %p254 = scmp.ne.s32.totalorder %s249, %s251
      %p255 = scmp.eq.s32.totalorder %s26, 0
      %p256 = por %p254, %p255
      %p257 = scmp.ne.s32.totalorder %s249, %s251
      %p258 = scmp.eq.s32.totalorder %s31, 1
      %p259 = por %p257, %p258
      %p260 = scmp.ne.s32.totalorder %s251, %s252
      %p261 = scmp.eq.s32.totalorder %s31, 0
      %p262 = por %p260, %p261
      %p263 = scmp.ne.s32.totalorder %s251, %s252
      %p264 = scmp.eq.s32.totalorder %s32, 1
      %p265 = por %p263, %p264
      %p267 = scmp.ne.s32.totalorder %s252, %s266
      %p268 = scmp.eq.s32.totalorder %s32, 0
      %p269 = por %p267, %p268
      %s270 = ssub.s32 %s26, %s33
      %p271 = scmp.eq.s32.totalorder %s270, 0
      %s273 = sadd.s32 %s272, 1
      %s274 = scalar_select %p271, %s272, %s273
      %p277 = pneg %p271
      %p278 = scmp.eq.s32.totalorder %s26, 1
      %p279 = por %p277, %p278
      %p280 = scmp.ne.s32.totalorder %s272, %s275
      %p281 = scmp.eq.s32.totalorder %s26, 0
      %p282 = por %p280, %p281
      %p283 = scmp.ne.s32.totalorder %s272, %s275
      %p284 = scmp.eq.s32.totalorder %s31, 1
      %p285 = por %p283, %p284
      %p286 = scmp.ne.s32.totalorder %s275, %s276
      %p287 = scmp.eq.s32.totalorder %s31, 0
      %p288 = por %p286, %p287
      %p289 = scmp.ne.s32.totalorder %s275, %s276
      %p290 = scmp.eq.s32.totalorder %s32, 1
      %p291 = por %p289, %p290
      %p293 = scmp.ne.s32.totalorder %s276, %s292
      %p294 = scmp.eq.s32.totalorder %s32, 0
      %p295 = por %p293, %p294
      %p296 = scmp.le.s32.totalorder 1, %s26
      %p297 = scmp.lt.s32.totalorder %s26, 3
      %p298 = pnand %p296, %p297
      %p299 = pneg %p298
      // Predicated region
      $region9: #{simple_cnn_forward.1} parent=5 // pred_check
        _
      $region10: #{simple_cnn_forward.1} parent=5 // pred_check_branch
        %301 = sbr.rel (%p298) target = $region12
      $region11: #{simple_cnn_forward.1} parent=5 // pred_region
        %s302 = ssub.s32 %s26, 1
        // Predicated region
        $region13: #{simple_cnn_forward.1} parent=11 // pred_check
          %p303 = pneg %p73
        $region14: #{simple_cnn_forward.1} parent=11 // pred_check_branch
          %305 = sbr.rel (%p303) target = $region16
        $region15: #{simple_cnn_forward.1} parent=11 // pred_region
          %s307 = ssub.s32 64, 64
          %308 = vsyncadd [#allocation6], %s307
          %s310 = sshll.u32 [#allocation5], 4
          %s311 = int_to_ptr.vmem [resolvable:$true] %s310
          %313 = dma.hbm_to_vmem [thread:$0]  %s1, 64, %s311, [#allocation6]
        $region16: #{simple_cnn_forward.1} parent=11 // pred_fallthru
          _
        // Predicated region
        $region17: #{simple_cnn_forward.1} parent=11 // pred_check
          %p314 = pneg %p94
        $region18: #{simple_cnn_forward.1} parent=11 // pred_check_branch
          %316 = sbr.rel (%p314) target = $region20
        $region19: #{simple_cnn_forward.1} parent=11 // pred_region
          %s318 = ssub.s32 16, 16
          %319 = vsyncadd [#allocation9], %s318
          %s321 = sshll.u32 [#allocation8], 4
          %s322 = int_to_ptr.vmem [resolvable:$true] %s321
          %324 = dma.hbm_to_vmem [thread:$0]  %s2, 16, %s322, [#allocation9]
        $region20: #{simple_cnn_forward.1} parent=11 // pred_fallthru
          _
        // Predicated region
        $region21: #{simple_cnn_forward.1} parent=11 // pred_check
          %p325 = pneg %p115
        $region22: #{simple_cnn_forward.1} parent=11 // pred_check_branch
          %327 = sbr.rel (%p325) target = $region24
        $region23: #{simple_cnn_forward.1} parent=11 // pred_region
          %s329 = ssub.s32 2048, 2048
          %330 = vsyncadd [#allocation9], %s329
          %s331 = sshll.u32 [#allocation10], 4
          %s332 = int_to_ptr.vmem [resolvable:$true] %s331
          %337 = dma.hbm_to_vmem [thread:$0]  %s3, 2048, %s332, [#allocation9], 64, 64, 4
        $region24: #{simple_cnn_forward.1} parent=11 // pred_fallthru
          _
        // Predicated region
        $region25: #{simple_cnn_forward.1} parent=11 // pred_check
          %p338 = pneg %p136
        $region26: #{simple_cnn_forward.1} parent=11 // pred_check_branch
          %340 = sbr.rel (%p338) target = $region28
        $region27: #{simple_cnn_forward.1} parent=11 // pred_region
          %s342 = ssub.s32 16, 16
          %343 = vsyncadd [#allocation12], %s342
          %s345 = sshll.u32 [#allocation11], 4
          %s346 = int_to_ptr.vmem [resolvable:$true] %s345
          %348 = dma.hbm_to_vmem [thread:$0]  %s4, 16, %s346, [#allocation12]
        $region28: #{simple_cnn_forward.1} parent=11 // pred_fallthru
          _
        // Predicated region
        $region29: #{simple_cnn_forward.1} parent=11 // pred_check
          %p349 = pneg %p157
        $region30: #{simple_cnn_forward.1} parent=11 // pred_check_branch
          %351 = sbr.rel (%p349) target = $region32
        $region31: #{simple_cnn_forward.1} parent=11 // pred_region
          %s353 = ssub.s32 10240, 10240
          %354 = vsyncadd [#allocation12], %s353
          %s355 = sshll.u32 [#allocation13], 4
          %s356 = int_to_ptr.vmem [resolvable:$true] %s355
          %361 = dma.hbm_to_vmem [thread:$0]  %s5, 10240, %s356, [#allocation12], 128, 128, 8
        $region32: #{simple_cnn_forward.1} parent=11 // pred_fallthru
          _
        // Predicated region
        $region33: #{simple_cnn_forward.1} parent=11 // pred_check
          %p362 = pneg %p178
        $region34: #{simple_cnn_forward.1} parent=11 // pred_check_branch
          %364 = sbr.rel (%p362) target = $region36
        $region35: #{simple_cnn_forward.1} parent=11 // pred_region
          %s366 = ssub.s32 32, 32
          %367 = vsyncadd [#allocation15], %s366
          %s369 = sshll.u32 [#allocation14], 4
          %s370 = int_to_ptr.vmem [resolvable:$true] %s369
          %372 = dma.hbm_to_vmem [thread:$0]  %s6, 32, %s370, [#allocation15]
        $region36: #{simple_cnn_forward.1} parent=11 // pred_fallthru
          _
        // Predicated region
        $region37: #{simple_cnn_forward.1} parent=11 // pred_check
          %p373 = pneg %p199
        $region38: #{simple_cnn_forward.1} parent=11 // pred_check_branch
          %375 = sbr.rel (%p373) target = $region40
        $region39: #{simple_cnn_forward.1} parent=11 // pred_region
          %s377 = ssub.s32 49152, 49152
          %378 = vsyncadd [#allocation15], %s377
          %s379 = sshll.u32 [#allocation16], 4
          %s380 = int_to_ptr.vmem [resolvable:$true] %s379
          %385 = dma.hbm_to_vmem [thread:$0]  %s7, 49152, %s380, [#allocation15], 128, 128, 8
        $region40: #{simple_cnn_forward.1} parent=11 // pred_fallthru
          _
        // Predicated region
        $region41: #{simple_cnn_forward.1} parent=11 // pred_check
          %p386 = pneg %p220
        $region42: #{simple_cnn_forward.1} parent=11 // pred_check_branch
          %388 = sbr.rel (%p386) target = $region44
        $region43: #{simple_cnn_forward.1} parent=11 // pred_region
          %s390 = ssub.s32 32, 32
          %391 = vsyncadd [#allocation18], %s390
          %s393 = sshll.u32 [#allocation17], 4
          %s394 = int_to_ptr.vmem [resolvable:$true] %s393
          %396 = dma.hbm_to_vmem [thread:$0]  %s8, 32, %s394, [#allocation18]
        $region44: #{simple_cnn_forward.1} parent=11 // pred_fallthru
          _
        // Predicated region
        $region45: #{simple_cnn_forward.1} parent=11 // pred_check
          %p397 = pneg %p241
        $region46: #{simple_cnn_forward.1} parent=11 // pred_check_branch
          %399 = sbr.rel (%p397) target = $region48
        $region47: #{simple_cnn_forward.1} parent=11 // pred_region
          %s401 = ssub.s32 2048, 2048
          %402 = vsyncadd [#allocation18], %s401
          %s403 = sshll.u32 [#allocation19], 4
          %s404 = int_to_ptr.vmem [resolvable:$true] %s403
          %409 = dma.hbm_to_vmem [thread:$0]  %s9, 2048, %s404, [#allocation18], 64, 64, 4
        $region48: #{simple_cnn_forward.1} parent=11 // pred_fallthru
          _
        // Predicated region
        $region49: #{simple_cnn_forward.1} parent=11 // pred_check
          %p410 = pneg %p262
        $region50: #{simple_cnn_forward.1} parent=11 // pred_check_branch
          %412 = sbr.rel (%p410) target = $region52
        $region51: #{simple_cnn_forward.1} parent=11 // pred_region
          %s414 = ssub.s32 16, 16
          %415 = vsyncadd [#allocation21], %s414
          %s417 = sshll.u32 [#allocation20], 4
          %s418 = int_to_ptr.vmem [resolvable:$true] %s417
          %420 = dma.hbm_to_vmem [thread:$0]  %s10, 16, %s418, [#allocation21]
        $region52: #{simple_cnn_forward.1} parent=11 // pred_fallthru
          _
      $region12: #{simple_cnn_forward.1} parent=5 // pred_fallthru
        _
      %p421 = scmp.lt.s32.totalorder %s26, 2
      // Predicated region
      $region53: #{simple_cnn_forward.1} parent=5 // pred_check
        %p422 = pneg %p421
      $region54: #{simple_cnn_forward.1} parent=5 // pred_check_branch
        %424 = sbr.rel (%p422) target = $region56
      $region55: #{simple_cnn_forward.1} parent=5 // pred_region
        // Predicated region
        $region57: #{simple_cnn_forward.1} parent=55 // pred_check
          %p425 = pneg %p46
        $region58: #{simple_cnn_forward.1} parent=55 // pred_check_branch
          %427 = sbr.rel (%p425) target = $region60
        $region59: #{simple_cnn_forward.1} parent=55 // pred_region
          %p428 = scmp.lt.s32.totalorder %s26, 1
          %s429 = scalar_select %p428, %s26, 1
          %s430 = smul.addr %s429, 3
          %s431 = smul.addr %s430, 8
          %s432 = scalar_lea.vmem %s0, %s431
        $region60: #{simple_cnn_forward.1} parent=55 // pred_fallthru
          _
      $region56: #{simple_cnn_forward.1} parent=5 // pred_fallthru
        _
      %p433 = scmp.le.s32.totalorder 1, %s26
      %p434 = scmp.lt.s32.totalorder %s26, 3
      %p435 = pnand %p433, %p434
      %p436 = pneg %p435
      // Predicated region
      $region61: #{simple_cnn_forward.1} parent=5 // pred_check
        _
      $region62: #{simple_cnn_forward.1} parent=5 // pred_check_branch
        %438 = sbr.rel (%p435) target = $region64
      $region63: #{simple_cnn_forward.1} parent=5 // pred_region
        %s439 = ssub.s32 %s26, 1
        // Predicated region
        $region65: #{simple_cnn_forward.1} parent=63 // pred_check
          %p440 = pneg %p73
        $region66: #{simple_cnn_forward.1} parent=63 // pred_check_branch
          %442 = sbr.rel (%p440) target = $region68
        $region67: #{simple_cnn_forward.1} parent=63 // pred_region
          %443 = dma.done [#allocation6], 64
        $region68: #{simple_cnn_forward.1} parent=63 // pred_fallthru
          _
        // Predicated region
        $region69: #{simple_cnn_forward.1} parent=63 // pred_check
          %p444 = pneg %p94
        $region70: #{simple_cnn_forward.1} parent=63 // pred_check_branch
          %446 = sbr.rel (%p444) target = $region72
        $region71: #{simple_cnn_forward.1} parent=63 // pred_region
          %447 = dma.done [#allocation9], 16
        $region72: #{simple_cnn_forward.1} parent=63 // pred_fallthru
          _
        // Predicated region
        $region73: #{simple_cnn_forward.1} parent=63 // pred_check
          %p448 = pneg %p115
        $region74: #{simple_cnn_forward.1} parent=63 // pred_check_branch
          %450 = sbr.rel (%p448) target = $region76
        $region75: #{simple_cnn_forward.1} parent=63 // pred_region
          %451 = dma.done [#allocation9], 2048
        $region76: #{simple_cnn_forward.1} parent=63 // pred_fallthru
          _
        // Predicated region
        $region77: #{simple_cnn_forward.1} parent=63 // pred_check
          %p452 = pneg %p136
        $region78: #{simple_cnn_forward.1} parent=63 // pred_check_branch
          %454 = sbr.rel (%p452) target = $region80
        $region79: #{simple_cnn_forward.1} parent=63 // pred_region
          %455 = dma.done [#allocation12], 16
        $region80: #{simple_cnn_forward.1} parent=63 // pred_fallthru
          _
        // Predicated region
        $region81: #{simple_cnn_forward.1} parent=63 // pred_check
          %p456 = pneg %p157
        $region82: #{simple_cnn_forward.1} parent=63 // pred_check_branch
          %458 = sbr.rel (%p456) target = $region84
        $region83: #{simple_cnn_forward.1} parent=63 // pred_region
          %459 = dma.done [#allocation12], 10240
        $region84: #{simple_cnn_forward.1} parent=63 // pred_fallthru
          _
        // Predicated region
        $region85: #{simple_cnn_forward.1} parent=63 // pred_check
          %p460 = pneg %p178
        $region86: #{simple_cnn_forward.1} parent=63 // pred_check_branch
          %462 = sbr.rel (%p460) target = $region88
        $region87: #{simple_cnn_forward.1} parent=63 // pred_region
          %463 = dma.done [#allocation15], 32
        $region88: #{simple_cnn_forward.1} parent=63 // pred_fallthru
          _
        // Predicated region
        $region89: #{simple_cnn_forward.1} parent=63 // pred_check
          %p464 = pneg %p199
        $region90: #{simple_cnn_forward.1} parent=63 // pred_check_branch
          %466 = sbr.rel (%p464) target = $region92
        $region91: #{simple_cnn_forward.1} parent=63 // pred_region
          %467 = dma.done [#allocation15], 49152
        $region92: #{simple_cnn_forward.1} parent=63 // pred_fallthru
          _
        // Predicated region
        $region93: #{simple_cnn_forward.1} parent=63 // pred_check
          %p468 = pneg %p220
        $region94: #{simple_cnn_forward.1} parent=63 // pred_check_branch
          %470 = sbr.rel (%p468) target = $region96
        $region95: #{simple_cnn_forward.1} parent=63 // pred_region
          %471 = dma.done [#allocation18], 32
        $region96: #{simple_cnn_forward.1} parent=63 // pred_fallthru
          _
        // Predicated region
        $region97: #{simple_cnn_forward.1} parent=63 // pred_check
          %p472 = pneg %p241
        $region98: #{simple_cnn_forward.1} parent=63 // pred_check_branch
          %474 = sbr.rel (%p472) target = $region100
        $region99: #{simple_cnn_forward.1} parent=63 // pred_region
          %475 = dma.done [#allocation18], 2048
        $region100: #{simple_cnn_forward.1} parent=63 // pred_fallthru
          _
        // Predicated region
        $region101: #{simple_cnn_forward.1} parent=63 // pred_check
          %p476 = pneg %p262
        $region102: #{simple_cnn_forward.1} parent=63 // pred_check_branch
          %478 = sbr.rel (%p476) target = $region104
        $region103: #{simple_cnn_forward.1} parent=63 // pred_region
          %479 = dma.done [#allocation21], 16
        $region104: #{simple_cnn_forward.1} parent=63 // pred_fallthru
          _
        %p480 = scmp.lt.s32.totalorder %s31, 1
        %s481 = scalar_select %p480, %s31, 1
        %s482 = smul.addr %s481, 3
        %s483 = smul.addr %s482, 8
        %s484 = scalar_lea.vmem %s0, %s483
        %p485 = pneg %p52
        %p486 = pneg %p49
        %p487 = pneg %p73
        %p488 = pneg %p70
        %p489 = pneg %p94
        %p490 = pneg %p91
        %p491 = pneg %p115
        %p492 = pneg %p112
        %p493 = pneg %p136
        %p494 = pneg %p133
        %p495 = pneg %p157
        %p496 = pneg %p154
        %p497 = pneg %p178
        %p498 = pneg %p175
        %p499 = pneg %p199
        %p500 = pneg %p196
        %p501 = pneg %p220
        %p502 = pneg %p217
        %p503 = pneg %p241
        %p504 = pneg %p238
        %p505 = pneg %p262
        %p506 = pneg %p259
        %p507 = pneg %p288
        %p508 = pneg %p285
        %s509 = sand.u32 %s275, 1
        %s510 = scalar_lea.sflag [#allocation7], %s509
        %s511 = sand.u32 %s275, 1
        %s512 = scalar_lea.vmem [#allocation22], %s511
        %p513 = scmp.lt.s32.totalorder %s31, 1
        %s514 = scalar_select %p513, %s31, 1
        %s515 = smul.addr %s514, 3
        %s516 = smul.addr %s515, 8
        %s517 = scalar_lea.vmem %s0, %s516
        %v519 = vld [vmem:[#allocation8] sm:$0x1]
        %v520 = vld [vmem:[#allocation11] sm:$0x1]
        %v521 = vld [vmem:[#allocation14] sm:$0x3]
        %v522 = vld [vmem:[#allocation17] sm:$0x3]
        %v523 = vld [vmem:[#allocation20] sm:$0x1]
        %v524 = vld [vmem:[%s517] sm:$0xff]
        %v525 = vld [vmem:[%s517 + $0x8] sm:$0xff]
        %v526 = vld [vmem:[%s517 + $0x10] sm:$0x3f]
        %v527 = vld [vmem:[#allocation5] sm:$0x1]
        %529 = vset.pattern.permute.xlu0 0
        %530 = vperm.xlu0 %529, %v524
        %v531 = vpop.permute.xlu0 %530
        %534 = vset.pattern.permute.xlu0 0
        %535 = vperm.xlu0 %534, %v525
        %v536 = vpop.permute.xlu0 %535
        %539 = vset.pattern.permute.xlu0 0
        %540 = vperm.xlu0 %539, %v526
        %v541 = vpop.permute.xlu0 %540
        %v543 = vlaneseq
        %v544 = vshrl.u32 %v543, 7
        %v545 = vsub.s32 0, %v544
        %v546 = vrot.slane %v527, %v545
        %v547 = vmul.f32 %v531, %v546
        %v548 = vmul.f32 %v536, %v546
        %v549 = vmul.f32 %v541, %v546
        %v550 = vld [vmem:[#allocation5 + $0x1] sm:$0x1]
        %551 = vset.pattern.permute.xlu0 1
        %552 = vperm.xlu0 %551, %v524
        %v553 = vpop.permute.xlu0 %552
        %555 = vset.pattern.permute.xlu0 1
        %556 = vperm.xlu0 %555, %v525
        %v557 = vpop.permute.xlu0 %556
        %559 = vset.pattern.permute.xlu0 1
        %560 = vperm.xlu0 %559, %v526
        %v561 = vpop.permute.xlu0 %560
        %v563 = vlaneseq
        %v564 = vshrl.u32 %v563, 7
        %v565 = vsub.s32 0, %v564
        %v566 = vrot.slane %v550, %v565
        %v567 = vmul.f32 %v553, %v566
        %v568 = vmul.f32 %v557, %v566
        %v569 = vmul.f32 %v561, %v566
        %v570 = vadd.f32 %v547, %v567
        %v571 = vadd.f32 %v548, %v568
        %v572 = vadd.f32 %v549, %v569
        %v573 = vld [vmem:[%s517 + $0x1] sm:$0xff]
        %v574 = vld [vmem:[%s517 + $0x9] sm:$0xff]
        %v575 = vld [vmem:[%s517 + $0x11] sm:$0x3f]
        %v576 = vld [vmem:[#allocation5 + $0x2] sm:$0x1]
        %578 = vset.pattern.permute.xlu0 0
        %579 = vperm.xlu0 %578, %v573
        %v580 = vpop.permute.xlu0 %579
        %583 = vset.pattern.permute.xlu0 0
        %584 = vperm.xlu0 %583, %v574
        %v585 = vpop.permute.xlu0 %584
        %588 = vset.pattern.permute.xlu0 0
        %589 = vperm.xlu0 %588, %v575
        %v590 = vpop.permute.xlu0 %589
        %v592 = vlaneseq
        %v593 = vshrl.u32 %v592, 7
        %v594 = vsub.s32 0, %v593
        %v595 = vrot.slane %v576, %v594
        %v596 = vmul.f32 %v580, %v595
        %v597 = vmul.f32 %v585, %v595
        %v598 = vmul.f32 %v590, %v595
        %v599 = vadd.f32 %v570, %v596
        %v600 = vadd.f32 %v571, %v597
        %v601 = vadd.f32 %v572, %v598
        %v602 = vld [vmem:[#allocation5 + $0x3] sm:$0x1]
        %603 = vset.pattern.permute.xlu0 1
        %604 = vperm.xlu0 %603, %v573
        %v605 = vpop.permute.xlu0 %604
        %607 = vset.pattern.permute.xlu0 1
        %608 = vperm.xlu0 %607, %v574
        %v609 = vpop.permute.xlu0 %608
        %611 = vset.pattern.permute.xlu0 1
        %612 = vperm.xlu0 %611, %v575
        %v613 = vpop.permute.xlu0 %612
        %v615 = vlaneseq
        %v616 = vshrl.u32 %v615, 7
        %v617 = vsub.s32 0, %v616
        %v618 = vrot.slane %v602, %v617
        %v619 = vmul.f32 %v605, %v618
        %v620 = vmul.f32 %v609, %v618
        %v621 = vmul.f32 %v613, %v618
        %v622 = vadd.f32 %v599, %v619
        %v623 = vadd.f32 %v600, %v620
        %v624 = vadd.f32 %v601, %v621
        %v626 = vlaneseq
        %v627 = vshrl.u32 %v626, 7
        %v628 = vsub.s32 0, %v627
        %v629 = vrot.slane %v519, %v628
        %v631 = vadd.f32 %v622, %v629
        %v632 = vadd.f32 %v623, %v629
        %v633 = vadd.f32 %v624, %v629
        %v634 = vmax.f32 %v631, 0.0
        %v635 = vmax.f32 %v632, 0.0
        %v636 = vmax.f32 %v633, 0.0
        %v637 = vmul.f32 %v553, %v546
        %v638 = vmul.f32 %v557, %v546
        %v639 = vmul.f32 %v561, %v546
        %640 = vset.pattern.permute.xlu0 2
        %641 = vperm.xlu0 %640, %v524
        %v642 = vpop.permute.xlu0 %641
        %644 = vset.pattern.permute.xlu0 2
        %645 = vperm.xlu0 %644, %v525
        %v646 = vpop.permute.xlu0 %645
        %648 = vset.pattern.permute.xlu0 2
        %649 = vperm.xlu0 %648, %v526
        %v650 = vpop.permute.xlu0 %649
        %v652 = vmul.f32 %v642, %v566
        %v653 = vmul.f32 %v646, %v566
        %v654 = vmul.f32 %v650, %v566
        %v655 = vadd.f32 %v637, %v652
        %v656 = vadd.f32 %v638, %v653
        %v657 = vadd.f32 %v639, %v654
        %v658 = vmul.f32 %v605, %v595
        %v659 = vmul.f32 %v609, %v595
        %v660 = vmul.f32 %v613, %v595
        %v661 = vadd.f32 %v655, %v658
        %v662 = vadd.f32 %v656, %v659
        %v663 = vadd.f32 %v657, %v660
        %664 = vset.pattern.permute.xlu0 2
        %665 = vperm.xlu0 %664, %v573
        %v666 = vpop.permute.xlu0 %665
        %668 = vset.pattern.permute.xlu0 2
        %669 = vperm.xlu0 %668, %v574
        %v670 = vpop.permute.xlu0 %669
        %672 = vset.pattern.permute.xlu0 2
        %673 = vperm.xlu0 %672, %v575
        %v674 = vpop.permute.xlu0 %673
        %v676 = vmul.f32 %v666, %v618
        %v677 = vmul.f32 %v670, %v618
        %v678 = vmul.f32 %v674, %v618
        %v679 = vadd.f32 %v661, %v676
        %v680 = vadd.f32 %v662, %v677
        %v681 = vadd.f32 %v663, %v678
        %v682 = vadd.f32 %v679, %v629
        %v683 = vadd.f32 %v680, %v629
        %v684 = vadd.f32 %v681, %v629
        %v685 = vmax.f32 %v682, 0.0
        %v686 = vmax.f32 %v683, 0.0
        %v687 = vmax.f32 %v684, 0.0
        %v688 = vmax.f32 %v634, %v685
        %v689 = vmax.f32 %v635, %v686
        %v690 = vmax.f32 %v636, %v687
        %vm691 = vcmask 523264
        %692 = vst.msk [vmem:[#allocation2] sm:$0xff] %vm691, 0.0
        %vm693 = vcmask 520192
        %694 = vst.msk [vmem:[#allocation2 + $0x8] sm:$0x1f] %vm693, 0.0
        %v696 = vrot.slane %v688, 1
        %v698 = vmax.f32 %v688, %v696
        %vm699 = vcmask 516096
        %700 = vst.msk [vmem:[#allocation2 + $0x1] sm:$0x1] %vm699, %v698
        %vm701 = vcmask 518146
        %702 = vst.msk [vmem:[#allocation2] sm:$0x4] %vm701, %v698
        %vm703 = vcmask 520196
        %704 = vst.msk [vmem:[#allocation2 - $0x1] sm:$0x10] %vm703, %v698
        %vm705 = vcmask 522246
        %706 = vst.msk [vmem:[#allocation2 - $0x2] sm:$0x40] %vm705, %v698
        %v708 = vrot.slane %v689, 1
        %v710 = vmax.f32 %v689, %v708
        %711 = vst.msk [vmem:[#allocation2 + $0x5] sm:$0x1] %vm699, %v710
        %712 = vst.msk [vmem:[#allocation2 + $0x4] sm:$0x4] %vm701, %v710
        %713 = vst.msk [vmem:[#allocation2 + $0x3] sm:$0x10] %vm703, %v710
        %714 = vst.msk [vmem:[#allocation2 + $0x2] sm:$0x40] %vm705, %v710
        %v716 = vrot.slane %v690, 1
        %v718 = vmax.f32 %v690, %v716
        %719 = vst.msk [vmem:[#allocation2 + $0x9] sm:$0x1] %vm699, %v718
        %720 = vst.msk [vmem:[#allocation2 + $0x8] sm:$0x4] %vm701, %v718
        %721 = vst.msk [vmem:[#allocation2 + $0x7] sm:$0x10] %vm703, %v718
        %v722 = vld [vmem:[#allocation2] sm:$0xff]
        %v723 = vld [vmem:[#allocation2 + $0x8] sm:$0xf]
        %v724 = vld [vmem:[#allocation2 + $0x1] sm:$0xff]
        %v725 = vld [vmem:[#allocation2 + $0x9] sm:$0xf]
        %v726 = vld [vmem:[#allocation10 + $0x20] sm:$0xf]
        %v727 = vld [vmem:[#allocation10 + $0x24] sm:$0xf]
        %v728 = vld [vmem:[#allocation10 + $0x28] sm:$0xf]
        %v729 = vld [vmem:[#allocation10 + $0x2c] sm:$0xf]
        %v730 = vld [vmem:[#allocation10 + $0x30] sm:$0xf]
        %v731 = vld [vmem:[#allocation10 + $0x34] sm:$0xf]
        %v732 = vld [vmem:[#allocation10 + $0x38] sm:$0xf]
        %v733 = vld [vmem:[#allocation10 + $0x3c] sm:$0xf]
        %v734 = vpack.c.bf16 %v723, %v722
        %v743 = vunpack.c.l.b16 %v726
        %v744 = vunpack.c.l.b16 %v727
        %v745 = vunpack.c.l.b16 %v728
        %v746 = vunpack.c.l.b16 %v729
        %v747 = vunpack.c.l.b16 %v730
        %v748 = vunpack.c.l.b16 %v731
        %v749 = vunpack.c.l.b16 %v732
        %v750 = vunpack.c.l.b16 %v733
        %v751 = vpack.c.b16 %v744, %v743
        %v752 = vpack.c.b16 %v746, %v745
        %v753 = vpack.c.b16 %v748, %v747
        %v754 = vpack.c.b16 %v750, %v749
        %v760 = vsel %vm691, %v734, 0
        %762 = vmatprep.subr.bf16.mxu0 0
        %763 = vmatpush1.bf16.msra.mxu0 %v751
        %764 = vmatprep.subr.bf16.mxu0 0
        %765 = vmatpush1.bf16.msra.mxu0 %v752
        %766 = vmatprep.subr.bf16.mxu0 0
        %767 = vmatpush1.bf16.msra.mxu0 %v753
        %768 = vmatprep.subr.bf16.mxu0 0
        %769 = vmatpush1.bf16.msra.mxu0 %v754
        %770 = vmatprep.subr.bf16.mxu0 0
        %771 = vmatpush1.bf16.msra.mxu0 0
        %772 = vmatprep.subr.bf16.mxu0 0
        %773 = vmatpush1.bf16.msra.mxu0 0
        %774 = vmatprep.subr.bf16.mxu0 0
        %775 = vmatpush1.bf16.msra.mxu0 0
        %776 = vmatprep.subr.bf16.mxu0 0
        %777 = vmatpush1.bf16.msra.mxu0 0
        %778 = vmatprep.subr.bf16.mxu0 0
        %779 = vmatpush1.bf16.msra.mxu0 0
        %780 = vmatprep.subr.bf16.mxu0 0
        %781 = vmatpush1.bf16.msra.mxu0 0
        %782 = vmatprep.subr.bf16.mxu0 0
        %783 = vmatpush1.bf16.msra.mxu0 0
        %784 = vmatprep.subr.bf16.mxu0 0
        %785 = vmatpush1.bf16.msra.mxu0 0
        %786 = vmatprep.subr.bf16.mxu0 0
        %787 = vmatpush1.bf16.msra.mxu0 0
        %788 = vmatprep.subr.bf16.mxu0 0
        %789 = vmatpush1.bf16.msra.mxu0 0
        %790 = vmatprep.subr.bf16.mxu0 0
        %791 = vmatpush1.bf16.msra.mxu0 0
        %792 = vmatprep.subr.bf16.mxu0 0
        %793 = vmatpush1.bf16.msra.mxu0 0
        %794 = vmatprep.mubr.bf16.mxu0 0
        %795 = vmatmul.mubr.bf16.gmra.mrb[0].mxu0 %v760
        %v796 = vpop.f32.mrb[0].mxu0
        %v797 = vadd.f32 0.0, %v796
        %v798 = vpop.f32.mrb[0].mxu0
        %v799 = vpop.f32.mrb[0].mxu0
        %v800 = vadd.f32 0.0, %v799
        %v801 = vpop.f32.mrb[0].mxu0
        %802 = vdwg.mxu0
        %v804 = vlaneseq
        %v805 = vshrl.u32 %v804, 7
        %v806 = vsub.s32 0, %v805
        %v807 = vrot.slane %v520, %v806
        %v809 = vadd.f32 %v807, %v797
        %v810 = vadd.f32 %v807, %v800
        %v811 = vld [vmem:[#allocation10 + $0x60] sm:$0xf]
        %v812 = vld [vmem:[#allocation10 + $0x64] sm:$0xf]
        %v813 = vld [vmem:[#allocation10 + $0x68] sm:$0xf]
        %v814 = vld [vmem:[#allocation10 + $0x6c] sm:$0xf]
        %v815 = vld [vmem:[#allocation10 + $0x70] sm:$0xf]
        %v816 = vld [vmem:[#allocation10 + $0x74] sm:$0xf]
        %v817 = vld [vmem:[#allocation10 + $0x78] sm:$0xf]
        %v818 = vld [vmem:[#allocation10 + $0x7c] sm:$0xf]
        %v819 = vpack.c.bf16 %v725, %v724
        %v828 = vunpack.c.l.b16 %v811
        %v829 = vunpack.c.l.b16 %v812
        %v830 = vunpack.c.l.b16 %v813
        %v831 = vunpack.c.l.b16 %v814
        %v832 = vunpack.c.l.b16 %v815
        %v833 = vunpack.c.l.b16 %v816
        %v834 = vunpack.c.l.b16 %v817
        %v835 = vunpack.c.l.b16 %v818
        %v836 = vpack.c.b16 %v829, %v828
        %v837 = vpack.c.b16 %v831, %v830
        %v838 = vpack.c.b16 %v833, %v832
        %v839 = vpack.c.b16 %v835, %v834
        %v845 = vsel %vm691, %v819, 0
        %847 = vmatprep.subr.bf16.mxu0 0
        %848 = vmatpush1.bf16.msra.mxu0 %v836
        %849 = vmatprep.subr.bf16.mxu0 0
        %850 = vmatpush1.bf16.msra.mxu0 %v837
        %851 = vmatprep.subr.bf16.mxu0 0
        %852 = vmatpush1.bf16.msra.mxu0 %v838
        %853 = vmatprep.subr.bf16.mxu0 0
        %854 = vmatpush1.bf16.msra.mxu0 %v839
        %855 = vmatprep.subr.bf16.mxu0 0
        %856 = vmatpush1.bf16.msra.mxu0 0
        %857 = vmatprep.subr.bf16.mxu0 0
        %858 = vmatpush1.bf16.msra.mxu0 0
        %859 = vmatprep.subr.bf16.mxu0 0
        %860 = vmatpush1.bf16.msra.mxu0 0
        %861 = vmatprep.subr.bf16.mxu0 0
        %862 = vmatpush1.bf16.msra.mxu0 0
        %863 = vmatprep.subr.bf16.mxu0 0
        %864 = vmatpush1.bf16.msra.mxu0 0
        %865 = vmatprep.subr.bf16.mxu0 0
        %866 = vmatpush1.bf16.msra.mxu0 0
        %867 = vmatprep.subr.bf16.mxu0 0
        %868 = vmatpush1.bf16.msra.mxu0 0
        %869 = vmatprep.subr.bf16.mxu0 0
        %870 = vmatpush1.bf16.msra.mxu0 0
        %871 = vmatprep.subr.bf16.mxu0 0
        %872 = vmatpush1.bf16.msra.mxu0 0
        %873 = vmatprep.subr.bf16.mxu0 0
        %874 = vmatpush1.bf16.msra.mxu0 0
        %875 = vmatprep.subr.bf16.mxu0 0
        %876 = vmatpush1.bf16.msra.mxu0 0
        %877 = vmatprep.subr.bf16.mxu0 0
        %878 = vmatpush1.bf16.msra.mxu0 0
        %879 = vmatprep.mubr.bf16.mxu0 0
        %880 = vmatmul.mubr.bf16.gmra.mrb[0].mxu0 %v845
        %v881 = vpop.f32.mrb[0].mxu0
        %v882 = vadd.f32 0.0, %v881
        %v883 = vpop.f32.mrb[0].mxu0
        %v884 = vpop.f32.mrb[0].mxu0
        %v885 = vadd.f32 0.0, %v884
        %v886 = vpop.f32.mrb[0].mxu0
        %887 = vdwg.mxu0
        %v888 = vadd.f32 %v809, %v882
        %v889 = vadd.f32 %v810, %v885
        %v890 = vmax.f32 %v888, 0.0
        %v891 = vmax.f32 %v889, 0.0
        %v892 = vld [vmem:[#allocation10] sm:$0xf]
        %v893 = vld [vmem:[#allocation10 + $0x4] sm:$0xf]
        %v894 = vld [vmem:[#allocation10 + $0x8] sm:$0xf]
        %v895 = vld [vmem:[#allocation10 + $0xc] sm:$0xf]
        %v896 = vld [vmem:[#allocation10 + $0x10] sm:$0xf]
        %v897 = vld [vmem:[#allocation10 + $0x14] sm:$0xf]
        %v898 = vld [vmem:[#allocation10 + $0x18] sm:$0xf]
        %v899 = vld [vmem:[#allocation10 + $0x1c] sm:$0xf]
        %v908 = vunpack.c.l.b16 %v892
        %v909 = vunpack.c.l.b16 %v893
        %v910 = vunpack.c.l.b16 %v894
        %v911 = vunpack.c.l.b16 %v895
        %v912 = vunpack.c.l.b16 %v896
        %v913 = vunpack.c.l.b16 %v897
        %v914 = vunpack.c.l.b16 %v898
        %v915 = vunpack.c.l.b16 %v899
        %v916 = vpack.c.b16 %v909, %v908
        %v917 = vpack.c.b16 %v911, %v910
        %v918 = vpack.c.b16 %v913, %v912
        %v919 = vpack.c.b16 %v915, %v914
        %924 = vmatprep.subr.bf16.mxu0 0
        %925 = vmatpush1.bf16.msra.mxu0 %v916
        %926 = vmatprep.subr.bf16.mxu0 0
        %927 = vmatpush1.bf16.msra.mxu0 %v917
        %928 = vmatprep.subr.bf16.mxu0 0
        %929 = vmatpush1.bf16.msra.mxu0 %v918
        %930 = vmatprep.subr.bf16.mxu0 0
        %931 = vmatpush1.bf16.msra.mxu0 %v919
        %932 = vmatprep.subr.bf16.mxu0 0
        %933 = vmatpush1.bf16.msra.mxu0 0
        %934 = vmatprep.subr.bf16.mxu0 0
        %935 = vmatpush1.bf16.msra.mxu0 0
        %936 = vmatprep.subr.bf16.mxu0 0
        %937 = vmatpush1.bf16.msra.mxu0 0
        %938 = vmatprep.subr.bf16.mxu0 0
        %939 = vmatpush1.bf16.msra.mxu0 0
        %940 = vmatprep.subr.bf16.mxu0 0
        %941 = vmatpush1.bf16.msra.mxu0 0
        %942 = vmatprep.subr.bf16.mxu0 0
        %943 = vmatpush1.bf16.msra.mxu0 0
        %944 = vmatprep.subr.bf16.mxu0 0
        %945 = vmatpush1.bf16.msra.mxu0 0
        %946 = vmatprep.subr.bf16.mxu0 0
        %947 = vmatpush1.bf16.msra.mxu0 0
        %948 = vmatprep.subr.bf16.mxu0 0
        %949 = vmatpush1.bf16.msra.mxu0 0
        %950 = vmatprep.subr.bf16.mxu0 0
        %951 = vmatpush1.bf16.msra.mxu0 0
        %952 = vmatprep.subr.bf16.mxu0 0
        %953 = vmatpush1.bf16.msra.mxu0 0
        %954 = vmatprep.subr.bf16.mxu0 0
        %955 = vmatpush1.bf16.msra.mxu0 0
        %956 = vmatprep.mubr.bf16.mxu0 0
        %957 = vmatmul.mubr.bf16.gmra.mrb[0].mxu0 %v760
        %v958 = vpop.f32.mrb[0].mxu0
        %v959 = vadd.f32 0.0, %v958
        %v960 = vpop.f32.mrb[0].mxu0
        %v961 = vpop.f32.mrb[0].mxu0
        %v962 = vadd.f32 0.0, %v961
        %v963 = vpop.f32.mrb[0].mxu0
        %964 = vdwg.mxu0
        %v965 = vadd.f32 %v807, %v959
        %v966 = vadd.f32 %v807, %v962
        %v967 = vld [vmem:[#allocation10 + $0x40] sm:$0xf]
        %v968 = vld [vmem:[#allocation10 + $0x44] sm:$0xf]
        %v969 = vld [vmem:[#allocation10 + $0x48] sm:$0xf]
        %v970 = vld [vmem:[#allocation10 + $0x4c] sm:$0xf]
        %v971 = vld [vmem:[#allocation10 + $0x50] sm:$0xf]
        %v972 = vld [vmem:[#allocation10 + $0x54] sm:$0xf]
        %v973 = vld [vmem:[#allocation10 + $0x58] sm:$0xf]
        %v974 = vld [vmem:[#allocation10 + $0x5c] sm:$0xf]
        %v983 = vunpack.c.l.b16 %v967
        %v984 = vunpack.c.l.b16 %v968
        %v985 = vunpack.c.l.b16 %v969
        %v986 = vunpack.c.l.b16 %v970
        %v987 = vunpack.c.l.b16 %v971
        %v988 = vunpack.c.l.b16 %v972
        %v989 = vunpack.c.l.b16 %v973
        %v990 = vunpack.c.l.b16 %v974
        %v991 = vpack.c.b16 %v984, %v983
        %v992 = vpack.c.b16 %v986, %v985
        %v993 = vpack.c.b16 %v988, %v987
        %v994 = vpack.c.b16 %v990, %v989
        %999 = vmatprep.subr.bf16.mxu0 0
        %1000 = vmatpush1.bf16.msra.mxu0 %v991
        %1001 = vmatprep.subr.bf16.mxu0 0
        %1002 = vmatpush1.bf16.msra.mxu0 %v992
        %1003 = vmatprep.subr.bf16.mxu0 0
        %1004 = vmatpush1.bf16.msra.mxu0 %v993
        %1005 = vmatprep.subr.bf16.mxu0 0
        %1006 = vmatpush1.bf16.msra.mxu0 %v994
        %1007 = vmatprep.subr.bf16.mxu0 0
        %1008 = vmatpush1.bf16.msra.mxu0 0
        %1009 = vmatprep.subr.bf16.mxu0 0
        %1010 = vmatpush1.bf16.msra.mxu0 0
        %1011 = vmatprep.subr.bf16.mxu0 0
        %1012 = vmatpush1.bf16.msra.mxu0 0
        %1013 = vmatprep.subr.bf16.mxu0 0
        %1014 = vmatpush1.bf16.msra.mxu0 0
        %1015 = vmatprep.subr.bf16.mxu0 0
        %1016 = vmatpush1.bf16.msra.mxu0 0
        %1017 = vmatprep.subr.bf16.mxu0 0
        %1018 = vmatpush1.bf16.msra.mxu0 0
        %1019 = vmatprep.subr.bf16.mxu0 0
        %1020 = vmatpush1.bf16.msra.mxu0 0
        %1021 = vmatprep.subr.bf16.mxu0 0
        %1022 = vmatpush1.bf16.msra.mxu0 0
        %1023 = vmatprep.subr.bf16.mxu0 0
        %1024 = vmatpush1.bf16.msra.mxu0 0
        %1025 = vmatprep.subr.bf16.mxu0 0
        %1026 = vmatpush1.bf16.msra.mxu0 0
        %1027 = vmatprep.subr.bf16.mxu0 0
        %1028 = vmatpush1.bf16.msra.mxu0 0
        %1029 = vmatprep.subr.bf16.mxu0 0
        %1030 = vmatpush1.bf16.msra.mxu0 0
        %1031 = vmatprep.mubr.bf16.mxu0 0
        %1032 = vmatmul.mubr.bf16.gmra.mrb[0].mxu0 %v845
        %v1033 = vpop.f32.mrb[0].mxu0
        %v1034 = vadd.f32 0.0, %v1033
        %v1035 = vpop.f32.mrb[0].mxu0
        %v1036 = vpop.f32.mrb[0].mxu0
        %v1037 = vadd.f32 0.0, %v1036
        %v1038 = vpop.f32.mrb[0].mxu0
        %1039 = vdwg.mxu0
        %v1040 = vadd.f32 %v965, %v1034
        %v1041 = vadd.f32 %v966, %v1037
        %v1042 = vmax.f32 %v1040, 0.0
        %v1043 = vmax.f32 %v1041, 0.0
        %v1044 = vmax.f32 %v890, %v1042
        %v1045 = vmax.f32 %v891, %v1043
        %1046 = vst [vmem:[#allocation3] sm:$0xff] 0.0
        %v1048 = vrot.slane %v1044, 1
        %v1050 = vmax.f32 %v1044, %v1048
        %1051 = vst [vmem:[#allocation3 + $0x1] sm:$0x1] %v1050
        %1052 = vst [vmem:[#allocation3] sm:$0x4] %v1050
        %1053 = vst [vmem:[#allocation3 - $0x1] sm:$0x10] %v1050
        %1054 = vst [vmem:[#allocation3 - $0x2] sm:$0x40] %v1050
        %v1056 = vrot.slane %v1045, 1
        %v1058 = vmax.f32 %v1045, %v1056
        %1059 = vst [vmem:[#allocation3 + $0x5] sm:$0x1] %v1058
        %1060 = vst [vmem:[#allocation3 + $0x4] sm:$0x4] %v1058
        %v1061 = vld [vmem:[#allocation3] sm:$0xf]
        %v1062 = vld [vmem:[#allocation13] sm:$0xff]
        %v1063 = vld [vmem:[#allocation13 + $0x8] sm:$0xff]
        %v1064 = vld [vmem:[#allocation13 + $0x10] sm:$0xff]
        %v1065 = vld [vmem:[#allocation13 + $0x18] sm:$0xff]
        %v1066 = vld [vmem:[#allocation13 + $0x20] sm:$0xff]
        %v1067 = vld [vmem:[#allocation13 + $0x28] sm:$0xff]
        %v1068 = vld [vmem:[#allocation13 + $0x30] sm:$0xff]
        %v1069 = vld [vmem:[#allocation13 + $0x38] sm:$0xff]
        %v1070 = vld [vmem:[#allocation13 + $0x40] sm:$0xff]
        %v1071 = vld [vmem:[#allocation13 + $0x48] sm:$0xff]
        %v1072 = vld [vmem:[#allocation13 + $0x50] sm:$0xff]
        %v1073 = vld [vmem:[#allocation13 + $0x58] sm:$0xff]
        %v1074 = vld [vmem:[#allocation13 + $0x60] sm:$0xff]
        %v1075 = vld [vmem:[#allocation13 + $0x68] sm:$0xff]
        %v1076 = vld [vmem:[#allocation13 + $0x70] sm:$0xff]
        %v1077 = vld [vmem:[#allocation13 + $0x78] sm:$0xff]
        %v1078 = vpack.c.bf16 %v1061, %v1061
        %v1095 = vunpack.c.l.b16 %v1062
        %v1096 = vunpack.c.h.b16 %v1062
        %v1097 = vunpack.c.l.b16 %v1063
        %v1098 = vunpack.c.h.b16 %v1063
        %v1099 = vunpack.c.l.b16 %v1064
        %v1100 = vunpack.c.h.b16 %v1064
        %v1101 = vunpack.c.l.b16 %v1065
        %v1102 = vunpack.c.h.b16 %v1065
        %v1103 = vunpack.c.l.b16 %v1066
        %v1104 = vunpack.c.h.b16 %v1066
        %v1105 = vunpack.c.l.b16 %v1067
        %v1106 = vunpack.c.h.b16 %v1067
        %v1107 = vunpack.c.l.b16 %v1068
        %v1108 = vunpack.c.h.b16 %v1068
        %v1109 = vunpack.c.l.b16 %v1069
        %v1110 = vunpack.c.h.b16 %v1069
        %v1111 = vunpack.c.l.b16 %v1070
        %v1112 = vunpack.c.h.b16 %v1070
        %v1113 = vunpack.c.l.b16 %v1071
        %v1114 = vunpack.c.h.b16 %v1071
        %v1115 = vunpack.c.l.b16 %v1072
        %v1116 = vunpack.c.h.b16 %v1072
        %v1117 = vunpack.c.l.b16 %v1073
        %v1118 = vunpack.c.h.b16 %v1073
        %v1119 = vunpack.c.l.b16 %v1074
        %v1120 = vunpack.c.h.b16 %v1074
        %v1121 = vunpack.c.l.b16 %v1075
        %v1122 = vunpack.c.h.b16 %v1075
        %v1123 = vunpack.c.l.b16 %v1076
        %v1124 = vunpack.c.h.b16 %v1076
        %v1125 = vunpack.c.l.b16 %v1077
        %v1126 = vunpack.c.h.b16 %v1077
        %v1127 = vpack.c.b16 %v1097, %v1095
        %v1128 = vpack.c.b16 %v1098, %v1096
        %v1129 = vpack.c.b16 %v1101, %v1099
        %v1130 = vpack.c.b16 %v1102, %v1100
        %v1131 = vpack.c.b16 %v1105, %v1103
        %v1132 = vpack.c.b16 %v1106, %v1104
        %v1133 = vpack.c.b16 %v1109, %v1107
        %v1134 = vpack.c.b16 %v1110, %v1108
        %v1135 = vpack.c.b16 %v1113, %v1111
        %v1136 = vpack.c.b16 %v1114, %v1112
        %v1137 = vpack.c.b16 %v1117, %v1115
        %v1138 = vpack.c.b16 %v1118, %v1116
        %v1139 = vpack.c.b16 %v1121, %v1119
        %v1140 = vpack.c.b16 %v1122, %v1120
        %v1141 = vpack.c.b16 %v1125, %v1123
        %v1142 = vpack.c.b16 %v1126, %v1124
        %1159 = vmatprep.subr.bf16.mxu0 %v1128
        %1160 = vmatpush1.bf16.msra.mxu0 %v1127
        %1161 = vmatprep.subr.bf16.mxu0 %v1130
        %1162 = vmatpush1.bf16.msra.mxu0 %v1129
        %1163 = vmatprep.subr.bf16.mxu0 %v1132
        %1164 = vmatpush1.bf16.msra.mxu0 %v1131
        %1165 = vmatprep.subr.bf16.mxu0 %v1134
        %1166 = vmatpush1.bf16.msra.mxu0 %v1133
        %1167 = vmatprep.subr.bf16.mxu0 %v1136
        %1168 = vmatpush1.bf16.msra.mxu0 %v1135
        %1169 = vmatprep.subr.bf16.mxu0 %v1138
        %1170 = vmatpush1.bf16.msra.mxu0 %v1137
        %1171 = vmatprep.subr.bf16.mxu0 %v1140
        %1172 = vmatpush1.bf16.msra.mxu0 %v1139
        %1173 = vmatprep.subr.bf16.mxu0 %v1142
        %1174 = vmatpush1.bf16.msra.mxu0 %v1141
        %1175 = vmatprep.subr.bf16.mxu0 0
        %1176 = vmatpush1.bf16.msra.mxu0 0
        %1177 = vmatprep.subr.bf16.mxu0 0
        %1178 = vmatpush1.bf16.msra.mxu0 0
        %1179 = vmatprep.subr.bf16.mxu0 0
        %1180 = vmatpush1.bf16.msra.mxu0 0
        %1181 = vmatprep.subr.bf16.mxu0 0
        %1182 = vmatpush1.bf16.msra.mxu0 0
        %1183 = vmatprep.subr.bf16.mxu0 0
        %1184 = vmatpush1.bf16.msra.mxu0 0
        %1185 = vmatprep.subr.bf16.mxu0 0
        %1186 = vmatpush1.bf16.msra.mxu0 0
        %1187 = vmatprep.subr.bf16.mxu0 0
        %1188 = vmatpush1.bf16.msra.mxu0 0
        %1189 = vmatprep.subr.bf16.mxu0 0
        %1190 = vmatpush1.bf16.msra.mxu0 0
        %1191 = vmatprep.mubr.bf16.mxu0 0
        %1192 = vmatmul.mubr.bf16.gmra.mrb[0].mxu0 %v1078
        %v1193 = vpop.f32.mrb[0].mxu0
        %v1194 = vadd.f32 0.0, %v1193
        %v1195 = vpop.f32.mrb[0].mxu0
        %v1196 = vadd.f32 0.0, %v1195
        %v1197 = vpop.f32.mrb[0].mxu0
        %v1198 = vpop.f32.mrb[0].mxu0
        %1199 = vdwg.mxu0
        %v1201 = vlaneseq
        %v1202 = vshrl.u32 %v1201, 7
        %v1203 = vsub.s32 0, %v1202
        %v1204 = vrot.slane %v521, %v1203
        %v1205 = vlaneseq
        %v1206 = vshrl.u32 %v1205, 7
        %v1207 = vsub.s32 1, %v1206
        %v1208 = vrot.slane %v521, %v1207
        %v1211 = vadd.f32 %v1204, %v1194
        %v1212 = vadd.f32 %v1208, %v1196
        %v1213 = vld [vmem:[#allocation3 + $0x1] sm:$0xf]
        %v1214 = vld [vmem:[#allocation13 + $0x80] sm:$0xff]
        %v1215 = vld [vmem:[#allocation13 + $0x88] sm:$0xff]
        %v1216 = vld [vmem:[#allocation13 + $0x90] sm:$0xff]
        %v1217 = vld [vmem:[#allocation13 + $0x98] sm:$0xff]
        %v1218 = vld [vmem:[#allocation13 + $0xa0] sm:$0xff]
        %v1219 = vld [vmem:[#allocation13 + $0xa8] sm:$0xff]
        %v1220 = vld [vmem:[#allocation13 + $0xb0] sm:$0xff]
        %v1221 = vld [vmem:[#allocation13 + $0xb8] sm:$0xff]
        %v1222 = vld [vmem:[#allocation13 + $0xc0] sm:$0xff]
        %v1223 = vld [vmem:[#allocation13 + $0xc8] sm:$0xff]
        %v1224 = vld [vmem:[#allocation13 + $0xd0] sm:$0xff]
        %v1225 = vld [vmem:[#allocation13 + $0xd8] sm:$0xff]
        %v1226 = vld [vmem:[#allocation13 + $0xe0] sm:$0xff]
        %v1227 = vld [vmem:[#allocation13 + $0xe8] sm:$0xff]
        %v1228 = vld [vmem:[#allocation13 + $0xf0] sm:$0xff]
        %v1229 = vld [vmem:[#allocation13 + $0xf8] sm:$0xff]
        %v1230 = vpack.c.bf16 %v1213, %v1213
        %v1247 = vunpack.c.l.b16 %v1214
        %v1248 = vunpack.c.h.b16 %v1214
        %v1249 = vunpack.c.l.b16 %v1215
        %v1250 = vunpack.c.h.b16 %v1215
        %v1251 = vunpack.c.l.b16 %v1216
        %v1252 = vunpack.c.h.b16 %v1216
        %v1253 = vunpack.c.l.b16 %v1217
        %v1254 = vunpack.c.h.b16 %v1217
        %v1255 = vunpack.c.l.b16 %v1218
        %v1256 = vunpack.c.h.b16 %v1218
        %v1257 = vunpack.c.l.b16 %v1219
        %v1258 = vunpack.c.h.b16 %v1219
        %v1259 = vunpack.c.l.b16 %v1220
        %v1260 = vunpack.c.h.b16 %v1220
        %v1261 = vunpack.c.l.b16 %v1221
        %v1262 = vunpack.c.h.b16 %v1221
        %v1263 = vunpack.c.l.b16 %v1222
        %v1264 = vunpack.c.h.b16 %v1222
        %v1265 = vunpack.c.l.b16 %v1223
        %v1266 = vunpack.c.h.b16 %v1223
        %v1267 = vunpack.c.l.b16 %v1224
        %v1268 = vunpack.c.h.b16 %v1224
        %v1269 = vunpack.c.l.b16 %v1225
        %v1270 = vunpack.c.h.b16 %v1225
        %v1271 = vunpack.c.l.b16 %v1226
        %v1272 = vunpack.c.h.b16 %v1226
        %v1273 = vunpack.c.l.b16 %v1227
        %v1274 = vunpack.c.h.b16 %v1227
        %v1275 = vunpack.c.l.b16 %v1228
        %v1276 = vunpack.c.h.b16 %v1228
        %v1277 = vunpack.c.l.b16 %v1229
        %v1278 = vunpack.c.h.b16 %v1229
        %v1279 = vpack.c.b16 %v1249, %v1247
        %v1280 = vpack.c.b16 %v1250, %v1248
        %v1281 = vpack.c.b16 %v1253, %v1251
        %v1282 = vpack.c.b16 %v1254, %v1252
        %v1283 = vpack.c.b16 %v1257, %v1255
        %v1284 = vpack.c.b16 %v1258, %v1256
        %v1285 = vpack.c.b16 %v1261, %v1259
        %v1286 = vpack.c.b16 %v1262, %v1260
        %v1287 = vpack.c.b16 %v1265, %v1263
        %v1288 = vpack.c.b16 %v1266, %v1264
        %v1289 = vpack.c.b16 %v1269, %v1267
        %v1290 = vpack.c.b16 %v1270, %v1268
        %v1291 = vpack.c.b16 %v1273, %v1271
        %v1292 = vpack.c.b16 %v1274, %v1272
        %v1293 = vpack.c.b16 %v1277, %v1275
        %v1294 = vpack.c.b16 %v1278, %v1276
        %1311 = vmatprep.subr.bf16.mxu0 %v1280
        %1312 = vmatpush1.bf16.msra.mxu0 %v1279
        %1313 = vmatprep.subr.bf16.mxu0 %v1282
        %1314 = vmatpush1.bf16.msra.mxu0 %v1281
        %1315 = vmatprep.subr.bf16.mxu0 %v1284
        %1316 = vmatpush1.bf16.msra.mxu0 %v1283
        %1317 = vmatprep.subr.bf16.mxu0 %v1286
        %1318 = vmatpush1.bf16.msra.mxu0 %v1285
        %1319 = vmatprep.subr.bf16.mxu0 %v1288
        %1320 = vmatpush1.bf16.msra.mxu0 %v1287
        %1321 = vmatprep.subr.bf16.mxu0 %v1290
        %1322 = vmatpush1.bf16.msra.mxu0 %v1289
        %1323 = vmatprep.subr.bf16.mxu0 %v1292
        %1324 = vmatpush1.bf16.msra.mxu0 %v1291
        %1325 = vmatprep.subr.bf16.mxu0 %v1294
        %1326 = vmatpush1.bf16.msra.mxu0 %v1293
        %1327 = vmatprep.subr.bf16.mxu0 0
        %1328 = vmatpush1.bf16.msra.mxu0 0
        %1329 = vmatprep.subr.bf16.mxu0 0
        %1330 = vmatpush1.bf16.msra.mxu0 0
        %1331 = vmatprep.subr.bf16.mxu0 0
        %1332 = vmatpush1.bf16.msra.mxu0 0
        %1333 = vmatprep.subr.bf16.mxu0 0
        %1334 = vmatpush1.bf16.msra.mxu0 0
        %1335 = vmatprep.subr.bf16.mxu0 0
        %1336 = vmatpush1.bf16.msra.mxu0 0
        %1337 = vmatprep.subr.bf16.mxu0 0
        %1338 = vmatpush1.bf16.msra.mxu0 0
        %1339 = vmatprep.subr.bf16.mxu0 0
        %1340 = vmatpush1.bf16.msra.mxu0 0
        %1341 = vmatprep.subr.bf16.mxu0 0
        %1342 = vmatpush1.bf16.msra.mxu0 0
        %1343 = vmatprep.mubr.bf16.mxu0 0
        %1344 = vmatmul.mubr.bf16.gmra.mrb[0].mxu0 %v1230
        %v1345 = vpop.f32.mrb[0].mxu0
        %v1346 = vadd.f32 0.0, %v1345
        %v1347 = vpop.f32.mrb[0].mxu0
        %v1348 = vadd.f32 0.0, %v1347
        %v1349 = vpop.f32.mrb[0].mxu0
        %v1350 = vpop.f32.mrb[0].mxu0
        %1351 = vdwg.mxu0
        %v1352 = vadd.f32 %v1211, %v1346
        %v1353 = vadd.f32 %v1212, %v1348
        %v1354 = vld [vmem:[#allocation3 + $0x2] sm:$0xf]
        %v1355 = vld [vmem:[#allocation13 + $0x100] sm:$0xff]
        %v1356 = vld [vmem:[#allocation13 + $0x108] sm:$0xff]
        %v1357 = vld [vmem:[#allocation13 + $0x110] sm:$0xff]
        %v1358 = vld [vmem:[#allocation13 + $0x118] sm:$0xff]
        %v1359 = vld [vmem:[#allocation13 + $0x120] sm:$0xff]
        %v1360 = vld [vmem:[#allocation13 + $0x128] sm:$0xff]
        %v1361 = vld [vmem:[#allocation13 + $0x130] sm:$0xff]
        %v1362 = vld [vmem:[#allocation13 + $0x138] sm:$0xff]
        %v1363 = vld [vmem:[#allocation13 + $0x140] sm:$0xff]
        %v1364 = vld [vmem:[#allocation13 + $0x148] sm:$0xff]
        %v1365 = vld [vmem:[#allocation13 + $0x150] sm:$0xff]
        %v1366 = vld [vmem:[#allocation13 + $0x158] sm:$0xff]
        %v1367 = vld [vmem:[#allocation13 + $0x160] sm:$0xff]
        %v1368 = vld [vmem:[#allocation13 + $0x168] sm:$0xff]
        %v1369 = vld [vmem:[#allocation13 + $0x170] sm:$0xff]
        %v1370 = vld [vmem:[#allocation13 + $0x178] sm:$0xff]
        %v1371 = vpack.c.bf16 %v1354, %v1354
        %v1388 = vunpack.c.l.b16 %v1355
        %v1389 = vunpack.c.h.b16 %v1355
        %v1390 = vunpack.c.l.b16 %v1356
        %v1391 = vunpack.c.h.b16 %v1356
        %v1392 = vunpack.c.l.b16 %v1357
        %v1393 = vunpack.c.h.b16 %v1357
        %v1394 = vunpack.c.l.b16 %v1358
        %v1395 = vunpack.c.h.b16 %v1358
        %v1396 = vunpack.c.l.b16 %v1359
        %v1397 = vunpack.c.h.b16 %v1359
        %v1398 = vunpack.c.l.b16 %v1360
        %v1399 = vunpack.c.h.b16 %v1360
        %v1400 = vunpack.c.l.b16 %v1361
        %v1401 = vunpack.c.h.b16 %v1361
        %v1402 = vunpack.c.l.b16 %v1362
        %v1403 = vunpack.c.h.b16 %v1362
        %v1404 = vunpack.c.l.b16 %v1363
        %v1405 = vunpack.c.h.b16 %v1363
        %v1406 = vunpack.c.l.b16 %v1364
        %v1407 = vunpack.c.h.b16 %v1364
        %v1408 = vunpack.c.l.b16 %v1365
        %v1409 = vunpack.c.h.b16 %v1365
        %v1410 = vunpack.c.l.b16 %v1366
        %v1411 = vunpack.c.h.b16 %v1366
        %v1412 = vunpack.c.l.b16 %v1367
        %v1413 = vunpack.c.h.b16 %v1367
        %v1414 = vunpack.c.l.b16 %v1368
        %v1415 = vunpack.c.h.b16 %v1368
        %v1416 = vunpack.c.l.b16 %v1369
        %v1417 = vunpack.c.h.b16 %v1369
        %v1418 = vunpack.c.l.b16 %v1370
        %v1419 = vunpack.c.h.b16 %v1370
        %v1420 = vpack.c.b16 %v1390, %v1388
        %v1421 = vpack.c.b16 %v1391, %v1389
        %v1422 = vpack.c.b16 %v1394, %v1392
        %v1423 = vpack.c.b16 %v1395, %v1393
        %v1424 = vpack.c.b16 %v1398, %v1396
        %v1425 = vpack.c.b16 %v1399, %v1397
        %v1426 = vpack.c.b16 %v1402, %v1400
        %v1427 = vpack.c.b16 %v1403, %v1401
        %v1428 = vpack.c.b16 %v1406, %v1404
        %v1429 = vpack.c.b16 %v1407, %v1405
        %v1430 = vpack.c.b16 %v1410, %v1408
        %v1431 = vpack.c.b16 %v1411, %v1409
        %v1432 = vpack.c.b16 %v1414, %v1412
        %v1433 = vpack.c.b16 %v1415, %v1413
        %v1434 = vpack.c.b16 %v1418, %v1416
        %v1435 = vpack.c.b16 %v1419, %v1417
        %1452 = vmatprep.subr.bf16.mxu0 %v1421
        %1453 = vmatpush1.bf16.msra.mxu0 %v1420
        %1454 = vmatprep.subr.bf16.mxu0 %v1423
        %1455 = vmatpush1.bf16.msra.mxu0 %v1422
        %1456 = vmatprep.subr.bf16.mxu0 %v1425
        %1457 = vmatpush1.bf16.msra.mxu0 %v1424
        %1458 = vmatprep.subr.bf16.mxu0 %v1427
        %1459 = vmatpush1.bf16.msra.mxu0 %v1426
        %1460 = vmatprep.subr.bf16.mxu0 %v1429
        %1461 = vmatpush1.bf16.msra.mxu0 %v1428
        %1462 = vmatprep.subr.bf16.mxu0 %v1431
        %1463 = vmatpush1.bf16.msra.mxu0 %v1430
        %1464 = vmatprep.subr.bf16.mxu0 %v1433
        %1465 = vmatpush1.bf16.msra.mxu0 %v1432
        %1466 = vmatprep.subr.bf16.mxu0 %v1435
        %1467 = vmatpush1.bf16.msra.mxu0 %v1434
        %1468 = vmatprep.subr.bf16.mxu0 0
        %1469 = vmatpush1.bf16.msra.mxu0 0
        %1470 = vmatprep.subr.bf16.mxu0 0
        %1471 = vmatpush1.bf16.msra.mxu0 0
        %1472 = vmatprep.subr.bf16.mxu0 0
        %1473 = vmatpush1.bf16.msra.mxu0 0
        %1474 = vmatprep.subr.bf16.mxu0 0
        %1475 = vmatpush1.bf16.msra.mxu0 0
        %1476 = vmatprep.subr.bf16.mxu0 0
        %1477 = vmatpush1.bf16.msra.mxu0 0
        %1478 = vmatprep.subr.bf16.mxu0 0
        %1479 = vmatpush1.bf16.msra.mxu0 0
        %1480 = vmatprep.subr.bf16.mxu0 0
        %1481 = vmatpush1.bf16.msra.mxu0 0
        %1482 = vmatprep.subr.bf16.mxu0 0
        %1483 = vmatpush1.bf16.msra.mxu0 0
        %1484 = vmatprep.mubr.bf16.mxu0 0
        %1485 = vmatmul.mubr.bf16.gmra.mrb[0].mxu0 %v1371
        %v1486 = vpop.f32.mrb[0].mxu0
        %v1487 = vadd.f32 0.0, %v1486
        %v1488 = vpop.f32.mrb[0].mxu0
        %v1489 = vadd.f32 0.0, %v1488
        %v1490 = vpop.f32.mrb[0].mxu0
        %v1491 = vpop.f32.mrb[0].mxu0
        %1492 = vdwg.mxu0
        %v1493 = vadd.f32 %v1352, %v1487
        %v1494 = vadd.f32 %v1353, %v1489
        %v1495 = vld [vmem:[#allocation3 + $0x3] sm:$0xf]
        %v1496 = vld [vmem:[#allocation13 + $0x180] sm:$0xff]
        %v1497 = vld [vmem:[#allocation13 + $0x188] sm:$0xff]
        %v1498 = vld [vmem:[#allocation13 + $0x190] sm:$0xff]
        %v1499 = vld [vmem:[#allocation13 + $0x198] sm:$0xff]
        %v1500 = vld [vmem:[#allocation13 + $0x1a0] sm:$0xff]
        %v1501 = vld [vmem:[#allocation13 + $0x1a8] sm:$0xff]
        %v1502 = vld [vmem:[#allocation13 + $0x1b0] sm:$0xff]
        %v1503 = vld [vmem:[#allocation13 + $0x1b8] sm:$0xff]
        %v1504 = vld [vmem:[#allocation13 + $0x1c0] sm:$0xff]
        %v1505 = vld [vmem:[#allocation13 + $0x1c8] sm:$0xff]
        %v1506 = vld [vmem:[#allocation13 + $0x1d0] sm:$0xff]
        %v1507 = vld [vmem:[#allocation13 + $0x1d8] sm:$0xff]
        %v1508 = vld [vmem:[#allocation13 + $0x1e0] sm:$0xff]
        %v1509 = vld [vmem:[#allocation13 + $0x1e8] sm:$0xff]
        %v1510 = vld [vmem:[#allocation13 + $0x1f0] sm:$0xff]
        %v1511 = vld [vmem:[#allocation13 + $0x1f8] sm:$0xff]
        %v1512 = vpack.c.bf16 %v1495, %v1495
        %v1529 = vunpack.c.l.b16 %v1496
        %v1530 = vunpack.c.h.b16 %v1496
        %v1531 = vunpack.c.l.b16 %v1497
        %v1532 = vunpack.c.h.b16 %v1497
        %v1533 = vunpack.c.l.b16 %v1498
        %v1534 = vunpack.c.h.b16 %v1498
        %v1535 = vunpack.c.l.b16 %v1499
        %v1536 = vunpack.c.h.b16 %v1499
        %v1537 = vunpack.c.l.b16 %v1500
        %v1538 = vunpack.c.h.b16 %v1500
        %v1539 = vunpack.c.l.b16 %v1501
        %v1540 = vunpack.c.h.b16 %v1501
        %v1541 = vunpack.c.l.b16 %v1502
        %v1542 = vunpack.c.h.b16 %v1502
        %v1543 = vunpack.c.l.b16 %v1503
        %v1544 = vunpack.c.h.b16 %v1503
        %v1545 = vunpack.c.l.b16 %v1504
        %v1546 = vunpack.c.h.b16 %v1504
        %v1547 = vunpack.c.l.b16 %v1505
        %v1548 = vunpack.c.h.b16 %v1505
        %v1549 = vunpack.c.l.b16 %v1506
        %v1550 = vunpack.c.h.b16 %v1506
        %v1551 = vunpack.c.l.b16 %v1507
        %v1552 = vunpack.c.h.b16 %v1507
        %v1553 = vunpack.c.l.b16 %v1508
        %v1554 = vunpack.c.h.b16 %v1508
        %v1555 = vunpack.c.l.b16 %v1509
        %v1556 = vunpack.c.h.b16 %v1509
        %v1557 = vunpack.c.l.b16 %v1510
        %v1558 = vunpack.c.h.b16 %v1510
        %v1559 = vunpack.c.l.b16 %v1511
        %v1560 = vunpack.c.h.b16 %v1511
        %v1561 = vpack.c.b16 %v1531, %v1529
        %v1562 = vpack.c.b16 %v1532, %v1530
        %v1563 = vpack.c.b16 %v1535, %v1533
        %v1564 = vpack.c.b16 %v1536, %v1534
        %v1565 = vpack.c.b16 %v1539, %v1537
        %v1566 = vpack.c.b16 %v1540, %v1538
        %v1567 = vpack.c.b16 %v1543, %v1541
        %v1568 = vpack.c.b16 %v1544, %v1542
        %v1569 = vpack.c.b16 %v1547, %v1545
        %v1570 = vpack.c.b16 %v1548, %v1546
        %v1571 = vpack.c.b16 %v1551, %v1549
        %v1572 = vpack.c.b16 %v1552, %v1550
        %v1573 = vpack.c.b16 %v1555, %v1553
        %v1574 = vpack.c.b16 %v1556, %v1554
        %v1575 = vpack.c.b16 %v1559, %v1557
        %v1576 = vpack.c.b16 %v1560, %v1558
        %1593 = vmatprep.subr.bf16.mxu0 %v1562
        %1594 = vmatpush1.bf16.msra.mxu0 %v1561
        %1595 = vmatprep.subr.bf16.mxu0 %v1564
        %1596 = vmatpush1.bf16.msra.mxu0 %v1563
        %1597 = vmatprep.subr.bf16.mxu0 %v1566
        %1598 = vmatpush1.bf16.msra.mxu0 %v1565
        %1599 = vmatprep.subr.bf16.mxu0 %v1568
        %1600 = vmatpush1.bf16.msra.mxu0 %v1567
        %1601 = vmatprep.subr.bf16.mxu0 %v1570
        %1602 = vmatpush1.bf16.msra.mxu0 %v1569
        %1603 = vmatprep.subr.bf16.mxu0 %v1572
        %1604 = vmatpush1.bf16.msra.mxu0 %v1571
        %1605 = vmatprep.subr.bf16.mxu0 %v1574
        %1606 = vmatpush1.bf16.msra.mxu0 %v1573
        %1607 = vmatprep.subr.bf16.mxu0 %v1576
        %1608 = vmatpush1.bf16.msra.mxu0 %v1575
        %1609 = vmatprep.subr.bf16.mxu0 0
        %1610 = vmatpush1.bf16.msra.mxu0 0
        %1611 = vmatprep.subr.bf16.mxu0 0
        %1612 = vmatpush1.bf16.msra.mxu0 0
        %1613 = vmatprep.subr.bf16.mxu0 0
        %1614 = vmatpush1.bf16.msra.mxu0 0
        %1615 = vmatprep.subr.bf16.mxu0 0
        %1616 = vmatpush1.bf16.msra.mxu0 0
        %1617 = vmatprep.subr.bf16.mxu0 0
        %1618 = vmatpush1.bf16.msra.mxu0 0
        %1619 = vmatprep.subr.bf16.mxu0 0
        %1620 = vmatpush1.bf16.msra.mxu0 0
        %1621 = vmatprep.subr.bf16.mxu0 0
        %1622 = vmatpush1.bf16.msra.mxu0 0
        %1623 = vmatprep.subr.bf16.mxu0 0
        %1624 = vmatpush1.bf16.msra.mxu0 0
        %1625 = vmatprep.mubr.bf16.mxu0 0
        %1626 = vmatmul.mubr.bf16.gmra.mrb[0].mxu0 %v1512
        %v1627 = vpop.f32.mrb[0].mxu0
        %v1628 = vadd.f32 0.0, %v1627
        %v1629 = vpop.f32.mrb[0].mxu0
        %v1630 = vadd.f32 0.0, %v1629
        %v1631 = vpop.f32.mrb[0].mxu0
        %v1632 = vpop.f32.mrb[0].mxu0
        %1633 = vdwg.mxu0
        %v1634 = vadd.f32 %v1493, %v1628
        %v1635 = vadd.f32 %v1494, %v1630
        %v1636 = vld [vmem:[#allocation3 + $0x4] sm:$0xf]
        %v1637 = vld [vmem:[#allocation13 + $0x200] sm:$0xff]
        %v1638 = vld [vmem:[#allocation13 + $0x208] sm:$0xff]
        %v1639 = vld [vmem:[#allocation13 + $0x210] sm:$0xff]
        %v1640 = vld [vmem:[#allocation13 + $0x218] sm:$0xff]
        %v1641 = vld [vmem:[#allocation13 + $0x220] sm:$0xff]
        %v1642 = vld [vmem:[#allocation13 + $0x228] sm:$0xff]
        %v1643 = vld [vmem:[#allocation13 + $0x230] sm:$0xff]
        %v1644 = vld [vmem:[#allocation13 + $0x238] sm:$0xff]
        %v1645 = vld [vmem:[#allocation13 + $0x240] sm:$0xff]
        %v1646 = vld [vmem:[#allocation13 + $0x248] sm:$0xff]
        %v1647 = vld [vmem:[#allocation13 + $0x250] sm:$0xff]
        %v1648 = vld [vmem:[#allocation13 + $0x258] sm:$0xff]
        %v1649 = vld [vmem:[#allocation13 + $0x260] sm:$0xff]
        %v1650 = vld [vmem:[#allocation13 + $0x268] sm:$0xff]
        %v1651 = vld [vmem:[#allocation13 + $0x270] sm:$0xff]
        %v1652 = vld [vmem:[#allocation13 + $0x278] sm:$0xff]
        %v1653 = vpack.c.bf16 %v1636, %v1636
        %v1670 = vunpack.c.l.b16 %v1637
        %v1671 = vunpack.c.h.b16 %v1637
        %v1672 = vunpack.c.l.b16 %v1638
        %v1673 = vunpack.c.h.b16 %v1638
        %v1674 = vunpack.c.l.b16 %v1639
        %v1675 = vunpack.c.h.b16 %v1639
        %v1676 = vunpack.c.l.b16 %v1640
        %v1677 = vunpack.c.h.b16 %v1640
        %v1678 = vunpack.c.l.b16 %v1641
        %v1679 = vunpack.c.h.b16 %v1641
        %v1680 = vunpack.c.l.b16 %v1642
        %v1681 = vunpack.c.h.b16 %v1642
        %v1682 = vunpack.c.l.b16 %v1643
        %v1683 = vunpack.c.h.b16 %v1643
        %v1684 = vunpack.c.l.b16 %v1644
        %v1685 = vunpack.c.h.b16 %v1644
        %v1686 = vunpack.c.l.b16 %v1645
        %v1687 = vunpack.c.h.b16 %v1645
        %v1688 = vunpack.c.l.b16 %v1646
        %v1689 = vunpack.c.h.b16 %v1646
        %v1690 = vunpack.c.l.b16 %v1647
        %v1691 = vunpack.c.h.b16 %v1647
        %v1692 = vunpack.c.l.b16 %v1648
        %v1693 = vunpack.c.h.b16 %v1648
        %v1694 = vunpack.c.l.b16 %v1649
        %v1695 = vunpack.c.h.b16 %v1649
        %v1696 = vunpack.c.l.b16 %v1650
        %v1697 = vunpack.c.h.b16 %v1650
        %v1698 = vunpack.c.l.b16 %v1651
        %v1699 = vunpack.c.h.b16 %v1651
        %v1700 = vunpack.c.l.b16 %v1652
        %v1701 = vunpack.c.h.b16 %v1652
        %v1702 = vpack.c.b16 %v1672, %v1670
        %v1703 = vpack.c.b16 %v1673, %v1671
        %v1704 = vpack.c.b16 %v1676, %v1674
        %v1705 = vpack.c.b16 %v1677, %v1675
        %v1706 = vpack.c.b16 %v1680, %v1678
        %v1707 = vpack.c.b16 %v1681, %v1679
        %v1708 = vpack.c.b16 %v1684, %v1682
        %v1709 = vpack.c.b16 %v1685, %v1683
        %v1710 = vpack.c.b16 %v1688, %v1686
        %v1711 = vpack.c.b16 %v1689, %v1687
        %v1712 = vpack.c.b16 %v1692, %v1690
        %v1713 = vpack.c.b16 %v1693, %v1691
        %v1714 = vpack.c.b16 %v1696, %v1694
        %v1715 = vpack.c.b16 %v1697, %v1695
        %v1716 = vpack.c.b16 %v1700, %v1698
        %v1717 = vpack.c.b16 %v1701, %v1699
        %1734 = vmatprep.subr.bf16.mxu0 %v1703
        %1735 = vmatpush1.bf16.msra.mxu0 %v1702
        %1736 = vmatprep.subr.bf16.mxu0 %v1705
        %1737 = vmatpush1.bf16.msra.mxu0 %v1704
        %1738 = vmatprep.subr.bf16.mxu0 %v1707
        %1739 = vmatpush1.bf16.msra.mxu0 %v1706
        %1740 = vmatprep.subr.bf16.mxu0 %v1709
        %1741 = vmatpush1.bf16.msra.mxu0 %v1708
        %1742 = vmatprep.subr.bf16.mxu0 %v1711
        %1743 = vmatpush1.bf16.msra.mxu0 %v1710
        %1744 = vmatprep.subr.bf16.mxu0 %v1713
        %1745 = vmatpush1.bf16.msra.mxu0 %v1712
        %1746 = vmatprep.subr.bf16.mxu0 %v1715
        %1747 = vmatpush1.bf16.msra.mxu0 %v1714
        %1748 = vmatprep.subr.bf16.mxu0 %v1717
        %1749 = vmatpush1.bf16.msra.mxu0 %v1716
        %1750 = vmatprep.subr.bf16.mxu0 0
        %1751 = vmatpush1.bf16.msra.mxu0 0
        %1752 = vmatprep.subr.bf16.mxu0 0
        %1753 = vmatpush1.bf16.msra.mxu0 0
        %1754 = vmatprep.subr.bf16.mxu0 0
        %1755 = vmatpush1.bf16.msra.mxu0 0
        %1756 = vmatprep.subr.bf16.mxu0 0
        %1757 = vmatpush1.bf16.msra.mxu0 0
        %1758 = vmatprep.subr.bf16.mxu0 0
        %1759 = vmatpush1.bf16.msra.mxu0 0
        %1760 = vmatprep.subr.bf16.mxu0 0
        %1761 = vmatpush1.bf16.msra.mxu0 0
        %1762 = vmatprep.subr.bf16.mxu0 0
        %1763 = vmatpush1.bf16.msra.mxu0 0
        %1764 = vmatprep.subr.bf16.mxu0 0
        %1765 = vmatpush1.bf16.msra.mxu0 0
        %1766 = vmatprep.mubr.bf16.mxu0 0
        %1767 = vmatmul.mubr.bf16.gmra.mrb[0].mxu0 %v1653
        %v1768 = vpop.f32.mrb[0].mxu0
        %v1769 = vadd.f32 0.0, %v1768
        %v1770 = vpop.f32.mrb[0].mxu0
        %v1771 = vadd.f32 0.0, %v1770
        %v1772 = vpop.f32.mrb[0].mxu0
        %v1773 = vpop.f32.mrb[0].mxu0
        %1774 = vdwg.mxu0
        %v1775 = vadd.f32 %v1634, %v1769
        %v1776 = vadd.f32 %v1635, %v1771
        %v1777 = vmax.f32 %v1775, 0.0
        %v1778 = vmax.f32 %v1776, 0.0
        %v1779 = vmax.f32 %v521, 0.0
        %v1780 = vlaneseq
        %vm1781 = vcmp.ge.s32.totalorder %v1780, 0
        %vm1782 = vcmp.lt.s32.totalorder %v1780, 256
        %vm1783 = vmand %vm1781, %vm1782
        %1784 = vst.msk [vmem:[#allocation4] sm:$0x3] %vm1783, %v1779
        %v1787 = vcombine.low %v1777, %v1778
        %v1789 = vunpack.c.l.s4 1966171168
        %v1790 = vunpack.c.0.s8 %v1789
        %v1791 = vlaneseq
        %v1792 = vshrl.u32 %v1791, 7
        %v1793 = vsub.s32 %v1790, %v1792
        %v1794 = vrot.slane %v1787, %v1793
        %v1796 = vunpack.c.l.s4 1966171168
        %v1797 = vunpack.c.0.s8 %v1796
        %v1798 = vlaneseq
        %v1799 = vshrl.u32 %v1798, 7
        %v1800 = vsub.s32 %v1797, %v1799
        %v1801 = vrot.slane %v1794, %v1800
        %1803 = vst.msk [vmem:[#allocation4 + $0x2] sm:$0x3] %vm1783, %v1801
        %1804 = vst.msk [vmem:[#allocation4 + $0x4] sm:$0x3] %vm1783, %v1779
        %1805 = vst.msk [vmem:[#allocation4 + $0x6] sm:$0x3] %vm1783, %v1779
        %v1806 = vcombine.high %v1794, %v1794
        %v1808 = vunpack.c.l.s4 1966171168
        %v1809 = vunpack.c.0.s8 %v1808
        %v1810 = vlaneseq
        %v1811 = vshrl.u32 %v1810, 7
        %v1812 = vsub.s32 %v1809, %v1811
        %v1813 = vrot.slane %v1806, %v1812
        %1815 = vst.msk [vmem:[#allocation4 + $0x8] sm:$0x3] %vm1783, %v1813
        %1816 = vst.msk [vmem:[#allocation4 + $0xa] sm:$0x3] %vm1783, %v1779
        %1817 = vst.msk [vmem:[#allocation4 + $0xc] sm:$0x3] %vm1783, %v1779
        %v1818 = vcombine.high %v1801, %v1801
        %1820 = vst.msk [vmem:[#allocation4 + $0xe] sm:$0x3] %vm1783, %v1818
        %1821 = vst.msk [vmem:[#allocation4 + $0x10] sm:$0x3] %vm1783, %v1779
        %1822 = vst.msk [vmem:[#allocation4 + $0x12] sm:$0x3] %vm1783, %v1779
        %v1823 = vcombine.high %v1813, %v1813
        %1825 = vst.msk [vmem:[#allocation4 + $0x14] sm:$0x3] %vm1783, %v1823
        %1826 = vst.msk [vmem:[#allocation4 + $0x16] sm:$0x3] %vm1783, %v1779
        %v1827 = vld [vmem:[#allocation4] sm:$0xff]
        %v1828 = vld [vmem:[#allocation4 + $0x8] sm:$0xff]
        %v1829 = vld [vmem:[#allocation4 + $0x10] sm:$0xff]
        %v1830 = vld [vmem:[#allocation16] sm:$0xff]
        %v1831 = vld [vmem:[#allocation16 + $0x8] sm:$0xff]
        %v1832 = vld [vmem:[#allocation16 + $0x10] sm:$0xff]
        %v1833 = vld [vmem:[#allocation16 + $0x18] sm:$0xff]
        %v1834 = vld [vmem:[#allocation16 + $0x20] sm:$0xff]
        %v1835 = vld [vmem:[#allocation16 + $0x28] sm:$0xff]
        %v1836 = vld [vmem:[#allocation16 + $0x30] sm:$0xff]
        %v1837 = vld [vmem:[#allocation16 + $0x38] sm:$0xff]
        %v1838 = vld [vmem:[#allocation16 + $0x40] sm:$0xff]
        %v1839 = vld [vmem:[#allocation16 + $0x48] sm:$0xff]
        %v1840 = vld [vmem:[#allocation16 + $0x50] sm:$0xff]
        %v1841 = vld [vmem:[#allocation16 + $0x58] sm:$0xff]
        %v1842 = vld [vmem:[#allocation16 + $0x60] sm:$0xff]
        %v1843 = vld [vmem:[#allocation16 + $0x68] sm:$0xff]
        %v1844 = vld [vmem:[#allocation16 + $0x70] sm:$0xff]
        %v1845 = vld [vmem:[#allocation16 + $0x78] sm:$0xff]
        %v1846 = vld [vmem:[#allocation16 + $0x80] sm:$0xff]
        %v1847 = vld [vmem:[#allocation16 + $0x88] sm:$0xff]
        %v1848 = vld [vmem:[#allocation16 + $0x90] sm:$0xff]
        %v1849 = vld [vmem:[#allocation16 + $0x98] sm:$0xff]
        %v1850 = vld [vmem:[#allocation16 + $0xa0] sm:$0xff]
        %v1851 = vld [vmem:[#allocation16 + $0xa8] sm:$0xff]
        %v1852 = vld [vmem:[#allocation16 + $0xb0] sm:$0xff]
        %v1853 = vld [vmem:[#allocation16 + $0xb8] sm:$0xff]
        %v1854 = vld [vmem:[#allocation16 + $0xc0] sm:$0xff]
        %v1855 = vld [vmem:[#allocation16 + $0xc8] sm:$0xff]
        %v1856 = vld [vmem:[#allocation16 + $0xd0] sm:$0xff]
        %v1857 = vld [vmem:[#allocation16 + $0xd8] sm:$0xff]
        %v1858 = vld [vmem:[#allocation16 + $0xe0] sm:$0xff]
        %v1859 = vld [vmem:[#allocation16 + $0xe8] sm:$0xff]
        %v1860 = vld [vmem:[#allocation16 + $0xf0] sm:$0xff]
        %v1861 = vld [vmem:[#allocation16 + $0xf8] sm:$0xff]
        %v1862 = vld [vmem:[#allocation16 + $0x100] sm:$0xff]
        %v1863 = vld [vmem:[#allocation16 + $0x108] sm:$0xff]
        %v1864 = vld [vmem:[#allocation16 + $0x110] sm:$0xff]
        %v1865 = vld [vmem:[#allocation16 + $0x118] sm:$0xff]
        %v1866 = vld [vmem:[#allocation16 + $0x120] sm:$0xff]
        %v1867 = vld [vmem:[#allocation16 + $0x128] sm:$0xff]
        %v1868 = vld [vmem:[#allocation16 + $0x130] sm:$0xff]
        %v1869 = vld [vmem:[#allocation16 + $0x138] sm:$0xff]
        %v1870 = vld [vmem:[#allocation16 + $0x140] sm:$0xff]
        %v1871 = vld [vmem:[#allocation16 + $0x148] sm:$0xff]
        %v1872 = vld [vmem:[#allocation16 + $0x150] sm:$0xff]
        %v1873 = vld [vmem:[#allocation16 + $0x158] sm:$0xff]
        %v1874 = vld [vmem:[#allocation16 + $0x160] sm:$0xff]
        %v1875 = vld [vmem:[#allocation16 + $0x168] sm:$0xff]
        %v1876 = vld [vmem:[#allocation16 + $0x170] sm:$0xff]
        %v1877 = vld [vmem:[#allocation16 + $0x178] sm:$0xff]
        %v1878 = vld [vmem:[#allocation16 + $0x180] sm:$0xff]
        %v1879 = vld [vmem:[#allocation16 + $0x188] sm:$0xff]
        %v1880 = vld [vmem:[#allocation16 + $0x190] sm:$0xff]
        %v1881 = vld [vmem:[#allocation16 + $0x198] sm:$0xff]
        %v1882 = vld [vmem:[#allocation16 + $0x1a0] sm:$0xff]
        %v1883 = vld [vmem:[#allocation16 + $0x1a8] sm:$0xff]
        %v1884 = vld [vmem:[#allocation16 + $0x1b0] sm:$0xff]
        %v1885 = vld [vmem:[#allocation16 + $0x1b8] sm:$0xff]
        %v1886 = vld [vmem:[#allocation16 + $0x1c0] sm:$0xff]
        %v1887 = vld [vmem:[#allocation16 + $0x1c8] sm:$0xff]
        %v1888 = vld [vmem:[#allocation16 + $0x1d0] sm:$0xff]
        %v1889 = vld [vmem:[#allocation16 + $0x1d8] sm:$0xff]
        %v1890 = vld [vmem:[#allocation16 + $0x1e0] sm:$0xff]
        %v1891 = vld [vmem:[#allocation16 + $0x1e8] sm:$0xff]
        %v1892 = vld [vmem:[#allocation16 + $0x1f0] sm:$0xff]
        %v1893 = vld [vmem:[#allocation16 + $0x1f8] sm:$0xff]
        %v1894 = vld [vmem:[#allocation16 + $0x200] sm:$0xff]
        %v1895 = vld [vmem:[#allocation16 + $0x208] sm:$0xff]
        %v1896 = vld [vmem:[#allocation16 + $0x210] sm:$0xff]
        %v1897 = vld [vmem:[#allocation16 + $0x218] sm:$0xff]
        %v1898 = vld [vmem:[#allocation16 + $0x220] sm:$0xff]
        %v1899 = vld [vmem:[#allocation16 + $0x228] sm:$0xff]
        %v1900 = vld [vmem:[#allocation16 + $0x230] sm:$0xff]
        %v1901 = vld [vmem:[#allocation16 + $0x238] sm:$0xff]
        %v1902 = vld [vmem:[#allocation16 + $0x240] sm:$0xff]
        %v1903 = vld [vmem:[#allocation16 + $0x248] sm:$0xff]
        %v1904 = vld [vmem:[#allocation16 + $0x250] sm:$0xff]
        %v1905 = vld [vmem:[#allocation16 + $0x258] sm:$0xff]
        %v1906 = vld [vmem:[#allocation16 + $0x260] sm:$0xff]
        %v1907 = vld [vmem:[#allocation16 + $0x268] sm:$0xff]
        %v1908 = vld [vmem:[#allocation16 + $0x270] sm:$0xff]
        %v1909 = vld [vmem:[#allocation16 + $0x278] sm:$0xff]
        %v1910 = vld [vmem:[#allocation16 + $0x280] sm:$0xff]
        %v1911 = vld [vmem:[#allocation16 + $0x288] sm:$0xff]
        %v1912 = vld [vmem:[#allocation16 + $0x290] sm:$0xff]
        %v1913 = vld [vmem:[#allocation16 + $0x298] sm:$0xff]
        %v1914 = vld [vmem:[#allocation16 + $0x2a0] sm:$0xff]
        %v1915 = vld [vmem:[#allocation16 + $0x2a8] sm:$0xff]
        %v1916 = vld [vmem:[#allocation16 + $0x2b0] sm:$0xff]
        %v1917 = vld [vmem:[#allocation16 + $0x2b8] sm:$0xff]
        %v1918 = vld [vmem:[#allocation16 + $0x2c0] sm:$0xff]
        %v1919 = vld [vmem:[#allocation16 + $0x2c8] sm:$0xff]
        %v1920 = vld [vmem:[#allocation16 + $0x2d0] sm:$0xff]
        %v1921 = vld [vmem:[#allocation16 + $0x2d8] sm:$0xff]
        %v1922 = vld [vmem:[#allocation16 + $0x2e0] sm:$0xff]
        %v1923 = vld [vmem:[#allocation16 + $0x2e8] sm:$0xff]
        %v1924 = vld [vmem:[#allocation16 + $0x2f0] sm:$0xff]
        %v1925 = vld [vmem:[#allocation16 + $0x2f8] sm:$0xff]
        %v1926 = vld [vmem:[#allocation16 + $0x300] sm:$0xff]
        %v1927 = vld [vmem:[#allocation16 + $0x308] sm:$0xff]
        %v1928 = vld [vmem:[#allocation16 + $0x310] sm:$0xff]
        %v1929 = vld [vmem:[#allocation16 + $0x318] sm:$0xff]
        %v1930 = vld [vmem:[#allocation16 + $0x320] sm:$0xff]
        %v1931 = vld [vmem:[#allocation16 + $0x328] sm:$0xff]
        %v1932 = vld [vmem:[#allocation16 + $0x330] sm:$0xff]
        %v1933 = vld [vmem:[#allocation16 + $0x338] sm:$0xff]
        %v1934 = vld [vmem:[#allocation16 + $0x340] sm:$0xff]
        %v1935 = vld [vmem:[#allocation16 + $0x348] sm:$0xff]
        %v1936 = vld [vmem:[#allocation16 + $0x350] sm:$0xff]
        %v1937 = vld [vmem:[#allocation16 + $0x358] sm:$0xff]
        %v1938 = vld [vmem:[#allocation16 + $0x360] sm:$0xff]
        %v1939 = vld [vmem:[#allocation16 + $0x368] sm:$0xff]
        %v1940 = vld [vmem:[#allocation16 + $0x370] sm:$0xff]
        %v1941 = vld [vmem:[#allocation16 + $0x378] sm:$0xff]
        %v1942 = vld [vmem:[#allocation16 + $0x380] sm:$0xff]
        %v1943 = vld [vmem:[#allocation16 + $0x388] sm:$0xff]
        %v1944 = vld [vmem:[#allocation16 + $0x390] sm:$0xff]
        %v1945 = vld [vmem:[#allocation16 + $0x398] sm:$0xff]
        %v1946 = vld [vmem:[#allocation16 + $0x3a0] sm:$0xff]
        %v1947 = vld [vmem:[#allocation16 + $0x3a8] sm:$0xff]
        %v1948 = vld [vmem:[#allocation16 + $0x3b0] sm:$0xff]
        %v1949 = vld [vmem:[#allocation16 + $0x3b8] sm:$0xff]
        %v1950 = vld [vmem:[#allocation16 + $0x3c0] sm:$0xff]
        %v1951 = vld [vmem:[#allocation16 + $0x3c8] sm:$0xff]
        %v1952 = vld [vmem:[#allocation16 + $0x3d0] sm:$0xff]
        %v1953 = vld [vmem:[#allocation16 + $0x3d8] sm:$0xff]
        %v1954 = vld [vmem:[#allocation16 + $0x3e0] sm:$0xff]
        %v1955 = vld [vmem:[#allocation16 + $0x3e8] sm:$0xff]
        %v1956 = vld [vmem:[#allocation16 + $0x3f0] sm:$0xff]
        %v1957 = vld [vmem:[#allocation16 + $0x3f8] sm:$0xff]
        %v1958 = vld [vmem:[#allocation16 + $0x400] sm:$0xff]
        %v1959 = vld [vmem:[#allocation16 + $0x408] sm:$0xff]
        %v1960 = vld [vmem:[#allocation16 + $0x410] sm:$0xff]
        %v1961 = vld [vmem:[#allocation16 + $0x418] sm:$0xff]
        %v1962 = vld [vmem:[#allocation16 + $0x420] sm:$0xff]
        %v1963 = vld [vmem:[#allocation16 + $0x428] sm:$0xff]
        %v1964 = vld [vmem:[#allocation16 + $0x430] sm:$0xff]
        %v1965 = vld [vmem:[#allocation16 + $0x438] sm:$0xff]
        %v1966 = vld [vmem:[#allocation16 + $0x440] sm:$0xff]
        %v1967 = vld [vmem:[#allocation16 + $0x448] sm:$0xff]
        %v1968 = vld [vmem:[#allocation16 + $0x450] sm:$0xff]
        %v1969 = vld [vmem:[#allocation16 + $0x458] sm:$0xff]
        %v1970 = vld [vmem:[#allocation16 + $0x460] sm:$0xff]
        %v1971 = vld [vmem:[#allocation16 + $0x468] sm:$0xff]
        %v1972 = vld [vmem:[#allocation16 + $0x470] sm:$0xff]
        %v1973 = vld [vmem:[#allocation16 + $0x478] sm:$0xff]
        %v1974 = vld [vmem:[#allocation16 + $0x480] sm:$0xff]
        %v1975 = vld [vmem:[#allocation16 + $0x488] sm:$0xff]
        %v1976 = vld [vmem:[#allocation16 + $0x490] sm:$0xff]
        %v1977 = vld [vmem:[#allocation16 + $0x498] sm:$0xff]
        %v1978 = vld [vmem:[#allocation16 + $0x4a0] sm:$0xff]
        %v1979 = vld [vmem:[#allocation16 + $0x4a8] sm:$0xff]
        %v1980 = vld [vmem:[#allocation16 + $0x4b0] sm:$0xff]
        %v1981 = vld [vmem:[#allocation16 + $0x4b8] sm:$0xff]
        %v1982 = vld [vmem:[#allocation16 + $0x4c0] sm:$0xff]
        %v1983 = vld [vmem:[#allocation16 + $0x4c8] sm:$0xff]
        %v1984 = vld [vmem:[#allocation16 + $0x4d0] sm:$0xff]
        %v1985 = vld [vmem:[#allocation16 + $0x4d8] sm:$0xff]
        %v1986 = vld [vmem:[#allocation16 + $0x4e0] sm:$0xff]
        %v1987 = vld [vmem:[#allocation16 + $0x4e8] sm:$0xff]
        %v1988 = vld [vmem:[#allocation16 + $0x4f0] sm:$0xff]
        %v1989 = vld [vmem:[#allocation16 + $0x4f8] sm:$0xff]
        %v1990 = vld [vmem:[#allocation16 + $0x500] sm:$0xff]
        %v1991 = vld [vmem:[#allocation16 + $0x508] sm:$0xff]
        %v1992 = vld [vmem:[#allocation16 + $0x510] sm:$0xff]
        %v1993 = vld [vmem:[#allocation16 + $0x518] sm:$0xff]
        %v1994 = vld [vmem:[#allocation16 + $0x520] sm:$0xff]
        %v1995 = vld [vmem:[#allocation16 + $0x528] sm:$0xff]
        %v1996 = vld [vmem:[#allocation16 + $0x530] sm:$0xff]
        %v1997 = vld [vmem:[#allocation16 + $0x538] sm:$0xff]
        %v1998 = vld [vmem:[#allocation16 + $0x540] sm:$0xff]
        %v1999 = vld [vmem:[#allocation16 + $0x548] sm:$0xff]
        %v2000 = vld [vmem:[#allocation16 + $0x550] sm:$0xff]
        %v2001 = vld [vmem:[#allocation16 + $0x558] sm:$0xff]
        %v2002 = vld [vmem:[#allocation16 + $0x560] sm:$0xff]
        %v2003 = vld [vmem:[#allocation16 + $0x568] sm:$0xff]
        %v2004 = vld [vmem:[#allocation16 + $0x570] sm:$0xff]
        %v2005 = vld [vmem:[#allocation16 + $0x578] sm:$0xff]
        %v2006 = vld [vmem:[#allocation16 + $0x580] sm:$0xff]
        %v2007 = vld [vmem:[#allocation16 + $0x588] sm:$0xff]
        %v2008 = vld [vmem:[#allocation16 + $0x590] sm:$0xff]
        %v2009 = vld [vmem:[#allocation16 + $0x598] sm:$0xff]
        %v2010 = vld [vmem:[#allocation16 + $0x5a0] sm:$0xff]
        %v2011 = vld [vmem:[#allocation16 + $0x5a8] sm:$0xff]
        %v2012 = vld [vmem:[#allocation16 + $0x5b0] sm:$0xff]
        %v2013 = vld [vmem:[#allocation16 + $0x5b8] sm:$0xff]
        %v2014 = vld [vmem:[#allocation16 + $0x5c0] sm:$0xff]
        %v2015 = vld [vmem:[#allocation16 + $0x5c8] sm:$0xff]
        %v2016 = vld [vmem:[#allocation16 + $0x5d0] sm:$0xff]
        %v2017 = vld [vmem:[#allocation16 + $0x5d8] sm:$0xff]
        %v2018 = vld [vmem:[#allocation16 + $0x5e0] sm:$0xff]
        %v2019 = vld [vmem:[#allocation16 + $0x5e8] sm:$0xff]
        %v2020 = vld [vmem:[#allocation16 + $0x5f0] sm:$0xff]
        %v2021 = vld [vmem:[#allocation16 + $0x5f8] sm:$0xff]
        %v2022 = vld [vmem:[#allocation16 + $0x600] sm:$0xff]
        %v2023 = vld [vmem:[#allocation16 + $0x608] sm:$0xff]
        %v2024 = vld [vmem:[#allocation16 + $0x610] sm:$0xff]
        %v2025 = vld [vmem:[#allocation16 + $0x618] sm:$0xff]
        %v2026 = vld [vmem:[#allocation16 + $0x620] sm:$0xff]
        %v2027 = vld [vmem:[#allocation16 + $0x628] sm:$0xff]
        %v2028 = vld [vmem:[#allocation16 + $0x630] sm:$0xff]
        %v2029 = vld [vmem:[#allocation16 + $0x638] sm:$0xff]
        %v2030 = vld [vmem:[#allocation16 + $0x640] sm:$0xff]
        %v2031 = vld [vmem:[#allocation16 + $0x648] sm:$0xff]
        %v2032 = vld [vmem:[#allocation16 + $0x650] sm:$0xff]
        %v2033 = vld [vmem:[#allocation16 + $0x658] sm:$0xff]
        %v2034 = vld [vmem:[#allocation16 + $0x660] sm:$0xff]
        %v2035 = vld [vmem:[#allocation16 + $0x668] sm:$0xff]
        %v2036 = vld [vmem:[#allocation16 + $0x670] sm:$0xff]
        %v2037 = vld [vmem:[#allocation16 + $0x678] sm:$0xff]
        %v2038 = vld [vmem:[#allocation16 + $0x680] sm:$0xff]
        %v2039 = vld [vmem:[#allocation16 + $0x688] sm:$0xff]
        %v2040 = vld [vmem:[#allocation16 + $0x690] sm:$0xff]
        %v2041 = vld [vmem:[#allocation16 + $0x698] sm:$0xff]
        %v2042 = vld [vmem:[#allocation16 + $0x6a0] sm:$0xff]
        %v2043 = vld [vmem:[#allocation16 + $0x6a8] sm:$0xff]
        %v2044 = vld [vmem:[#allocation16 + $0x6b0] sm:$0xff]
        %v2045 = vld [vmem:[#allocation16 + $0x6b8] sm:$0xff]
        %v2046 = vld [vmem:[#allocation16 + $0x6c0] sm:$0xff]
        %v2047 = vld [vmem:[#allocation16 + $0x6c8] sm:$0xff]
        %v2048 = vld [vmem:[#allocation16 + $0x6d0] sm:$0xff]
        %v2049 = vld [vmem:[#allocation16 + $0x6d8] sm:$0xff]
        %v2050 = vld [vmem:[#allocation16 + $0x6e0] sm:$0xff]
        %v2051 = vld [vmem:[#allocation16 + $0x6e8] sm:$0xff]
        %v2052 = vld [vmem:[#allocation16 + $0x6f0] sm:$0xff]
        %v2053 = vld [vmem:[#allocation16 + $0x6f8] sm:$0xff]
        %v2054 = vld [vmem:[#allocation16 + $0x700] sm:$0xff]
        %v2055 = vld [vmem:[#allocation16 + $0x708] sm:$0xff]
        %v2056 = vld [vmem:[#allocation16 + $0x710] sm:$0xff]
        %v2057 = vld [vmem:[#allocation16 + $0x718] sm:$0xff]
        %v2058 = vld [vmem:[#allocation16 + $0x720] sm:$0xff]
        %v2059 = vld [vmem:[#allocation16 + $0x728] sm:$0xff]
        %v2060 = vld [vmem:[#allocation16 + $0x730] sm:$0xff]
        %v2061 = vld [vmem:[#allocation16 + $0x738] sm:$0xff]
        %v2062 = vld [vmem:[#allocation16 + $0x740] sm:$0xff]
        %v2063 = vld [vmem:[#allocation16 + $0x748] sm:$0xff]
        %v2064 = vld [vmem:[#allocation16 + $0x750] sm:$0xff]
        %v2065 = vld [vmem:[#allocation16 + $0x758] sm:$0xff]
        %v2066 = vld [vmem:[#allocation16 + $0x760] sm:$0xff]
        %v2067 = vld [vmem:[#allocation16 + $0x768] sm:$0xff]
        %v2068 = vld [vmem:[#allocation16 + $0x770] sm:$0xff]
        %v2069 = vld [vmem:[#allocation16 + $0x778] sm:$0xff]
        %v2070 = vld [vmem:[#allocation16 + $0x780] sm:$0xff]
        %v2071 = vld [vmem:[#allocation16 + $0x788] sm:$0xff]
        %v2072 = vld [vmem:[#allocation16 + $0x790] sm:$0xff]
        %v2073 = vld [vmem:[#allocation16 + $0x798] sm:$0xff]
        %v2074 = vld [vmem:[#allocation16 + $0x7a0] sm:$0xff]
        %v2075 = vld [vmem:[#allocation16 + $0x7a8] sm:$0xff]
        %v2076 = vld [vmem:[#allocation16 + $0x7b0] sm:$0xff]
        %v2077 = vld [vmem:[#allocation16 + $0x7b8] sm:$0xff]
        %v2078 = vld [vmem:[#allocation16 + $0x7c0] sm:$0xff]
        %v2079 = vld [vmem:[#allocation16 + $0x7c8] sm:$0xff]
        %v2080 = vld [vmem:[#allocation16 + $0x7d0] sm:$0xff]
        %v2081 = vld [vmem:[#allocation16 + $0x7d8] sm:$0xff]
        %v2082 = vld [vmem:[#allocation16 + $0x7e0] sm:$0xff]
        %v2083 = vld [vmem:[#allocation16 + $0x7e8] sm:$0xff]
        %v2084 = vld [vmem:[#allocation16 + $0x7f0] sm:$0xff]
        %v2085 = vld [vmem:[#allocation16 + $0x7f8] sm:$0xff]
        %v2086 = vld [vmem:[#allocation16 + $0x800] sm:$0xff]
        %v2087 = vld [vmem:[#allocation16 + $0x808] sm:$0xff]
        %v2088 = vld [vmem:[#allocation16 + $0x810] sm:$0xff]
        %v2089 = vld [vmem:[#allocation16 + $0x818] sm:$0xff]
        %v2090 = vld [vmem:[#allocation16 + $0x820] sm:$0xff]
        %v2091 = vld [vmem:[#allocation16 + $0x828] sm:$0xff]
        %v2092 = vld [vmem:[#allocation16 + $0x830] sm:$0xff]
        %v2093 = vld [vmem:[#allocation16 + $0x838] sm:$0xff]
        %v2094 = vld [vmem:[#allocation16 + $0x840] sm:$0xff]
        %v2095 = vld [vmem:[#allocation16 + $0x848] sm:$0xff]
        %v2096 = vld [vmem:[#allocation16 + $0x850] sm:$0xff]
        %v2097 = vld [vmem:[#allocation16 + $0x858] sm:$0xff]
        %v2098 = vld [vmem:[#allocation16 + $0x860] sm:$0xff]
        %v2099 = vld [vmem:[#allocation16 + $0x868] sm:$0xff]
        %v2100 = vld [vmem:[#allocation16 + $0x870] sm:$0xff]
        %v2101 = vld [vmem:[#allocation16 + $0x878] sm:$0xff]
        %v2102 = vld [vmem:[#allocation16 + $0x880] sm:$0xff]
        %v2103 = vld [vmem:[#allocation16 + $0x888] sm:$0xff]
        %v2104 = vld [vmem:[#allocation16 + $0x890] sm:$0xff]
        %v2105 = vld [vmem:[#allocation16 + $0x898] sm:$0xff]
        %v2106 = vld [vmem:[#allocation16 + $0x8a0] sm:$0xff]
        %v2107 = vld [vmem:[#allocation16 + $0x8a8] sm:$0xff]
        %v2108 = vld [vmem:[#allocation16 + $0x8b0] sm:$0xff]
        %v2109 = vld [vmem:[#allocation16 + $0x8b8] sm:$0xff]
        %v2110 = vld [vmem:[#allocation16 + $0x8c0] sm:$0xff]
        %v2111 = vld [vmem:[#allocation16 + $0x8c8] sm:$0xff]
        %v2112 = vld [vmem:[#allocation16 + $0x8d0] sm:$0xff]
        %v2113 = vld [vmem:[#allocation16 + $0x8d8] sm:$0xff]
        %v2114 = vld [vmem:[#allocation16 + $0x8e0] sm:$0xff]
        %v2115 = vld [vmem:[#allocation16 + $0x8e8] sm:$0xff]
        %v2116 = vld [vmem:[#allocation16 + $0x8f0] sm:$0xff]
        %v2117 = vld [vmem:[#allocation16 + $0x8f8] sm:$0xff]
        %v2118 = vld [vmem:[#allocation16 + $0x900] sm:$0xff]
        %v2119 = vld [vmem:[#allocation16 + $0x908] sm:$0xff]
        %v2120 = vld [vmem:[#allocation16 + $0x910] sm:$0xff]
        %v2121 = vld [vmem:[#allocation16 + $0x918] sm:$0xff]
        %v2122 = vld [vmem:[#allocation16 + $0x920] sm:$0xff]
        %v2123 = vld [vmem:[#allocation16 + $0x928] sm:$0xff]
        %v2124 = vld [vmem:[#allocation16 + $0x930] sm:$0xff]
        %v2125 = vld [vmem:[#allocation16 + $0x938] sm:$0xff]
        %v2126 = vld [vmem:[#allocation16 + $0x940] sm:$0xff]
        %v2127 = vld [vmem:[#allocation16 + $0x948] sm:$0xff]
        %v2128 = vld [vmem:[#allocation16 + $0x950] sm:$0xff]
        %v2129 = vld [vmem:[#allocation16 + $0x958] sm:$0xff]
        %v2130 = vld [vmem:[#allocation16 + $0x960] sm:$0xff]
        %v2131 = vld [vmem:[#allocation16 + $0x968] sm:$0xff]
        %v2132 = vld [vmem:[#allocation16 + $0x970] sm:$0xff]
        %v2133 = vld [vmem:[#allocation16 + $0x978] sm:$0xff]
        %v2134 = vld [vmem:[#allocation16 + $0x980] sm:$0xff]
        %v2135 = vld [vmem:[#allocation16 + $0x988] sm:$0xff]
        %v2136 = vld [vmem:[#allocation16 + $0x990] sm:$0xff]
        %v2137 = vld [vmem:[#allocation16 + $0x998] sm:$0xff]
        %v2138 = vld [vmem:[#allocation16 + $0x9a0] sm:$0xff]
        %v2139 = vld [vmem:[#allocation16 + $0x9a8] sm:$0xff]
        %v2140 = vld [vmem:[#allocation16 + $0x9b0] sm:$0xff]
        %v2141 = vld [vmem:[#allocation16 + $0x9b8] sm:$0xff]
        %v2142 = vld [vmem:[#allocation16 + $0x9c0] sm:$0xff]
        %v2143 = vld [vmem:[#allocation16 + $0x9c8] sm:$0xff]
        %v2144 = vld [vmem:[#allocation16 + $0x9d0] sm:$0xff]
        %v2145 = vld [vmem:[#allocation16 + $0x9d8] sm:$0xff]
        %v2146 = vld [vmem:[#allocation16 + $0x9e0] sm:$0xff]
        %v2147 = vld [vmem:[#allocation16 + $0x9e8] sm:$0xff]
        %v2148 = vld [vmem:[#allocation16 + $0x9f0] sm:$0xff]
        %v2149 = vld [vmem:[#allocation16 + $0x9f8] sm:$0xff]
        %v2150 = vld [vmem:[#allocation16 + $0xa00] sm:$0xff]
        %v2151 = vld [vmem:[#allocation16 + $0xa08] sm:$0xff]
        %v2152 = vld [vmem:[#allocation16 + $0xa10] sm:$0xff]
        %v2153 = vld [vmem:[#allocation16 + $0xa18] sm:$0xff]
        %v2154 = vld [vmem:[#allocation16 + $0xa20] sm:$0xff]
        %v2155 = vld [vmem:[#allocation16 + $0xa28] sm:$0xff]
        %v2156 = vld [vmem:[#allocation16 + $0xa30] sm:$0xff]
        %v2157 = vld [vmem:[#allocation16 + $0xa38] sm:$0xff]
        %v2158 = vld [vmem:[#allocation16 + $0xa40] sm:$0xff]
        %v2159 = vld [vmem:[#allocation16 + $0xa48] sm:$0xff]
        %v2160 = vld [vmem:[#allocation16 + $0xa50] sm:$0xff]
        %v2161 = vld [vmem:[#allocation16 + $0xa58] sm:$0xff]
        %v2162 = vld [vmem:[#allocation16 + $0xa60] sm:$0xff]
        %v2163 = vld [vmem:[#allocation16 + $0xa68] sm:$0xff]
        %v2164 = vld [vmem:[#allocation16 + $0xa70] sm:$0xff]
        %v2165 = vld [vmem:[#allocation16 + $0xa78] sm:$0xff]
        %v2166 = vld [vmem:[#allocation16 + $0xa80] sm:$0xff]
        %v2167 = vld [vmem:[#allocation16 + $0xa88] sm:$0xff]
        %v2168 = vld [vmem:[#allocation16 + $0xa90] sm:$0xff]
        %v2169 = vld [vmem:[#allocation16 + $0xa98] sm:$0xff]
        %v2170 = vld [vmem:[#allocation16 + $0xaa0] sm:$0xff]
        %v2171 = vld [vmem:[#allocation16 + $0xaa8] sm:$0xff]
        %v2172 = vld [vmem:[#allocation16 + $0xab0] sm:$0xff]
        %v2173 = vld [vmem:[#allocation16 + $0xab8] sm:$0xff]
        %v2174 = vld [vmem:[#allocation16 + $0xac0] sm:$0xff]
        %v2175 = vld [vmem:[#allocation16 + $0xac8] sm:$0xff]
        %v2176 = vld [vmem:[#allocation16 + $0xad0] sm:$0xff]
        %v2177 = vld [vmem:[#allocation16 + $0xad8] sm:$0xff]
        %v2178 = vld [vmem:[#allocation16 + $0xae0] sm:$0xff]
        %v2179 = vld [vmem:[#allocation16 + $0xae8] sm:$0xff]
        %v2180 = vld [vmem:[#allocation16 + $0xaf0] sm:$0xff]
        %v2181 = vld [vmem:[#allocation16 + $0xaf8] sm:$0xff]
        %v2182 = vld [vmem:[#allocation16 + $0xb00] sm:$0xff]
        %v2183 = vld [vmem:[#allocation16 + $0xb08] sm:$0xff]
        %v2184 = vld [vmem:[#allocation16 + $0xb10] sm:$0xff]
        %v2185 = vld [vmem:[#allocation16 + $0xb18] sm:$0xff]
        %v2186 = vld [vmem:[#allocation16 + $0xb20] sm:$0xff]
        %v2187 = vld [vmem:[#allocation16 + $0xb28] sm:$0xff]
        %v2188 = vld [vmem:[#allocation16 + $0xb30] sm:$0xff]
        %v2189 = vld [vmem:[#allocation16 + $0xb38] sm:$0xff]
        %v2190 = vld [vmem:[#allocation16 + $0xb40] sm:$0xff]
        %v2191 = vld [vmem:[#allocation16 + $0xb48] sm:$0xff]
        %v2192 = vld [vmem:[#allocation16 + $0xb50] sm:$0xff]
        %v2193 = vld [vmem:[#allocation16 + $0xb58] sm:$0xff]
        %v2194 = vld [vmem:[#allocation16 + $0xb60] sm:$0xff]
        %v2195 = vld [vmem:[#allocation16 + $0xb68] sm:$0xff]
        %v2196 = vld [vmem:[#allocation16 + $0xb70] sm:$0xff]
        %v2197 = vld [vmem:[#allocation16 + $0xb78] sm:$0xff]
        %v2198 = vld [vmem:[#allocation16 + $0xb80] sm:$0xff]
        %v2199 = vld [vmem:[#allocation16 + $0xb88] sm:$0xff]
        %v2200 = vld [vmem:[#allocation16 + $0xb90] sm:$0xff]
        %v2201 = vld [vmem:[#allocation16 + $0xb98] sm:$0xff]
        %v2202 = vld [vmem:[#allocation16 + $0xba0] sm:$0xff]
        %v2203 = vld [vmem:[#allocation16 + $0xba8] sm:$0xff]
        %v2204 = vld [vmem:[#allocation16 + $0xbb0] sm:$0xff]
        %v2205 = vld [vmem:[#allocation16 + $0xbb8] sm:$0xff]
        %v2206 = vld [vmem:[#allocation16 + $0xbc0] sm:$0xff]
        %v2207 = vld [vmem:[#allocation16 + $0xbc8] sm:$0xff]
        %v2208 = vld [vmem:[#allocation16 + $0xbd0] sm:$0xff]
        %v2209 = vld [vmem:[#allocation16 + $0xbd8] sm:$0xff]
        %v2210 = vld [vmem:[#allocation16 + $0xbe0] sm:$0xff]
        %v2211 = vld [vmem:[#allocation16 + $0xbe8] sm:$0xff]
        %v2212 = vld [vmem:[#allocation16 + $0xbf0] sm:$0xff]
        %v2213 = vld [vmem:[#allocation16 + $0xbf8] sm:$0xff]
        %v2217 = vlaneseq
        %v2218 = vshrl.u32 %v2217, 7
        %v2219 = vsub.s32 0, %v2218
        %v2220 = vrot.slane %v1827, %v2219
        %v2221 = vlaneseq
        %v2222 = vshrl.u32 %v2221, 7
        %v2223 = vsub.s32 1, %v2222
        %v2224 = vrot.slane %v1827, %v2223
        %v2225 = vlaneseq
        %v2226 = vshrl.u32 %v2225, 7
        %v2227 = vsub.s32 2, %v2226
        %v2228 = vrot.slane %v1827, %v2227
        %v2229 = vlaneseq
        %v2230 = vshrl.u32 %v2229, 7
        %v2231 = vsub.s32 3, %v2230
        %v2232 = vrot.slane %v1827, %v2231
        %v2233 = vlaneseq
        %v2234 = vshrl.u32 %v2233, 7
        %v2235 = vsub.s32 4, %v2234
        %v2236 = vrot.slane %v1827, %v2235
        %v2237 = vlaneseq
        %v2238 = vshrl.u32 %v2237, 7
        %v2239 = vsub.s32 5, %v2238
        %v2240 = vrot.slane %v1827, %v2239
        %v2241 = vlaneseq
        %v2242 = vshrl.u32 %v2241, 7
        %v2243 = vsub.s32 6, %v2242
        %v2244 = vrot.slane %v1827, %v2243
        %v2245 = vlaneseq
        %v2246 = vshrl.u32 %v2245, 7
        %v2247 = vsub.s32 7, %v2246
        %v2248 = vrot.slane %v1827, %v2247
        %v2249 = vlaneseq
        %v2250 = vshrl.u32 %v2249, 7
        %v2251 = vsub.s32 0, %v2250
        %v2252 = vrot.slane %v1828, %v2251
        %v2253 = vlaneseq
        %v2254 = vshrl.u32 %v2253, 7
        %v2255 = vsub.s32 1, %v2254
        %v2256 = vrot.slane %v1828, %v2255
        %v2257 = vlaneseq
        %v2258 = vshrl.u32 %v2257, 7
        %v2259 = vsub.s32 2, %v2258
        %v2260 = vrot.slane %v1828, %v2259
        %v2261 = vlaneseq
        %v2262 = vshrl.u32 %v2261, 7
        %v2263 = vsub.s32 3, %v2262
        %v2264 = vrot.slane %v1828, %v2263
        %v2265 = vlaneseq
        %v2266 = vshrl.u32 %v2265, 7
        %v2267 = vsub.s32 4, %v2266
        %v2268 = vrot.slane %v1828, %v2267
        %v2269 = vlaneseq
        %v2270 = vshrl.u32 %v2269, 7
        %v2271 = vsub.s32 5, %v2270
        %v2272 = vrot.slane %v1828, %v2271
        %v2273 = vlaneseq
        %v2274 = vshrl.u32 %v2273, 7
        %v2275 = vsub.s32 6, %v2274
        %v2276 = vrot.slane %v1828, %v2275
        %v2277 = vlaneseq
        %v2278 = vshrl.u32 %v2277, 7
        %v2279 = vsub.s32 7, %v2278
        %v2280 = vrot.slane %v1828, %v2279
        %v2281 = vlaneseq
        %v2282 = vshrl.u32 %v2281, 7
        %v2283 = vsub.s32 0, %v2282
        %v2284 = vrot.slane %v1829, %v2283
        %v2285 = vlaneseq
        %v2286 = vshrl.u32 %v2285, 7
        %v2287 = vsub.s32 1, %v2286
        %v2288 = vrot.slane %v1829, %v2287
        %v2289 = vlaneseq
        %v2290 = vshrl.u32 %v2289, 7
        %v2291 = vsub.s32 2, %v2290
        %v2292 = vrot.slane %v1829, %v2291
        %v2293 = vlaneseq
        %v2294 = vshrl.u32 %v2293, 7
        %v2295 = vsub.s32 3, %v2294
        %v2296 = vrot.slane %v1829, %v2295
        %v2297 = vlaneseq
        %v2298 = vshrl.u32 %v2297, 7
        %v2299 = vsub.s32 4, %v2298
        %v2300 = vrot.slane %v1829, %v2299
        %v2301 = vlaneseq
        %v2302 = vshrl.u32 %v2301, 7
        %v2303 = vsub.s32 5, %v2302
        %v2304 = vrot.slane %v1829, %v2303
        %v2305 = vlaneseq
        %v2306 = vshrl.u32 %v2305, 7
        %v2307 = vsub.s32 6, %v2306
        %v2308 = vrot.slane %v1829, %v2307
        %v2309 = vlaneseq
        %v2310 = vshrl.u32 %v2309, 7
        %v2311 = vsub.s32 7, %v2310
        %v2312 = vrot.slane %v1829, %v2311
        %v2337 = vpack.c.bf16 %v2220, %v2220
        %v2338 = vpack.c.bf16 %v2224, %v2224
        %v2339 = vpack.c.bf16 %v2228, %v2228
        %v2340 = vpack.c.bf16 %v2232, %v2232
        %v2341 = vpack.c.bf16 %v2236, %v2236
        %v2342 = vpack.c.bf16 %v2240, %v2240
        %v2343 = vpack.c.bf16 %v2244, %v2244
        %v2344 = vpack.c.bf16 %v2248, %v2248
        %v2345 = vpack.c.bf16 %v2252, %v2252
        %v2346 = vpack.c.bf16 %v2256, %v2256
        %v2347 = vpack.c.bf16 %v2260, %v2260
        %v2348 = vpack.c.bf16 %v2264, %v2264
        %v2349 = vpack.c.bf16 %v2268, %v2268
        %v2350 = vpack.c.bf16 %v2272, %v2272
        %v2351 = vpack.c.bf16 %v2276, %v2276
        %v2352 = vpack.c.bf16 %v2280, %v2280
        %v2353 = vpack.c.bf16 %v2284, %v2284
        %v2354 = vpack.c.bf16 %v2288, %v2288
        %v2355 = vpack.c.bf16 %v2292, %v2292
        %v2356 = vpack.c.bf16 %v2296, %v2296
        %v2357 = vpack.c.bf16 %v2300, %v2300
        %v2358 = vpack.c.bf16 %v2304, %v2304
        %v2359 = vpack.c.bf16 %v2308, %v2308
        %v2360 = vpack.c.bf16 %v2312, %v2312
        %v2745 = vunpack.c.l.b16 %v1830
        %v2746 = vunpack.c.h.b16 %v1830
        %v2747 = vunpack.c.l.b16 %v1831
        %v2748 = vunpack.c.h.b16 %v1831
        %v2749 = vunpack.c.l.b16 %v1832
        %v2750 = vunpack.c.h.b16 %v1832
        %v2751 = vunpack.c.l.b16 %v1833
        %v2752 = vunpack.c.h.b16 %v1833
        %v2753 = vunpack.c.l.b16 %v1834
        %v2754 = vunpack.c.h.b16 %v1834
        %v2755 = vunpack.c.l.b16 %v1835
        %v2756 = vunpack.c.h.b16 %v1835
        %v2757 = vunpack.c.l.b16 %v1836
        %v2758 = vunpack.c.h.b16 %v1836
        %v2759 = vunpack.c.l.b16 %v1837
        %v2760 = vunpack.c.h.b16 %v1837
        %v2761 = vunpack.c.l.b16 %v1838
        %v2762 = vunpack.c.h.b16 %v1838
        %v2763 = vunpack.c.l.b16 %v1839
        %v2764 = vunpack.c.h.b16 %v1839
        %v2765 = vunpack.c.l.b16 %v1840
        %v2766 = vunpack.c.h.b16 %v1840
        %v2767 = vunpack.c.l.b16 %v1841
        %v2768 = vunpack.c.h.b16 %v1841
        %v2769 = vunpack.c.l.b16 %v1842
        %v2770 = vunpack.c.h.b16 %v1842
        %v2771 = vunpack.c.l.b16 %v1843
        %v2772 = vunpack.c.h.b16 %v1843
        %v2773 = vunpack.c.l.b16 %v1844
        %v2774 = vunpack.c.h.b16 %v1844
        %v2775 = vunpack.c.l.b16 %v1845
        %v2776 = vunpack.c.h.b16 %v1845
        %v2777 = vunpack.c.l.b16 %v1846
        %v2778 = vunpack.c.h.b16 %v1846
        %v2779 = vunpack.c.l.b16 %v1847
        %v2780 = vunpack.c.h.b16 %v1847
        %v2781 = vunpack.c.l.b16 %v1848
        %v2782 = vunpack.c.h.b16 %v1848
        %v2783 = vunpack.c.l.b16 %v1849
        %v2784 = vunpack.c.h.b16 %v1849
        %v2785 = vunpack.c.l.b16 %v1850
        %v2786 = vunpack.c.h.b16 %v1850
        %v2787 = vunpack.c.l.b16 %v1851
        %v2788 = vunpack.c.h.b16 %v1851
        %v2789 = vunpack.c.l.b16 %v1852
        %v2790 = vunpack.c.h.b16 %v1852
        %v2791 = vunpack.c.l.b16 %v1853
        %v2792 = vunpack.c.h.b16 %v1853
        %v2793 = vunpack.c.l.b16 %v1854
        %v2794 = vunpack.c.h.b16 %v1854
        %v2795 = vunpack.c.l.b16 %v1855
        %v2796 = vunpack.c.h.b16 %v1855
        %v2797 = vunpack.c.l.b16 %v1856
        %v2798 = vunpack.c.h.b16 %v1856
        %v2799 = vunpack.c.l.b16 %v1857
        %v2800 = vunpack.c.h.b16 %v1857
        %v2801 = vunpack.c.l.b16 %v1858
        %v2802 = vunpack.c.h.b16 %v1858
        %v2803 = vunpack.c.l.b16 %v1859
        %v2804 = vunpack.c.h.b16 %v1859
        %v2805 = vunpack.c.l.b16 %v1860
        %v2806 = vunpack.c.h.b16 %v1860
        %v2807 = vunpack.c.l.b16 %v1861
        %v2808 = vunpack.c.h.b16 %v1861
        %v2809 = vunpack.c.l.b16 %v1862
        %v2810 = vunpack.c.h.b16 %v1862
        %v2811 = vunpack.c.l.b16 %v1863
        %v2812 = vunpack.c.h.b16 %v1863
        %v2813 = vunpack.c.l.b16 %v1864
        %v2814 = vunpack.c.h.b16 %v1864
        %v2815 = vunpack.c.l.b16 %v1865
        %v2816 = vunpack.c.h.b16 %v1865
        %v2817 = vunpack.c.l.b16 %v1866
        %v2818 = vunpack.c.h.b16 %v1866
        %v2819 = vunpack.c.l.b16 %v1867
        %v2820 = vunpack.c.h.b16 %v1867
        %v2821 = vunpack.c.l.b16 %v1868
        %v2822 = vunpack.c.h.b16 %v1868
        %v2823 = vunpack.c.l.b16 %v1869
        %v2824 = vunpack.c.h.b16 %v1869
        %v2825 = vunpack.c.l.b16 %v1870
        %v2826 = vunpack.c.h.b16 %v1870
        %v2827 = vunpack.c.l.b16 %v1871
        %v2828 = vunpack.c.h.b16 %v1871
        %v2829 = vunpack.c.l.b16 %v1872
        %v2830 = vunpack.c.h.b16 %v1872
        %v2831 = vunpack.c.l.b16 %v1873
        %v2832 = vunpack.c.h.b16 %v1873
        %v2833 = vunpack.c.l.b16 %v1874
        %v2834 = vunpack.c.h.b16 %v1874
        %v2835 = vunpack.c.l.b16 %v1875
        %v2836 = vunpack.c.h.b16 %v1875
        %v2837 = vunpack.c.l.b16 %v1876
        %v2838 = vunpack.c.h.b16 %v1876
        %v2839 = vunpack.c.l.b16 %v1877
        %v2840 = vunpack.c.h.b16 %v1877
        %v2841 = vunpack.c.l.b16 %v1878
        %v2842 = vunpack.c.h.b16 %v1878
        %v2843 = vunpack.c.l.b16 %v1879
        %v2844 = vunpack.c.h.b16 %v1879
        %v2845 = vunpack.c.l.b16 %v1880
        %v2846 = vunpack.c.h.b16 %v1880
        %v2847 = vunpack.c.l.b16 %v1881
        %v2848 = vunpack.c.h.b16 %v1881
        %v2849 = vunpack.c.l.b16 %v1882
        %v2850 = vunpack.c.h.b16 %v1882
        %v2851 = vunpack.c.l.b16 %v1883
        %v2852 = vunpack.c.h.b16 %v1883
        %v2853 = vunpack.c.l.b16 %v1884
        %v2854 = vunpack.c.h.b16 %v1884
        %v2855 = vunpack.c.l.b16 %v1885
        %v2856 = vunpack.c.h.b16 %v1885
        %v2857 = vunpack.c.l.b16 %v1886
        %v2858 = vunpack.c.h.b16 %v1886
        %v2859 = vunpack.c.l.b16 %v1887
        %v2860 = vunpack.c.h.b16 %v1887
        %v2861 = vunpack.c.l.b16 %v1888
        %v2862 = vunpack.c.h.b16 %v1888
        %v2863 = vunpack.c.l.b16 %v1889
        %v2864 = vunpack.c.h.b16 %v1889
        %v2865 = vunpack.c.l.b16 %v1890
        %v2866 = vunpack.c.h.b16 %v1890
        %v2867 = vunpack.c.l.b16 %v1891
        %v2868 = vunpack.c.h.b16 %v1891
        %v2869 = vunpack.c.l.b16 %v1892
        %v2870 = vunpack.c.h.b16 %v1892
        %v2871 = vunpack.c.l.b16 %v1893
        %v2872 = vunpack.c.h.b16 %v1893
        %v2873 = vunpack.c.l.b16 %v1894
        %v2874 = vunpack.c.h.b16 %v1894
        %v2875 = vunpack.c.l.b16 %v1895
        %v2876 = vunpack.c.h.b16 %v1895
        %v2877 = vunpack.c.l.b16 %v1896
        %v2878 = vunpack.c.h.b16 %v1896
        %v2879 = vunpack.c.l.b16 %v1897
        %v2880 = vunpack.c.h.b16 %v1897
        %v2881 = vunpack.c.l.b16 %v1898
        %v2882 = vunpack.c.h.b16 %v1898
        %v2883 = vunpack.c.l.b16 %v1899
        %v2884 = vunpack.c.h.b16 %v1899
        %v2885 = vunpack.c.l.b16 %v1900
        %v2886 = vunpack.c.h.b16 %v1900
        %v2887 = vunpack.c.l.b16 %v1901
        %v2888 = vunpack.c.h.b16 %v1901
        %v2889 = vunpack.c.l.b16 %v1902
        %v2890 = vunpack.c.h.b16 %v1902
        %v2891 = vunpack.c.l.b16 %v1903
        %v2892 = vunpack.c.h.b16 %v1903
        %v2893 = vunpack.c.l.b16 %v1904
        %v2894 = vunpack.c.h.b16 %v1904
        %v2895 = vunpack.c.l.b16 %v1905
        %v2896 = vunpack.c.h.b16 %v1905
        %v2897 = vunpack.c.l.b16 %v1906
        %v2898 = vunpack.c.h.b16 %v1906
        %v2899 = vunpack.c.l.b16 %v1907
        %v2900 = vunpack.c.h.b16 %v1907
        %v2901 = vunpack.c.l.b16 %v1908
        %v2902 = vunpack.c.h.b16 %v1908
        %v2903 = vunpack.c.l.b16 %v1909
        %v2904 = vunpack.c.h.b16 %v1909
        %v2905 = vunpack.c.l.b16 %v1910
        %v2906 = vunpack.c.h.b16 %v1910
        %v2907 = vunpack.c.l.b16 %v1911
        %v2908 = vunpack.c.h.b16 %v1911
        %v2909 = vunpack.c.l.b16 %v1912
        %v2910 = vunpack.c.h.b16 %v1912
        %v2911 = vunpack.c.l.b16 %v1913
        %v2912 = vunpack.c.h.b16 %v1913
        %v2913 = vunpack.c.l.b16 %v1914
        %v2914 = vunpack.c.h.b16 %v1914
        %v2915 = vunpack.c.l.b16 %v1915
        %v2916 = vunpack.c.h.b16 %v1915
        %v2917 = vunpack.c.l.b16 %v1916
        %v2918 = vunpack.c.h.b16 %v1916
        %v2919 = vunpack.c.l.b16 %v1917
        %v2920 = vunpack.c.h.b16 %v1917
        %v2921 = vunpack.c.l.b16 %v1918
        %v2922 = vunpack.c.h.b16 %v1918
        %v2923 = vunpack.c.l.b16 %v1919
        %v2924 = vunpack.c.h.b16 %v1919
        %v2925 = vunpack.c.l.b16 %v1920
        %v2926 = vunpack.c.h.b16 %v1920
        %v2927 = vunpack.c.l.b16 %v1921
        %v2928 = vunpack.c.h.b16 %v1921
        %v2929 = vunpack.c.l.b16 %v1922
        %v2930 = vunpack.c.h.b16 %v1922
        %v2931 = vunpack.c.l.b16 %v1923
        %v2932 = vunpack.c.h.b16 %v1923
        %v2933 = vunpack.c.l.b16 %v1924
        %v2934 = vunpack.c.h.b16 %v1924
        %v2935 = vunpack.c.l.b16 %v1925
        %v2936 = vunpack.c.h.b16 %v1925
        %v2937 = vunpack.c.l.b16 %v1926
        %v2938 = vunpack.c.h.b16 %v1926
        %v2939 = vunpack.c.l.b16 %v1927
        %v2940 = vunpack.c.h.b16 %v1927
        %v2941 = vunpack.c.l.b16 %v1928
        %v2942 = vunpack.c.h.b16 %v1928
        %v2943 = vunpack.c.l.b16 %v1929
        %v2944 = vunpack.c.h.b16 %v1929
        %v2945 = vunpack.c.l.b16 %v1930
        %v2946 = vunpack.c.h.b16 %v1930
        %v2947 = vunpack.c.l.b16 %v1931
        %v2948 = vunpack.c.h.b16 %v1931
        %v2949 = vunpack.c.l.b16 %v1932
        %v2950 = vunpack.c.h.b16 %v1932
        %v2951 = vunpack.c.l.b16 %v1933
        %v2952 = vunpack.c.h.b16 %v1933
        %v2953 = vunpack.c.l.b16 %v1934
        %v2954 = vunpack.c.h.b16 %v1934
        %v2955 = vunpack.c.l.b16 %v1935
        %v2956 = vunpack.c.h.b16 %v1935
        %v2957 = vunpack.c.l.b16 %v1936
        %v2958 = vunpack.c.h.b16 %v1936
        %v2959 = vunpack.c.l.b16 %v1937
        %v2960 = vunpack.c.h.b16 %v1937
        %v2961 = vunpack.c.l.b16 %v1938
        %v2962 = vunpack.c.h.b16 %v1938
        %v2963 = vunpack.c.l.b16 %v1939
        %v2964 = vunpack.c.h.b16 %v1939
        %v2965 = vunpack.c.l.b16 %v1940
        %v2966 = vunpack.c.h.b16 %v1940
        %v2967 = vunpack.c.l.b16 %v1941
        %v2968 = vunpack.c.h.b16 %v1941
        %v2969 = vunpack.c.l.b16 %v1942
        %v2970 = vunpack.c.h.b16 %v1942
        %v2971 = vunpack.c.l.b16 %v1943
        %v2972 = vunpack.c.h.b16 %v1943
        %v2973 = vunpack.c.l.b16 %v1944
        %v2974 = vunpack.c.h.b16 %v1944
        %v2975 = vunpack.c.l.b16 %v1945
        %v2976 = vunpack.c.h.b16 %v1945
        %v2977 = vunpack.c.l.b16 %v1946
        %v2978 = vunpack.c.h.b16 %v1946
        %v2979 = vunpack.c.l.b16 %v1947
        %v2980 = vunpack.c.h.b16 %v1947
        %v2981 = vunpack.c.l.b16 %v1948
        %v2982 = vunpack.c.h.b16 %v1948
        %v2983 = vunpack.c.l.b16 %v1949
        %v2984 = vunpack.c.h.b16 %v1949
        %v2985 = vunpack.c.l.b16 %v1950
        %v2986 = vunpack.c.h.b16 %v1950
        %v2987 = vunpack.c.l.b16 %v1951
        %v2988 = vunpack.c.h.b16 %v1951
        %v2989 = vunpack.c.l.b16 %v1952
        %v2990 = vunpack.c.h.b16 %v1952
        %v2991 = vunpack.c.l.b16 %v1953
        %v2992 = vunpack.c.h.b16 %v1953
        %v2993 = vunpack.c.l.b16 %v1954
        %v2994 = vunpack.c.h.b16 %v1954
        %v2995 = vunpack.c.l.b16 %v1955
        %v2996 = vunpack.c.h.b16 %v1955
        %v2997 = vunpack.c.l.b16 %v1956
        %v2998 = vunpack.c.h.b16 %v1956
        %v2999 = vunpack.c.l.b16 %v1957
        %v3000 = vunpack.c.h.b16 %v1957
        %v3001 = vunpack.c.l.b16 %v1958
        %v3002 = vunpack.c.h.b16 %v1958
        %v3003 = vunpack.c.l.b16 %v1959
        %v3004 = vunpack.c.h.b16 %v1959
        %v3005 = vunpack.c.l.b16 %v1960
        %v3006 = vunpack.c.h.b16 %v1960
        %v3007 = vunpack.c.l.b16 %v1961
        %v3008 = vunpack.c.h.b16 %v1961
        %v3009 = vunpack.c.l.b16 %v1962
        %v3010 = vunpack.c.h.b16 %v1962
        %v3011 = vunpack.c.l.b16 %v1963
        %v3012 = vunpack.c.h.b16 %v1963
        %v3013 = vunpack.c.l.b16 %v1964
        %v3014 = vunpack.c.h.b16 %v1964
        %v3015 = vunpack.c.l.b16 %v1965
        %v3016 = vunpack.c.h.b16 %v1965
        %v3017 = vunpack.c.l.b16 %v1966
        %v3018 = vunpack.c.h.b16 %v1966
        %v3019 = vunpack.c.l.b16 %v1967
        %v3020 = vunpack.c.h.b16 %v1967
        %v3021 = vunpack.c.l.b16 %v1968
        %v3022 = vunpack.c.h.b16 %v1968
        %v3023 = vunpack.c.l.b16 %v1969
        %v3024 = vunpack.c.h.b16 %v1969
        %v3025 = vunpack.c.l.b16 %v1970
        %v3026 = vunpack.c.h.b16 %v1970
        %v3027 = vunpack.c.l.b16 %v1971
        %v3028 = vunpack.c.h.b16 %v1971
        %v3029 = vunpack.c.l.b16 %v1972
        %v3030 = vunpack.c.h.b16 %v1972
        %v3031 = vunpack.c.l.b16 %v1973
        %v3032 = vunpack.c.h.b16 %v1973
        %v3033 = vunpack.c.l.b16 %v1974
        %v3034 = vunpack.c.h.b16 %v1974
        %v3035 = vunpack.c.l.b16 %v1975
        %v3036 = vunpack.c.h.b16 %v1975
        %v3037 = vunpack.c.l.b16 %v1976
        %v3038 = vunpack.c.h.b16 %v1976
        %v3039 = vunpack.c.l.b16 %v1977
        %v3040 = vunpack.c.h.b16 %v1977
        %v3041 = vunpack.c.l.b16 %v1978
        %v3042 = vunpack.c.h.b16 %v1978
        %v3043 = vunpack.c.l.b16 %v1979
        %v3044 = vunpack.c.h.b16 %v1979
        %v3045 = vunpack.c.l.b16 %v1980
        %v3046 = vunpack.c.h.b16 %v1980
        %v3047 = vunpack.c.l.b16 %v1981
        %v3048 = vunpack.c.h.b16 %v1981
        %v3049 = vunpack.c.l.b16 %v1982
        %v3050 = vunpack.c.h.b16 %v1982
        %v3051 = vunpack.c.l.b16 %v1983
        %v3052 = vunpack.c.h.b16 %v1983
        %v3053 = vunpack.c.l.b16 %v1984
        %v3054 = vunpack.c.h.b16 %v1984
        %v3055 = vunpack.c.l.b16 %v1985
        %v3056 = vunpack.c.h.b16 %v1985
        %v3057 = vunpack.c.l.b16 %v1986
        %v3058 = vunpack.c.h.b16 %v1986
        %v3059 = vunpack.c.l.b16 %v1987
        %v3060 = vunpack.c.h.b16 %v1987
        %v3061 = vunpack.c.l.b16 %v1988
        %v3062 = vunpack.c.h.b16 %v1988
        %v3063 = vunpack.c.l.b16 %v1989
        %v3064 = vunpack.c.h.b16 %v1989
        %v3065 = vunpack.c.l.b16 %v1990
        %v3066 = vunpack.c.h.b16 %v1990
        %v3067 = vunpack.c.l.b16 %v1991
        %v3068 = vunpack.c.h.b16 %v1991
        %v3069 = vunpack.c.l.b16 %v1992
        %v3070 = vunpack.c.h.b16 %v1992
        %v3071 = vunpack.c.l.b16 %v1993
        %v3072 = vunpack.c.h.b16 %v1993
        %v3073 = vunpack.c.l.b16 %v1994
        %v3074 = vunpack.c.h.b16 %v1994
        %v3075 = vunpack.c.l.b16 %v1995
        %v3076 = vunpack.c.h.b16 %v1995
        %v3077 = vunpack.c.l.b16 %v1996
        %v3078 = vunpack.c.h.b16 %v1996
        %v3079 = vunpack.c.l.b16 %v1997
        %v3080 = vunpack.c.h.b16 %v1997
        %v3081 = vunpack.c.l.b16 %v1998
        %v3082 = vunpack.c.h.b16 %v1998
        %v3083 = vunpack.c.l.b16 %v1999
        %v3084 = vunpack.c.h.b16 %v1999
        %v3085 = vunpack.c.l.b16 %v2000
        %v3086 = vunpack.c.h.b16 %v2000
        %v3087 = vunpack.c.l.b16 %v2001
        %v3088 = vunpack.c.h.b16 %v2001
        %v3089 = vunpack.c.l.b16 %v2002
        %v3090 = vunpack.c.h.b16 %v2002
        %v3091 = vunpack.c.l.b16 %v2003
        %v3092 = vunpack.c.h.b16 %v2003
        %v3093 = vunpack.c.l.b16 %v2004
        %v3094 = vunpack.c.h.b16 %v2004
        %v3095 = vunpack.c.l.b16 %v2005
        %v3096 = vunpack.c.h.b16 %v2005
        %v3097 = vunpack.c.l.b16 %v2006
        %v3098 = vunpack.c.h.b16 %v2006
        %v3099 = vunpack.c.l.b16 %v2007
        %v3100 = vunpack.c.h.b16 %v2007
        %v3101 = vunpack.c.l.b16 %v2008
        %v3102 = vunpack.c.h.b16 %v2008
        %v3103 = vunpack.c.l.b16 %v2009
        %v3104 = vunpack.c.h.b16 %v2009
        %v3105 = vunpack.c.l.b16 %v2010
        %v3106 = vunpack.c.h.b16 %v2010
        %v3107 = vunpack.c.l.b16 %v2011
        %v3108 = vunpack.c.h.b16 %v2011
        %v3109 = vunpack.c.l.b16 %v2012
        %v3110 = vunpack.c.h.b16 %v2012
        %v3111 = vunpack.c.l.b16 %v2013
        %v3112 = vunpack.c.h.b16 %v2013
        %v3113 = vunpack.c.l.b16 %v2014
        %v3114 = vunpack.c.h.b16 %v2014
        %v3115 = vunpack.c.l.b16 %v2015
        %v3116 = vunpack.c.h.b16 %v2015
        %v3117 = vunpack.c.l.b16 %v2016
        %v3118 = vunpack.c.h.b16 %v2016
        %v3119 = vunpack.c.l.b16 %v2017
        %v3120 = vunpack.c.h.b16 %v2017
        %v3121 = vunpack.c.l.b16 %v2018
        %v3122 = vunpack.c.h.b16 %v2018
        %v3123 = vunpack.c.l.b16 %v2019
        %v3124 = vunpack.c.h.b16 %v2019
        %v3125 = vunpack.c.l.b16 %v2020
        %v3126 = vunpack.c.h.b16 %v2020
        %v3127 = vunpack.c.l.b16 %v2021
        %v3128 = vunpack.c.h.b16 %v2021
        %v3129 = vunpack.c.l.b16 %v2022
        %v3130 = vunpack.c.h.b16 %v2022
        %v3131 = vunpack.c.l.b16 %v2023
        %v3132 = vunpack.c.h.b16 %v2023
        %v3133 = vunpack.c.l.b16 %v2024
        %v3134 = vunpack.c.h.b16 %v2024
        %v3135 = vunpack.c.l.b16 %v2025
        %v3136 = vunpack.c.h.b16 %v2025
        %v3137 = vunpack.c.l.b16 %v2026
        %v3138 = vunpack.c.h.b16 %v2026
        %v3139 = vunpack.c.l.b16 %v2027
        %v3140 = vunpack.c.h.b16 %v2027
        %v3141 = vunpack.c.l.b16 %v2028
        %v3142 = vunpack.c.h.b16 %v2028
        %v3143 = vunpack.c.l.b16 %v2029
        %v3144 = vunpack.c.h.b16 %v2029
        %v3145 = vunpack.c.l.b16 %v2030
        %v3146 = vunpack.c.h.b16 %v2030
        %v3147 = vunpack.c.l.b16 %v2031
        %v3148 = vunpack.c.h.b16 %v2031
        %v3149 = vunpack.c.l.b16 %v2032
        %v3150 = vunpack.c.h.b16 %v2032
        %v3151 = vunpack.c.l.b16 %v2033
        %v3152 = vunpack.c.h.b16 %v2033
        %v3153 = vunpack.c.l.b16 %v2034
        %v3154 = vunpack.c.h.b16 %v2034
        %v3155 = vunpack.c.l.b16 %v2035
        %v3156 = vunpack.c.h.b16 %v2035
        %v3157 = vunpack.c.l.b16 %v2036
        %v3158 = vunpack.c.h.b16 %v2036
        %v3159 = vunpack.c.l.b16 %v2037
        %v3160 = vunpack.c.h.b16 %v2037
        %v3161 = vunpack.c.l.b16 %v2038
        %v3162 = vunpack.c.h.b16 %v2038
        %v3163 = vunpack.c.l.b16 %v2039
        %v3164 = vunpack.c.h.b16 %v2039
        %v3165 = vunpack.c.l.b16 %v2040
        %v3166 = vunpack.c.h.b16 %v2040
        %v3167 = vunpack.c.l.b16 %v2041
        %v3168 = vunpack.c.h.b16 %v2041
        %v3169 = vunpack.c.l.b16 %v2042
        %v3170 = vunpack.c.h.b16 %v2042
        %v3171 = vunpack.c.l.b16 %v2043
        %v3172 = vunpack.c.h.b16 %v2043
        %v3173 = vunpack.c.l.b16 %v2044
        %v3174 = vunpack.c.h.b16 %v2044
        %v3175 = vunpack.c.l.b16 %v2045
        %v3176 = vunpack.c.h.b16 %v2045
        %v3177 = vunpack.c.l.b16 %v2046
        %v3178 = vunpack.c.h.b16 %v2046
        %v3179 = vunpack.c.l.b16 %v2047
        %v3180 = vunpack.c.h.b16 %v2047
        %v3181 = vunpack.c.l.b16 %v2048
        %v3182 = vunpack.c.h.b16 %v2048
        %v3183 = vunpack.c.l.b16 %v2049
        %v3184 = vunpack.c.h.b16 %v2049
        %v3185 = vunpack.c.l.b16 %v2050
        %v3186 = vunpack.c.h.b16 %v2050
        %v3187 = vunpack.c.l.b16 %v2051
        %v3188 = vunpack.c.h.b16 %v2051
        %v3189 = vunpack.c.l.b16 %v2052
        %v3190 = vunpack.c.h.b16 %v2052
        %v3191 = vunpack.c.l.b16 %v2053
        %v3192 = vunpack.c.h.b16 %v2053
        %v3193 = vunpack.c.l.b16 %v2054
        %v3194 = vunpack.c.h.b16 %v2054
        %v3195 = vunpack.c.l.b16 %v2055
        %v3196 = vunpack.c.h.b16 %v2055
        %v3197 = vunpack.c.l.b16 %v2056
        %v3198 = vunpack.c.h.b16 %v2056
        %v3199 = vunpack.c.l.b16 %v2057
        %v3200 = vunpack.c.h.b16 %v2057
        %v3201 = vunpack.c.l.b16 %v2058
        %v3202 = vunpack.c.h.b16 %v2058
        %v3203 = vunpack.c.l.b16 %v2059
        %v3204 = vunpack.c.h.b16 %v2059
        %v3205 = vunpack.c.l.b16 %v2060
        %v3206 = vunpack.c.h.b16 %v2060
        %v3207 = vunpack.c.l.b16 %v2061
        %v3208 = vunpack.c.h.b16 %v2061
        %v3209 = vunpack.c.l.b16 %v2062
        %v3210 = vunpack.c.h.b16 %v2062
        %v3211 = vunpack.c.l.b16 %v2063
        %v3212 = vunpack.c.h.b16 %v2063
        %v3213 = vunpack.c.l.b16 %v2064
        %v3214 = vunpack.c.h.b16 %v2064
        %v3215 = vunpack.c.l.b16 %v2065
        %v3216 = vunpack.c.h.b16 %v2065
        %v3217 = vunpack.c.l.b16 %v2066
        %v3218 = vunpack.c.h.b16 %v2066
        %v3219 = vunpack.c.l.b16 %v2067
        %v3220 = vunpack.c.h.b16 %v2067
        %v3221 = vunpack.c.l.b16 %v2068
        %v3222 = vunpack.c.h.b16 %v2068
        %v3223 = vunpack.c.l.b16 %v2069
        %v3224 = vunpack.c.h.b16 %v2069
        %v3225 = vunpack.c.l.b16 %v2070
        %v3226 = vunpack.c.h.b16 %v2070
        %v3227 = vunpack.c.l.b16 %v2071
        %v3228 = vunpack.c.h.b16 %v2071
        %v3229 = vunpack.c.l.b16 %v2072
        %v3230 = vunpack.c.h.b16 %v2072
        %v3231 = vunpack.c.l.b16 %v2073
        %v3232 = vunpack.c.h.b16 %v2073
        %v3233 = vunpack.c.l.b16 %v2074
        %v3234 = vunpack.c.h.b16 %v2074
        %v3235 = vunpack.c.l.b16 %v2075
        %v3236 = vunpack.c.h.b16 %v2075
        %v3237 = vunpack.c.l.b16 %v2076
        %v3238 = vunpack.c.h.b16 %v2076
        %v3239 = vunpack.c.l.b16 %v2077
        %v3240 = vunpack.c.h.b16 %v2077
        %v3241 = vunpack.c.l.b16 %v2078
        %v3242 = vunpack.c.h.b16 %v2078
        %v3243 = vunpack.c.l.b16 %v2079
        %v3244 = vunpack.c.h.b16 %v2079
        %v3245 = vunpack.c.l.b16 %v2080
        %v3246 = vunpack.c.h.b16 %v2080
        %v3247 = vunpack.c.l.b16 %v2081
        %v3248 = vunpack.c.h.b16 %v2081
        %v3249 = vunpack.c.l.b16 %v2082
        %v3250 = vunpack.c.h.b16 %v2082
        %v3251 = vunpack.c.l.b16 %v2083
        %v3252 = vunpack.c.h.b16 %v2083
        %v3253 = vunpack.c.l.b16 %v2084
        %v3254 = vunpack.c.h.b16 %v2084
        %v3255 = vunpack.c.l.b16 %v2085
        %v3256 = vunpack.c.h.b16 %v2085
        %v3257 = vunpack.c.l.b16 %v2086
        %v3258 = vunpack.c.h.b16 %v2086
        %v3259 = vunpack.c.l.b16 %v2087
        %v3260 = vunpack.c.h.b16 %v2087
        %v3261 = vunpack.c.l.b16 %v2088
        %v3262 = vunpack.c.h.b16 %v2088
        %v3263 = vunpack.c.l.b16 %v2089
        %v3264 = vunpack.c.h.b16 %v2089
        %v3265 = vunpack.c.l.b16 %v2090
        %v3266 = vunpack.c.h.b16 %v2090
        %v3267 = vunpack.c.l.b16 %v2091
        %v3268 = vunpack.c.h.b16 %v2091
        %v3269 = vunpack.c.l.b16 %v2092
        %v3270 = vunpack.c.h.b16 %v2092
        %v3271 = vunpack.c.l.b16 %v2093
        %v3272 = vunpack.c.h.b16 %v2093
        %v3273 = vunpack.c.l.b16 %v2094
        %v3274 = vunpack.c.h.b16 %v2094
        %v3275 = vunpack.c.l.b16 %v2095
        %v3276 = vunpack.c.h.b16 %v2095
        %v3277 = vunpack.c.l.b16 %v2096
        %v3278 = vunpack.c.h.b16 %v2096
        %v3279 = vunpack.c.l.b16 %v2097
        %v3280 = vunpack.c.h.b16 %v2097
        %v3281 = vunpack.c.l.b16 %v2098
        %v3282 = vunpack.c.h.b16 %v2098
        %v3283 = vunpack.c.l.b16 %v2099
        %v3284 = vunpack.c.h.b16 %v2099
        %v3285 = vunpack.c.l.b16 %v2100
        %v3286 = vunpack.c.h.b16 %v2100
        %v3287 = vunpack.c.l.b16 %v2101
        %v3288 = vunpack.c.h.b16 %v2101
        %v3289 = vunpack.c.l.b16 %v2102
        %v3290 = vunpack.c.h.b16 %v2102
        %v3291 = vunpack.c.l.b16 %v2103
        %v3292 = vunpack.c.h.b16 %v2103
        %v3293 = vunpack.c.l.b16 %v2104
        %v3294 = vunpack.c.h.b16 %v2104
        %v3295 = vunpack.c.l.b16 %v2105
        %v3296 = vunpack.c.h.b16 %v2105
        %v3297 = vunpack.c.l.b16 %v2106
        %v3298 = vunpack.c.h.b16 %v2106
        %v3299 = vunpack.c.l.b16 %v2107
        %v3300 = vunpack.c.h.b16 %v2107
        %v3301 = vunpack.c.l.b16 %v2108
        %v3302 = vunpack.c.h.b16 %v2108
        %v3303 = vunpack.c.l.b16 %v2109
        %v3304 = vunpack.c.h.b16 %v2109
        %v3305 = vunpack.c.l.b16 %v2110
        %v3306 = vunpack.c.h.b16 %v2110
        %v3307 = vunpack.c.l.b16 %v2111
        %v3308 = vunpack.c.h.b16 %v2111
        %v3309 = vunpack.c.l.b16 %v2112
        %v3310 = vunpack.c.h.b16 %v2112
        %v3311 = vunpack.c.l.b16 %v2113
        %v3312 = vunpack.c.h.b16 %v2113
        %v3313 = vunpack.c.l.b16 %v2114
        %v3314 = vunpack.c.h.b16 %v2114
        %v3315 = vunpack.c.l.b16 %v2115
        %v3316 = vunpack.c.h.b16 %v2115
        %v3317 = vunpack.c.l.b16 %v2116
        %v3318 = vunpack.c.h.b16 %v2116
        %v3319 = vunpack.c.l.b16 %v2117
        %v3320 = vunpack.c.h.b16 %v2117
        %v3321 = vunpack.c.l.b16 %v2118
        %v3322 = vunpack.c.h.b16 %v2118
        %v3323 = vunpack.c.l.b16 %v2119
        %v3324 = vunpack.c.h.b16 %v2119
        %v3325 = vunpack.c.l.b16 %v2120
        %v3326 = vunpack.c.h.b16 %v2120
        %v3327 = vunpack.c.l.b16 %v2121
        %v3328 = vunpack.c.h.b16 %v2121
        %v3329 = vunpack.c.l.b16 %v2122
        %v3330 = vunpack.c.h.b16 %v2122
        %v3331 = vunpack.c.l.b16 %v2123
        %v3332 = vunpack.c.h.b16 %v2123
        %v3333 = vunpack.c.l.b16 %v2124
        %v3334 = vunpack.c.h.b16 %v2124
        %v3335 = vunpack.c.l.b16 %v2125
        %v3336 = vunpack.c.h.b16 %v2125
        %v3337 = vunpack.c.l.b16 %v2126
        %v3338 = vunpack.c.h.b16 %v2126
        %v3339 = vunpack.c.l.b16 %v2127
        %v3340 = vunpack.c.h.b16 %v2127
        %v3341 = vunpack.c.l.b16 %v2128
        %v3342 = vunpack.c.h.b16 %v2128
        %v3343 = vunpack.c.l.b16 %v2129
        %v3344 = vunpack.c.h.b16 %v2129
        %v3345 = vunpack.c.l.b16 %v2130
        %v3346 = vunpack.c.h.b16 %v2130
        %v3347 = vunpack.c.l.b16 %v2131
        %v3348 = vunpack.c.h.b16 %v2131
        %v3349 = vunpack.c.l.b16 %v2132
        %v3350 = vunpack.c.h.b16 %v2132
        %v3351 = vunpack.c.l.b16 %v2133
        %v3352 = vunpack.c.h.b16 %v2133
        %v3353 = vunpack.c.l.b16 %v2134
        %v3354 = vunpack.c.h.b16 %v2134
        %v3355 = vunpack.c.l.b16 %v2135
        %v3356 = vunpack.c.h.b16 %v2135
        %v3357 = vunpack.c.l.b16 %v2136
        %v3358 = vunpack.c.h.b16 %v2136
        %v3359 = vunpack.c.l.b16 %v2137
        %v3360 = vunpack.c.h.b16 %v2137
        %v3361 = vunpack.c.l.b16 %v2138
        %v3362 = vunpack.c.h.b16 %v2138
        %v3363 = vunpack.c.l.b16 %v2139
        %v3364 = vunpack.c.h.b16 %v2139
        %v3365 = vunpack.c.l.b16 %v2140
        %v3366 = vunpack.c.h.b16 %v2140
        %v3367 = vunpack.c.l.b16 %v2141
        %v3368 = vunpack.c.h.b16 %v2141
        %v3369 = vunpack.c.l.b16 %v2142
        %v3370 = vunpack.c.h.b16 %v2142
        %v3371 = vunpack.c.l.b16 %v2143
        %v3372 = vunpack.c.h.b16 %v2143
        %v3373 = vunpack.c.l.b16 %v2144
        %v3374 = vunpack.c.h.b16 %v2144
        %v3375 = vunpack.c.l.b16 %v2145
        %v3376 = vunpack.c.h.b16 %v2145
        %v3377 = vunpack.c.l.b16 %v2146
        %v3378 = vunpack.c.h.b16 %v2146
        %v3379 = vunpack.c.l.b16 %v2147
        %v3380 = vunpack.c.h.b16 %v2147
        %v3381 = vunpack.c.l.b16 %v2148
        %v3382 = vunpack.c.h.b16 %v2148
        %v3383 = vunpack.c.l.b16 %v2149
        %v3384 = vunpack.c.h.b16 %v2149
        %v3385 = vunpack.c.l.b16 %v2150
        %v3386 = vunpack.c.h.b16 %v2150
        %v3387 = vunpack.c.l.b16 %v2151
        %v3388 = vunpack.c.h.b16 %v2151
        %v3389 = vunpack.c.l.b16 %v2152
        %v3390 = vunpack.c.h.b16 %v2152
        %v3391 = vunpack.c.l.b16 %v2153
        %v3392 = vunpack.c.h.b16 %v2153
        %v3393 = vunpack.c.l.b16 %v2154
        %v3394 = vunpack.c.h.b16 %v2154
        %v3395 = vunpack.c.l.b16 %v2155
        %v3396 = vunpack.c.h.b16 %v2155
        %v3397 = vunpack.c.l.b16 %v2156
        %v3398 = vunpack.c.h.b16 %v2156
        %v3399 = vunpack.c.l.b16 %v2157
        %v3400 = vunpack.c.h.b16 %v2157
        %v3401 = vunpack.c.l.b16 %v2158
        %v3402 = vunpack.c.h.b16 %v2158
        %v3403 = vunpack.c.l.b16 %v2159
        %v3404 = vunpack.c.h.b16 %v2159
        %v3405 = vunpack.c.l.b16 %v2160
        %v3406 = vunpack.c.h.b16 %v2160
        %v3407 = vunpack.c.l.b16 %v2161
        %v3408 = vunpack.c.h.b16 %v2161
        %v3409 = vunpack.c.l.b16 %v2162
        %v3410 = vunpack.c.h.b16 %v2162
        %v3411 = vunpack.c.l.b16 %v2163
        %v3412 = vunpack.c.h.b16 %v2163
        %v3413 = vunpack.c.l.b16 %v2164
        %v3414 = vunpack.c.h.b16 %v2164
        %v3415 = vunpack.c.l.b16 %v2165
        %v3416 = vunpack.c.h.b16 %v2165
        %v3417 = vunpack.c.l.b16 %v2166
        %v3418 = vunpack.c.h.b16 %v2166
        %v3419 = vunpack.c.l.b16 %v2167
        %v3420 = vunpack.c.h.b16 %v2167
        %v3421 = vunpack.c.l.b16 %v2168
        %v3422 = vunpack.c.h.b16 %v2168
        %v3423 = vunpack.c.l.b16 %v2169
        %v3424 = vunpack.c.h.b16 %v2169
        %v3425 = vunpack.c.l.b16 %v2170
        %v3426 = vunpack.c.h.b16 %v2170
        %v3427 = vunpack.c.l.b16 %v2171
        %v3428 = vunpack.c.h.b16 %v2171
        %v3429 = vunpack.c.l.b16 %v2172
        %v3430 = vunpack.c.h.b16 %v2172
        %v3431 = vunpack.c.l.b16 %v2173
        %v3432 = vunpack.c.h.b16 %v2173
        %v3433 = vunpack.c.l.b16 %v2174
        %v3434 = vunpack.c.h.b16 %v2174
        %v3435 = vunpack.c.l.b16 %v2175
        %v3436 = vunpack.c.h.b16 %v2175
        %v3437 = vunpack.c.l.b16 %v2176
        %v3438 = vunpack.c.h.b16 %v2176
        %v3439 = vunpack.c.l.b16 %v2177
        %v3440 = vunpack.c.h.b16 %v2177
        %v3441 = vunpack.c.l.b16 %v2178
        %v3442 = vunpack.c.h.b16 %v2178
        %v3443 = vunpack.c.l.b16 %v2179
        %v3444 = vunpack.c.h.b16 %v2179
        %v3445 = vunpack.c.l.b16 %v2180
        %v3446 = vunpack.c.h.b16 %v2180
        %v3447 = vunpack.c.l.b16 %v2181
        %v3448 = vunpack.c.h.b16 %v2181
        %v3449 = vunpack.c.l.b16 %v2182
        %v3450 = vunpack.c.h.b16 %v2182
        %v3451 = vunpack.c.l.b16 %v2183
        %v3452 = vunpack.c.h.b16 %v2183
        %v3453 = vunpack.c.l.b16 %v2184
        %v3454 = vunpack.c.h.b16 %v2184
        %v3455 = vunpack.c.l.b16 %v2185
        %v3456 = vunpack.c.h.b16 %v2185
        %v3457 = vunpack.c.l.b16 %v2186
        %v3458 = vunpack.c.h.b16 %v2186
        %v3459 = vunpack.c.l.b16 %v2187
        %v3460 = vunpack.c.h.b16 %v2187
        %v3461 = vunpack.c.l.b16 %v2188
        %v3462 = vunpack.c.h.b16 %v2188
        %v3463 = vunpack.c.l.b16 %v2189
        %v3464 = vunpack.c.h.b16 %v2189
        %v3465 = vunpack.c.l.b16 %v2190
        %v3466 = vunpack.c.h.b16 %v2190
        %v3467 = vunpack.c.l.b16 %v2191
        %v3468 = vunpack.c.h.b16 %v2191
        %v3469 = vunpack.c.l.b16 %v2192
        %v3470 = vunpack.c.h.b16 %v2192
        %v3471 = vunpack.c.l.b16 %v2193
        %v3472 = vunpack.c.h.b16 %v2193
        %v3473 = vunpack.c.l.b16 %v2194
        %v3474 = vunpack.c.h.b16 %v2194
        %v3475 = vunpack.c.l.b16 %v2195
        %v3476 = vunpack.c.h.b16 %v2195
        %v3477 = vunpack.c.l.b16 %v2196
        %v3478 = vunpack.c.h.b16 %v2196
        %v3479 = vunpack.c.l.b16 %v2197
        %v3480 = vunpack.c.h.b16 %v2197
        %v3481 = vunpack.c.l.b16 %v2198
        %v3482 = vunpack.c.h.b16 %v2198
        %v3483 = vunpack.c.l.b16 %v2199
        %v3484 = vunpack.c.h.b16 %v2199
        %v3485 = vunpack.c.l.b16 %v2200
        %v3486 = vunpack.c.h.b16 %v2200
        %v3487 = vunpack.c.l.b16 %v2201
        %v3488 = vunpack.c.h.b16 %v2201
        %v3489 = vunpack.c.l.b16 %v2202
        %v3490 = vunpack.c.h.b16 %v2202
        %v3491 = vunpack.c.l.b16 %v2203
        %v3492 = vunpack.c.h.b16 %v2203
        %v3493 = vunpack.c.l.b16 %v2204
        %v3494 = vunpack.c.h.b16 %v2204
        %v3495 = vunpack.c.l.b16 %v2205
        %v3496 = vunpack.c.h.b16 %v2205
        %v3497 = vunpack.c.l.b16 %v2206
        %v3498 = vunpack.c.h.b16 %v2206
        %v3499 = vunpack.c.l.b16 %v2207
        %v3500 = vunpack.c.h.b16 %v2207
        %v3501 = vunpack.c.l.b16 %v2208
        %v3502 = vunpack.c.h.b16 %v2208
        %v3503 = vunpack.c.l.b16 %v2209
        %v3504 = vunpack.c.h.b16 %v2209
        %v3505 = vunpack.c.l.b16 %v2210
        %v3506 = vunpack.c.h.b16 %v2210
        %v3507 = vunpack.c.l.b16 %v2211
        %v3508 = vunpack.c.h.b16 %v2211
        %v3509 = vunpack.c.l.b16 %v2212
        %v3510 = vunpack.c.h.b16 %v2212
        %v3511 = vunpack.c.l.b16 %v2213
        %v3512 = vunpack.c.h.b16 %v2213
        %v3513 = vpack.c.b16 %v2747, %v2745
        %v3514 = vpack.c.b16 %v2748, %v2746
        %v3515 = vpack.c.b16 %v2751, %v2749
        %v3516 = vpack.c.b16 %v2752, %v2750
        %v3517 = vpack.c.b16 %v2755, %v2753
        %v3518 = vpack.c.b16 %v2756, %v2754
        %v3519 = vpack.c.b16 %v2759, %v2757
        %v3520 = vpack.c.b16 %v2760, %v2758
        %v3521 = vpack.c.b16 %v2763, %v2761
        %v3522 = vpack.c.b16 %v2764, %v2762
        %v3523 = vpack.c.b16 %v2767, %v2765
        %v3524 = vpack.c.b16 %v2768, %v2766
        %v3525 = vpack.c.b16 %v2771, %v2769
        %v3526 = vpack.c.b16 %v2772, %v2770
        %v3527 = vpack.c.b16 %v2775, %v2773
        %v3528 = vpack.c.b16 %v2776, %v2774
        %v3529 = vpack.c.b16 %v2779, %v2777
        %v3530 = vpack.c.b16 %v2780, %v2778
        %v3531 = vpack.c.b16 %v2783, %v2781
        %v3532 = vpack.c.b16 %v2784, %v2782
        %v3533 = vpack.c.b16 %v2787, %v2785
        %v3534 = vpack.c.b16 %v2788, %v2786
        %v3535 = vpack.c.b16 %v2791, %v2789
        %v3536 = vpack.c.b16 %v2792, %v2790
        %v3537 = vpack.c.b16 %v2795, %v2793
        %v3538 = vpack.c.b16 %v2796, %v2794
        %v3539 = vpack.c.b16 %v2799, %v2797
        %v3540 = vpack.c.b16 %v2800, %v2798
        %v3541 = vpack.c.b16 %v2803, %v2801
        %v3542 = vpack.c.b16 %v2804, %v2802
        %v3543 = vpack.c.b16 %v2807, %v2805
        %v3544 = vpack.c.b16 %v2808, %v2806
        %v3545 = vpack.c.b16 %v2811, %v2809
        %v3546 = vpack.c.b16 %v2812, %v2810
        %v3547 = vpack.c.b16 %v2815, %v2813
        %v3548 = vpack.c.b16 %v2816, %v2814
        %v3549 = vpack.c.b16 %v2819, %v2817
        %v3550 = vpack.c.b16 %v2820, %v2818
        %v3551 = vpack.c.b16 %v2823, %v2821
        %v3552 = vpack.c.b16 %v2824, %v2822
        %v3553 = vpack.c.b16 %v2827, %v2825
        %v3554 = vpack.c.b16 %v2828, %v2826
        %v3555 = vpack.c.b16 %v2831, %v2829
        %v3556 = vpack.c.b16 %v2832, %v2830
        %v3557 = vpack.c.b16 %v2835, %v2833
        %v3558 = vpack.c.b16 %v2836, %v2834
        %v3559 = vpack.c.b16 %v2839, %v2837
        %v3560 = vpack.c.b16 %v2840, %v2838
        %v3561 = vpack.c.b16 %v2843, %v2841
        %v3562 = vpack.c.b16 %v2844, %v2842
        %v3563 = vpack.c.b16 %v2847, %v2845
        %v3564 = vpack.c.b16 %v2848, %v2846
        %v3565 = vpack.c.b16 %v2851, %v2849
        %v3566 = vpack.c.b16 %v2852, %v2850
        %v3567 = vpack.c.b16 %v2855, %v2853
        %v3568 = vpack.c.b16 %v2856, %v2854
        %v3569 = vpack.c.b16 %v2859, %v2857
        %v3570 = vpack.c.b16 %v2860, %v2858
        %v3571 = vpack.c.b16 %v2863, %v2861
        %v3572 = vpack.c.b16 %v2864, %v2862
        %v3573 = vpack.c.b16 %v2867, %v2865
        %v3574 = vpack.c.b16 %v2868, %v2866
        %v3575 = vpack.c.b16 %v2871, %v2869
        %v3576 = vpack.c.b16 %v2872, %v2870
        %v3577 = vpack.c.b16 %v2875, %v2873
        %v3578 = vpack.c.b16 %v2876, %v2874
        %v3579 = vpack.c.b16 %v2879, %v2877
        %v3580 = vpack.c.b16 %v2880, %v2878
        %v3581 = vpack.c.b16 %v2883, %v2881
        %v3582 = vpack.c.b16 %v2884, %v2882
        %v3583 = vpack.c.b16 %v2887, %v2885
        %v3584 = vpack.c.b16 %v2888, %v2886
        %v3585 = vpack.c.b16 %v2891, %v2889
        %v3586 = vpack.c.b16 %v2892, %v2890
        %v3587 = vpack.c.b16 %v2895, %v2893
        %v3588 = vpack.c.b16 %v2896, %v2894
        %v3589 = vpack.c.b16 %v2899, %v2897
        %v3590 = vpack.c.b16 %v2900, %v2898
        %v3591 = vpack.c.b16 %v2903, %v2901
        %v3592 = vpack.c.b16 %v2904, %v2902
        %v3593 = vpack.c.b16 %v2907, %v2905
        %v3594 = vpack.c.b16 %v2908, %v2906
        %v3595 = vpack.c.b16 %v2911, %v2909
        %v3596 = vpack.c.b16 %v2912, %v2910
        %v3597 = vpack.c.b16 %v2915, %v2913
        %v3598 = vpack.c.b16 %v2916, %v2914
        %v3599 = vpack.c.b16 %v2919, %v2917
        %v3600 = vpack.c.b16 %v2920, %v2918
        %v3601 = vpack.c.b16 %v2923, %v2921
        %v3602 = vpack.c.b16 %v2924, %v2922
        %v3603 = vpack.c.b16 %v2927, %v2925
        %v3604 = vpack.c.b16 %v2928, %v2926
        %v3605 = vpack.c.b16 %v2931, %v2929
        %v3606 = vpack.c.b16 %v2932, %v2930
        %v3607 = vpack.c.b16 %v2935, %v2933
        %v3608 = vpack.c.b16 %v2936, %v2934
        %v3609 = vpack.c.b16 %v2939, %v2937
        %v3610 = vpack.c.b16 %v2940, %v2938
        %v3611 = vpack.c.b16 %v2943, %v2941
        %v3612 = vpack.c.b16 %v2944, %v2942
        %v3613 = vpack.c.b16 %v2947, %v2945
        %v3614 = vpack.c.b16 %v2948, %v2946
        %v3615 = vpack.c.b16 %v2951, %v2949
        %v3616 = vpack.c.b16 %v2952, %v2950
        %v3617 = vpack.c.b16 %v2955, %v2953
        %v3618 = vpack.c.b16 %v2956, %v2954
        %v3619 = vpack.c.b16 %v2959, %v2957
        %v3620 = vpack.c.b16 %v2960, %v2958
        %v3621 = vpack.c.b16 %v2963, %v2961
        %v3622 = vpack.c.b16 %v2964, %v2962
        %v3623 = vpack.c.b16 %v2967, %v2965
        %v3624 = vpack.c.b16 %v2968, %v2966
        %v3625 = vpack.c.b16 %v2971, %v2969
        %v3626 = vpack.c.b16 %v2972, %v2970
        %v3627 = vpack.c.b16 %v2975, %v2973
        %v3628 = vpack.c.b16 %v2976, %v2974
        %v3629 = vpack.c.b16 %v2979, %v2977
        %v3630 = vpack.c.b16 %v2980, %v2978
        %v3631 = vpack.c.b16 %v2983, %v2981
        %v3632 = vpack.c.b16 %v2984, %v2982
        %v3633 = vpack.c.b16 %v2987, %v2985
        %v3634 = vpack.c.b16 %v2988, %v2986
        %v3635 = vpack.c.b16 %v2991, %v2989
        %v3636 = vpack.c.b16 %v2992, %v2990
        %v3637 = vpack.c.b16 %v2995, %v2993
        %v3638 = vpack.c.b16 %v2996, %v2994
        %v3639 = vpack.c.b16 %v2999, %v2997
        %v3640 = vpack.c.b16 %v3000, %v2998
        %v3641 = vpack.c.b16 %v3003, %v3001
        %v3642 = vpack.c.b16 %v3004, %v3002
        %v3643 = vpack.c.b16 %v3007, %v3005
        %v3644 = vpack.c.b16 %v3008, %v3006
        %v3645 = vpack.c.b16 %v3011, %v3009
        %v3646 = vpack.c.b16 %v3012, %v3010
        %v3647 = vpack.c.b16 %v3015, %v3013
        %v3648 = vpack.c.b16 %v3016, %v3014
        %v3649 = vpack.c.b16 %v3019, %v3017
        %v3650 = vpack.c.b16 %v3020, %v3018
        %v3651 = vpack.c.b16 %v3023, %v3021
        %v3652 = vpack.c.b16 %v3024, %v3022
        %v3653 = vpack.c.b16 %v3027, %v3025
        %v3654 = vpack.c.b16 %v3028, %v3026
        %v3655 = vpack.c.b16 %v3031, %v3029
        %v3656 = vpack.c.b16 %v3032, %v3030
        %v3657 = vpack.c.b16 %v3035, %v3033
        %v3658 = vpack.c.b16 %v3036, %v3034
        %v3659 = vpack.c.b16 %v3039, %v3037
        %v3660 = vpack.c.b16 %v3040, %v3038
        %v3661 = vpack.c.b16 %v3043, %v3041
        %v3662 = vpack.c.b16 %v3044, %v3042
        %v3663 = vpack.c.b16 %v3047, %v3045
        %v3664 = vpack.c.b16 %v3048, %v3046
        %v3665 = vpack.c.b16 %v3051, %v3049
        %v3666 = vpack.c.b16 %v3052, %v3050
        %v3667 = vpack.c.b16 %v3055, %v3053
        %v3668 = vpack.c.b16 %v3056, %v3054
        %v3669 = vpack.c.b16 %v3059, %v3057
        %v3670 = vpack.c.b16 %v3060, %v3058
        %v3671 = vpack.c.b16 %v3063, %v3061
        %v3672 = vpack.c.b16 %v3064, %v3062
        %v3673 = vpack.c.b16 %v3067, %v3065
        %v3674 = vpack.c.b16 %v3068, %v3066
        %v3675 = vpack.c.b16 %v3071, %v3069
        %v3676 = vpack.c.b16 %v3072, %v3070
        %v3677 = vpack.c.b16 %v3075, %v3073
        %v3678 = vpack.c.b16 %v3076, %v3074
        %v3679 = vpack.c.b16 %v3079, %v3077
        %v3680 = vpack.c.b16 %v3080, %v3078
        %v3681 = vpack.c.b16 %v3083, %v3081
        %v3682 = vpack.c.b16 %v3084, %v3082
        %v3683 = vpack.c.b16 %v3087, %v3085
        %v3684 = vpack.c.b16 %v3088, %v3086
        %v3685 = vpack.c.b16 %v3091, %v3089
        %v3686 = vpack.c.b16 %v3092, %v3090
        %v3687 = vpack.c.b16 %v3095, %v3093
        %v3688 = vpack.c.b16 %v3096, %v3094
        %v3689 = vpack.c.b16 %v3099, %v3097
        %v3690 = vpack.c.b16 %v3100, %v3098
        %v3691 = vpack.c.b16 %v3103, %v3101
        %v3692 = vpack.c.b16 %v3104, %v3102
        %v3693 = vpack.c.b16 %v3107, %v3105
        %v3694 = vpack.c.b16 %v3108, %v3106
        %v3695 = vpack.c.b16 %v3111, %v3109
        %v3696 = vpack.c.b16 %v3112, %v3110
        %v3697 = vpack.c.b16 %v3115, %v3113
        %v3698 = vpack.c.b16 %v3116, %v3114
        %v3699 = vpack.c.b16 %v3119, %v3117
        %v3700 = vpack.c.b16 %v3120, %v3118
        %v3701 = vpack.c.b16 %v3123, %v3121
        %v3702 = vpack.c.b16 %v3124, %v3122
        %v3703 = vpack.c.b16 %v3127, %v3125
        %v3704 = vpack.c.b16 %v3128, %v3126
        %v3705 = vpack.c.b16 %v3131, %v3129
        %v3706 = vpack.c.b16 %v3132, %v3130
        %v3707 = vpack.c.b16 %v3135, %v3133
        %v3708 = vpack.c.b16 %v3136, %v3134
        %v3709 = vpack.c.b16 %v3139, %v3137
        %v3710 = vpack.c.b16 %v3140, %v3138
        %v3711 = vpack.c.b16 %v3143, %v3141
        %v3712 = vpack.c.b16 %v3144, %v3142
        %v3713 = vpack.c.b16 %v3147, %v3145
        %v3714 = vpack.c.b16 %v3148, %v3146
        %v3715 = vpack.c.b16 %v3151, %v3149
        %v3716 = vpack.c.b16 %v3152, %v3150
        %v3717 = vpack.c.b16 %v3155, %v3153
        %v3718 = vpack.c.b16 %v3156, %v3154
        %v3719 = vpack.c.b16 %v3159, %v3157
        %v3720 = vpack.c.b16 %v3160, %v3158
        %v3721 = vpack.c.b16 %v3163, %v3161
        %v3722 = vpack.c.b16 %v3164, %v3162
        %v3723 = vpack.c.b16 %v3167, %v3165
        %v3724 = vpack.c.b16 %v3168, %v3166
        %v3725 = vpack.c.b16 %v3171, %v3169
        %v3726 = vpack.c.b16 %v3172, %v3170
        %v3727 = vpack.c.b16 %v3175, %v3173
        %v3728 = vpack.c.b16 %v3176, %v3174
        %v3729 = vpack.c.b16 %v3179, %v3177
        %v3730 = vpack.c.b16 %v3180, %v3178
        %v3731 = vpack.c.b16 %v3183, %v3181
        %v3732 = vpack.c.b16 %v3184, %v3182
        %v3733 = vpack.c.b16 %v3187, %v3185
        %v3734 = vpack.c.b16 %v3188, %v3186
        %v3735 = vpack.c.b16 %v3191, %v3189
        %v3736 = vpack.c.b16 %v3192, %v3190
        %v3737 = vpack.c.b16 %v3195, %v3193
        %v3738 = vpack.c.b16 %v3196, %v3194
        %v3739 = vpack.c.b16 %v3199, %v3197
        %v3740 = vpack.c.b16 %v3200, %v3198
        %v3741 = vpack.c.b16 %v3203, %v3201
        %v3742 = vpack.c.b16 %v3204, %v3202
        %v3743 = vpack.c.b16 %v3207, %v3205
        %v3744 = vpack.c.b16 %v3208, %v3206
        %v3745 = vpack.c.b16 %v3211, %v3209
        %v3746 = vpack.c.b16 %v3212, %v3210
        %v3747 = vpack.c.b16 %v3215, %v3213
        %v3748 = vpack.c.b16 %v3216, %v3214
        %v3749 = vpack.c.b16 %v3219, %v3217
        %v3750 = vpack.c.b16 %v3220, %v3218
        %v3751 = vpack.c.b16 %v3223, %v3221
        %v3752 = vpack.c.b16 %v3224, %v3222
        %v3753 = vpack.c.b16 %v3227, %v3225
        %v3754 = vpack.c.b16 %v3228, %v3226
        %v3755 = vpack.c.b16 %v3231, %v3229
        %v3756 = vpack.c.b16 %v3232, %v3230
        %v3757 = vpack.c.b16 %v3235, %v3233
        %v3758 = vpack.c.b16 %v3236, %v3234
        %v3759 = vpack.c.b16 %v3239, %v3237
        %v3760 = vpack.c.b16 %v3240, %v3238
        %v3761 = vpack.c.b16 %v3243, %v3241
        %v3762 = vpack.c.b16 %v3244, %v3242
        %v3763 = vpack.c.b16 %v3247, %v3245
        %v3764 = vpack.c.b16 %v3248, %v3246
        %v3765 = vpack.c.b16 %v3251, %v3249
        %v3766 = vpack.c.b16 %v3252, %v3250
        %v3767 = vpack.c.b16 %v3255, %v3253
        %v3768 = vpack.c.b16 %v3256, %v3254
        %v3769 = vpack.c.b16 %v3259, %v3257
        %v3770 = vpack.c.b16 %v3260, %v3258
        %v3771 = vpack.c.b16 %v3263, %v3261
        %v3772 = vpack.c.b16 %v3264, %v3262
        %v3773 = vpack.c.b16 %v3267, %v3265
        %v3774 = vpack.c.b16 %v3268, %v3266
        %v3775 = vpack.c.b16 %v3271, %v3269
        %v3776 = vpack.c.b16 %v3272, %v3270
        %v3777 = vpack.c.b16 %v3275, %v3273
        %v3778 = vpack.c.b16 %v3276, %v3274
        %v3779 = vpack.c.b16 %v3279, %v3277
        %v3780 = vpack.c.b16 %v3280, %v3278
        %v3781 = vpack.c.b16 %v3283, %v3281
        %v3782 = vpack.c.b16 %v3284, %v3282
        %v3783 = vpack.c.b16 %v3287, %v3285
        %v3784 = vpack.c.b16 %v3288, %v3286
        %v3785 = vpack.c.b16 %v3291, %v3289
        %v3786 = vpack.c.b16 %v3292, %v3290
        %v3787 = vpack.c.b16 %v3295, %v3293
        %v3788 = vpack.c.b16 %v3296, %v3294
        %v3789 = vpack.c.b16 %v3299, %v3297
        %v3790 = vpack.c.b16 %v3300, %v3298
        %v3791 = vpack.c.b16 %v3303, %v3301
        %v3792 = vpack.c.b16 %v3304, %v3302
        %v3793 = vpack.c.b16 %v3307, %v3305
        %v3794 = vpack.c.b16 %v3308, %v3306
        %v3795 = vpack.c.b16 %v3311, %v3309
        %v3796 = vpack.c.b16 %v3312, %v3310
        %v3797 = vpack.c.b16 %v3315, %v3313
        %v3798 = vpack.c.b16 %v3316, %v3314
        %v3799 = vpack.c.b16 %v3319, %v3317
        %v3800 = vpack.c.b16 %v3320, %v3318
        %v3801 = vpack.c.b16 %v3323, %v3321
        %v3802 = vpack.c.b16 %v3324, %v3322
        %v3803 = vpack.c.b16 %v3327, %v3325
        %v3804 = vpack.c.b16 %v3328, %v3326
        %v3805 = vpack.c.b16 %v3331, %v3329
        %v3806 = vpack.c.b16 %v3332, %v3330
        %v3807 = vpack.c.b16 %v3335, %v3333
        %v3808 = vpack.c.b16 %v3336, %v3334
        %v3809 = vpack.c.b16 %v3339, %v3337
        %v3810 = vpack.c.b16 %v3340, %v3338
        %v3811 = vpack.c.b16 %v3343, %v3341
        %v3812 = vpack.c.b16 %v3344, %v3342
        %v3813 = vpack.c.b16 %v3347, %v3345
        %v3814 = vpack.c.b16 %v3348, %v3346
        %v3815 = vpack.c.b16 %v3351, %v3349
        %v3816 = vpack.c.b16 %v3352, %v3350
        %v3817 = vpack.c.b16 %v3355, %v3353
        %v3818 = vpack.c.b16 %v3356, %v3354
        %v3819 = vpack.c.b16 %v3359, %v3357
        %v3820 = vpack.c.b16 %v3360, %v3358
        %v3821 = vpack.c.b16 %v3363, %v3361
        %v3822 = vpack.c.b16 %v3364, %v3362
        %v3823 = vpack.c.b16 %v3367, %v3365
        %v3824 = vpack.c.b16 %v3368, %v3366
        %v3825 = vpack.c.b16 %v3371, %v3369
        %v3826 = vpack.c.b16 %v3372, %v3370
        %v3827 = vpack.c.b16 %v3375, %v3373
        %v3828 = vpack.c.b16 %v3376, %v3374
        %v3829 = vpack.c.b16 %v3379, %v3377
        %v3830 = vpack.c.b16 %v3380, %v3378
        %v3831 = vpack.c.b16 %v3383, %v3381
        %v3832 = vpack.c.b16 %v3384, %v3382
        %v3833 = vpack.c.b16 %v3387, %v3385
        %v3834 = vpack.c.b16 %v3388, %v3386
        %v3835 = vpack.c.b16 %v3391, %v3389
        %v3836 = vpack.c.b16 %v3392, %v3390
        %v3837 = vpack.c.b16 %v3395, %v3393
        %v3838 = vpack.c.b16 %v3396, %v3394
        %v3839 = vpack.c.b16 %v3399, %v3397
        %v3840 = vpack.c.b16 %v3400, %v3398
        %v3841 = vpack.c.b16 %v3403, %v3401
        %v3842 = vpack.c.b16 %v3404, %v3402
        %v3843 = vpack.c.b16 %v3407, %v3405
        %v3844 = vpack.c.b16 %v3408, %v3406
        %v3845 = vpack.c.b16 %v3411, %v3409
        %v3846 = vpack.c.b16 %v3412, %v3410
        %v3847 = vpack.c.b16 %v3415, %v3413
        %v3848 = vpack.c.b16 %v3416, %v3414
        %v3849 = vpack.c.b16 %v3419, %v3417
        %v3850 = vpack.c.b16 %v3420, %v3418
        %v3851 = vpack.c.b16 %v3423, %v3421
        %v3852 = vpack.c.b16 %v3424, %v3422
        %v3853 = vpack.c.b16 %v3427, %v3425
        %v3854 = vpack.c.b16 %v3428, %v3426
        %v3855 = vpack.c.b16 %v3431, %v3429
        %v3856 = vpack.c.b16 %v3432, %v3430
        %v3857 = vpack.c.b16 %v3435, %v3433
        %v3858 = vpack.c.b16 %v3436, %v3434
        %v3859 = vpack.c.b16 %v3439, %v3437
        %v3860 = vpack.c.b16 %v3440, %v3438
        %v3861 = vpack.c.b16 %v3443, %v3441
        %v3862 = vpack.c.b16 %v3444, %v3442
        %v3863 = vpack.c.b16 %v3447, %v3445
        %v3864 = vpack.c.b16 %v3448, %v3446
        %v3865 = vpack.c.b16 %v3451, %v3449
        %v3866 = vpack.c.b16 %v3452, %v3450
        %v3867 = vpack.c.b16 %v3455, %v3453
        %v3868 = vpack.c.b16 %v3456, %v3454
        %v3869 = vpack.c.b16 %v3459, %v3457
        %v3870 = vpack.c.b16 %v3460, %v3458
        %v3871 = vpack.c.b16 %v3463, %v3461
        %v3872 = vpack.c.b16 %v3464, %v3462
        %v3873 = vpack.c.b16 %v3467, %v3465
        %v3874 = vpack.c.b16 %v3468, %v3466
        %v3875 = vpack.c.b16 %v3471, %v3469
        %v3876 = vpack.c.b16 %v3472, %v3470
        %v3877 = vpack.c.b16 %v3475, %v3473
        %v3878 = vpack.c.b16 %v3476, %v3474
        %v3879 = vpack.c.b16 %v3479, %v3477
        %v3880 = vpack.c.b16 %v3480, %v3478
        %v3881 = vpack.c.b16 %v3483, %v3481
        %v3882 = vpack.c.b16 %v3484, %v3482
        %v3883 = vpack.c.b16 %v3487, %v3485
        %v3884 = vpack.c.b16 %v3488, %v3486
        %v3885 = vpack.c.b16 %v3491, %v3489
        %v3886 = vpack.c.b16 %v3492, %v3490
        %v3887 = vpack.c.b16 %v3495, %v3493
        %v3888 = vpack.c.b16 %v3496, %v3494
        %v3889 = vpack.c.b16 %v3499, %v3497
        %v3890 = vpack.c.b16 %v3500, %v3498
        %v3891 = vpack.c.b16 %v3503, %v3501
        %v3892 = vpack.c.b16 %v3504, %v3502
        %v3893 = vpack.c.b16 %v3507, %v3505
        %v3894 = vpack.c.b16 %v3508, %v3506
        %v3895 = vpack.c.b16 %v3511, %v3509
        %v3896 = vpack.c.b16 %v3512, %v3510
        %v4282 = vlaneseq
        %v4283 = vshrl.u32 %v4282, 7
        %v4284 = vsub.s32 0, %v4283
        %v4285 = vrot.slane %v522, %v4284
        %v4286 = vlaneseq
        %v4287 = vshrl.u32 %v4286, 7
        %v4288 = vsub.s32 1, %v4287
        %v4289 = vrot.slane %v522, %v4288
        %4292 = vmatprep.subr.bf16.mxu0 %v3514
        %4293 = vmatpush1.bf16.msra.mxu0 %v3513
        %4294 = vmatprep.subr.bf16.mxu0 %v3516
        %4295 = vmatpush1.bf16.msra.mxu0 %v3515
        %4296 = vmatprep.subr.bf16.mxu0 %v3518
        %4297 = vmatpush1.bf16.msra.mxu0 %v3517
        %4298 = vmatprep.subr.bf16.mxu0 %v3520
        %4299 = vmatpush1.bf16.msra.mxu0 %v3519
        %4300 = vmatprep.subr.bf16.mxu0 %v3522
        %4301 = vmatpush1.bf16.msra.mxu0 %v3521
        %4302 = vmatprep.subr.bf16.mxu0 %v3524
        %4303 = vmatpush1.bf16.msra.mxu0 %v3523
        %4304 = vmatprep.subr.bf16.mxu0 %v3526
        %4305 = vmatpush1.bf16.msra.mxu0 %v3525
        %4306 = vmatprep.subr.bf16.mxu0 %v3528
        %4307 = vmatpush1.bf16.msra.mxu0 %v3527
        %4308 = vmatprep.subr.bf16.mxu0 %v3530
        %4309 = vmatpush1.bf16.msra.mxu0 %v3529
        %4310 = vmatprep.subr.bf16.mxu0 %v3532
        %4311 = vmatpush1.bf16.msra.mxu0 %v3531
        %4312 = vmatprep.subr.bf16.mxu0 %v3534
        %4313 = vmatpush1.bf16.msra.mxu0 %v3533
        %4314 = vmatprep.subr.bf16.mxu0 %v3536
        %4315 = vmatpush1.bf16.msra.mxu0 %v3535
        %4316 = vmatprep.subr.bf16.mxu0 %v3538
        %4317 = vmatpush1.bf16.msra.mxu0 %v3537
        %4318 = vmatprep.subr.bf16.mxu0 %v3540
        %4319 = vmatpush1.bf16.msra.mxu0 %v3539
        %4320 = vmatprep.subr.bf16.mxu0 %v3542
        %4321 = vmatpush1.bf16.msra.mxu0 %v3541
        %4322 = vmatprep.subr.bf16.mxu0 %v3544
        %4323 = vmatpush1.bf16.msra.mxu0 %v3543
        %4324 = vmatprep.mubr.bf16.mxu0 %v2338
        %4325 = vmatmul.mubr.bf16.gmra.mrb[0].mxu0 %v2337
        %v4326 = vpop.f32.mrb[0].mxu0
        %v4327 = vadd.f32 %v4285, %v4326
        %v4328 = vpop.f32.mrb[0].mxu0
        %v4329 = vadd.f32 %v4289, %v4328
        %v4330 = vpop.f32.mrb[0].mxu0
        %v4331 = vpop.f32.mrb[0].mxu0
        %4332 = vdwg.mxu0
        %4333 = vmatprep.subr.bf16.mxu0 %v3546
        %4334 = vmatpush1.bf16.msra.mxu0 %v3545
        %4335 = vmatprep.subr.bf16.mxu0 %v3548
        %4336 = vmatpush1.bf16.msra.mxu0 %v3547
        %4337 = vmatprep.subr.bf16.mxu0 %v3550
        %4338 = vmatpush1.bf16.msra.mxu0 %v3549
        %4339 = vmatprep.subr.bf16.mxu0 %v3552
        %4340 = vmatpush1.bf16.msra.mxu0 %v3551
        %4341 = vmatprep.subr.bf16.mxu0 %v3554
        %4342 = vmatpush1.bf16.msra.mxu0 %v3553
        %4343 = vmatprep.subr.bf16.mxu0 %v3556
        %4344 = vmatpush1.bf16.msra.mxu0 %v3555
        %4345 = vmatprep.subr.bf16.mxu0 %v3558
        %4346 = vmatpush1.bf16.msra.mxu0 %v3557
        %4347 = vmatprep.subr.bf16.mxu0 %v3560
        %4348 = vmatpush1.bf16.msra.mxu0 %v3559
        %4349 = vmatprep.subr.bf16.mxu0 %v3562
        %4350 = vmatpush1.bf16.msra.mxu0 %v3561
        %4351 = vmatprep.subr.bf16.mxu0 %v3564
        %4352 = vmatpush1.bf16.msra.mxu0 %v3563
        %4353 = vmatprep.subr.bf16.mxu0 %v3566
        %4354 = vmatpush1.bf16.msra.mxu0 %v3565
        %4355 = vmatprep.subr.bf16.mxu0 %v3568
        %4356 = vmatpush1.bf16.msra.mxu0 %v3567
        %4357 = vmatprep.subr.bf16.mxu0 %v3570
        %4358 = vmatpush1.bf16.msra.mxu0 %v3569
        %4359 = vmatprep.subr.bf16.mxu0 %v3572
        %4360 = vmatpush1.bf16.msra.mxu0 %v3571
        %4361 = vmatprep.subr.bf16.mxu0 %v3574
        %4362 = vmatpush1.bf16.msra.mxu0 %v3573
        %4363 = vmatprep.subr.bf16.mxu0 %v3576
        %4364 = vmatpush1.bf16.msra.mxu0 %v3575
        %4365 = vmatprep.mubr.bf16.mxu0 %v2340
        %4366 = vmatmul.mubr.bf16.gmra.mrb[0].mxu0 %v2339
        %v4367 = vpop.f32.mrb[0].mxu0
        %v4368 = vadd.f32 %v4327, %v4367
        %v4369 = vpop.f32.mrb[0].mxu0
        %v4370 = vadd.f32 %v4329, %v4369
        %v4371 = vpop.f32.mrb[0].mxu0
        %v4372 = vpop.f32.mrb[0].mxu0
        %4373 = vdwg.mxu0
        %4374 = vmatprep.subr.bf16.mxu0 %v3578
        %4375 = vmatpush1.bf16.msra.mxu0 %v3577
        %4376 = vmatprep.subr.bf16.mxu0 %v3580
        %4377 = vmatpush1.bf16.msra.mxu0 %v3579
        %4378 = vmatprep.subr.bf16.mxu0 %v3582
        %4379 = vmatpush1.bf16.msra.mxu0 %v3581
        %4380 = vmatprep.subr.bf16.mxu0 %v3584
        %4381 = vmatpush1.bf16.msra.mxu0 %v3583
        %4382 = vmatprep.subr.bf16.mxu0 %v3586
        %4383 = vmatpush1.bf16.msra.mxu0 %v3585
        %4384 = vmatprep.subr.bf16.mxu0 %v3588
        %4385 = vmatpush1.bf16.msra.mxu0 %v3587
        %4386 = vmatprep.subr.bf16.mxu0 %v3590
        %4387 = vmatpush1.bf16.msra.mxu0 %v3589
        %4388 = vmatprep.subr.bf16.mxu0 %v3592
        %4389 = vmatpush1.bf16.msra.mxu0 %v3591
        %4390 = vmatprep.subr.bf16.mxu0 %v3594
        %4391 = vmatpush1.bf16.msra.mxu0 %v3593
        %4392 = vmatprep.subr.bf16.mxu0 %v3596
        %4393 = vmatpush1.bf16.msra.mxu0 %v3595
        %4394 = vmatprep.subr.bf16.mxu0 %v3598
        %4395 = vmatpush1.bf16.msra.mxu0 %v3597
        %4396 = vmatprep.subr.bf16.mxu0 %v3600
        %4397 = vmatpush1.bf16.msra.mxu0 %v3599
        %4398 = vmatprep.subr.bf16.mxu0 %v3602
        %4399 = vmatpush1.bf16.msra.mxu0 %v3601
        %4400 = vmatprep.subr.bf16.mxu0 %v3604
        %4401 = vmatpush1.bf16.msra.mxu0 %v3603
        %4402 = vmatprep.subr.bf16.mxu0 %v3606
        %4403 = vmatpush1.bf16.msra.mxu0 %v3605
        %4404 = vmatprep.subr.bf16.mxu0 %v3608
        %4405 = vmatpush1.bf16.msra.mxu0 %v3607
        %4406 = vmatprep.mubr.bf16.mxu0 %v2342
        %4407 = vmatmul.mubr.bf16.gmra.mrb[0].mxu0 %v2341
        %v4408 = vpop.f32.mrb[0].mxu0
        %v4409 = vadd.f32 %v4368, %v4408
        %v4410 = vpop.f32.mrb[0].mxu0
        %v4411 = vadd.f32 %v4370, %v4410
        %v4412 = vpop.f32.mrb[0].mxu0
        %v4413 = vpop.f32.mrb[0].mxu0
        %4414 = vdwg.mxu0
        %4415 = vmatprep.subr.bf16.mxu0 %v3610
        %4416 = vmatpush1.bf16.msra.mxu0 %v3609
        %4417 = vmatprep.subr.bf16.mxu0 %v3612
        %4418 = vmatpush1.bf16.msra.mxu0 %v3611
        %4419 = vmatprep.subr.bf16.mxu0 %v3614
        %4420 = vmatpush1.bf16.msra.mxu0 %v3613
        %4421 = vmatprep.subr.bf16.mxu0 %v3616
        %4422 = vmatpush1.bf16.msra.mxu0 %v3615
        %4423 = vmatprep.subr.bf16.mxu0 %v3618
        %4424 = vmatpush1.bf16.msra.mxu0 %v3617
        %4425 = vmatprep.subr.bf16.mxu0 %v3620
        %4426 = vmatpush1.bf16.msra.mxu0 %v3619
        %4427 = vmatprep.subr.bf16.mxu0 %v3622
        %4428 = vmatpush1.bf16.msra.mxu0 %v3621
        %4429 = vmatprep.subr.bf16.mxu0 %v3624
        %4430 = vmatpush1.bf16.msra.mxu0 %v3623
        %4431 = vmatprep.subr.bf16.mxu0 %v3626
        %4432 = vmatpush1.bf16.msra.mxu0 %v3625
        %4433 = vmatprep.subr.bf16.mxu0 %v3628
        %4434 = vmatpush1.bf16.msra.mxu0 %v3627
        %4435 = vmatprep.subr.bf16.mxu0 %v3630
        %4436 = vmatpush1.bf16.msra.mxu0 %v3629
        %4437 = vmatprep.subr.bf16.mxu0 %v3632
        %4438 = vmatpush1.bf16.msra.mxu0 %v3631
        %4439 = vmatprep.subr.bf16.mxu0 %v3634
        %4440 = vmatpush1.bf16.msra.mxu0 %v3633
        %4441 = vmatprep.subr.bf16.mxu0 %v3636
        %4442 = vmatpush1.bf16.msra.mxu0 %v3635
        %4443 = vmatprep.subr.bf16.mxu0 %v3638
        %4444 = vmatpush1.bf16.msra.mxu0 %v3637
        %4445 = vmatprep.subr.bf16.mxu0 %v3640
        %4446 = vmatpush1.bf16.msra.mxu0 %v3639
        %4447 = vmatprep.mubr.bf16.mxu0 %v2344
        %4448 = vmatmul.mubr.bf16.gmra.mrb[0].mxu0 %v2343
        %v4449 = vpop.f32.mrb[0].mxu0
        %v4450 = vadd.f32 %v4409, %v4449
        %v4451 = vpop.f32.mrb[0].mxu0
        %v4452 = vadd.f32 %v4411, %v4451
        %v4453 = vpop.f32.mrb[0].mxu0
        %v4454 = vpop.f32.mrb[0].mxu0
        %4455 = vdwg.mxu0
        %4456 = vmatprep.subr.bf16.mxu0 %v3642
        %4457 = vmatpush1.bf16.msra.mxu0 %v3641
        %4458 = vmatprep.subr.bf16.mxu0 %v3644
        %4459 = vmatpush1.bf16.msra.mxu0 %v3643
        %4460 = vmatprep.subr.bf16.mxu0 %v3646
        %4461 = vmatpush1.bf16.msra.mxu0 %v3645
        %4462 = vmatprep.subr.bf16.mxu0 %v3648
        %4463 = vmatpush1.bf16.msra.mxu0 %v3647
        %4464 = vmatprep.subr.bf16.mxu0 %v3650
        %4465 = vmatpush1.bf16.msra.mxu0 %v3649
        %4466 = vmatprep.subr.bf16.mxu0 %v3652
        %4467 = vmatpush1.bf16.msra.mxu0 %v3651
        %4468 = vmatprep.subr.bf16.mxu0 %v3654
        %4469 = vmatpush1.bf16.msra.mxu0 %v3653
        %4470 = vmatprep.subr.bf16.mxu0 %v3656
        %4471 = vmatpush1.bf16.msra.mxu0 %v3655
        %4472 = vmatprep.subr.bf16.mxu0 %v3658
        %4473 = vmatpush1.bf16.msra.mxu0 %v3657
        %4474 = vmatprep.subr.bf16.mxu0 %v3660
        %4475 = vmatpush1.bf16.msra.mxu0 %v3659
        %4476 = vmatprep.subr.bf16.mxu0 %v3662
        %4477 = vmatpush1.bf16.msra.mxu0 %v3661
        %4478 = vmatprep.subr.bf16.mxu0 %v3664
        %4479 = vmatpush1.bf16.msra.mxu0 %v3663
        %4480 = vmatprep.subr.bf16.mxu0 %v3666
        %4481 = vmatpush1.bf16.msra.mxu0 %v3665
        %4482 = vmatprep.subr.bf16.mxu0 %v3668
        %4483 = vmatpush1.bf16.msra.mxu0 %v3667
        %4484 = vmatprep.subr.bf16.mxu0 %v3670
        %4485 = vmatpush1.bf16.msra.mxu0 %v3669
        %4486 = vmatprep.subr.bf16.mxu0 %v3672
        %4487 = vmatpush1.bf16.msra.mxu0 %v3671
        %4488 = vmatprep.mubr.bf16.mxu0 %v2346
        %4489 = vmatmul.mubr.bf16.gmra.mrb[0].mxu0 %v2345
        %v4490 = vpop.f32.mrb[0].mxu0
        %v4491 = vadd.f32 %v4450, %v4490
        %v4492 = vpop.f32.mrb[0].mxu0
        %v4493 = vadd.f32 %v4452, %v4492
        %v4494 = vpop.f32.mrb[0].mxu0
        %v4495 = vpop.f32.mrb[0].mxu0
        %4496 = vdwg.mxu0
        %4497 = vmatprep.subr.bf16.mxu0 %v3674
        %4498 = vmatpush1.bf16.msra.mxu0 %v3673
        %4499 = vmatprep.subr.bf16.mxu0 %v3676
        %4500 = vmatpush1.bf16.msra.mxu0 %v3675
        %4501 = vmatprep.subr.bf16.mxu0 %v3678
        %4502 = vmatpush1.bf16.msra.mxu0 %v3677
        %4503 = vmatprep.subr.bf16.mxu0 %v3680
        %4504 = vmatpush1.bf16.msra.mxu0 %v3679
        %4505 = vmatprep.subr.bf16.mxu0 %v3682
        %4506 = vmatpush1.bf16.msra.mxu0 %v3681
        %4507 = vmatprep.subr.bf16.mxu0 %v3684
        %4508 = vmatpush1.bf16.msra.mxu0 %v3683
        %4509 = vmatprep.subr.bf16.mxu0 %v3686
        %4510 = vmatpush1.bf16.msra.mxu0 %v3685
        %4511 = vmatprep.subr.bf16.mxu0 %v3688
        %4512 = vmatpush1.bf16.msra.mxu0 %v3687
        %4513 = vmatprep.subr.bf16.mxu0 %v3690
        %4514 = vmatpush1.bf16.msra.mxu0 %v3689
        %4515 = vmatprep.subr.bf16.mxu0 %v3692
        %4516 = vmatpush1.bf16.msra.mxu0 %v3691
        %4517 = vmatprep.subr.bf16.mxu0 %v3694
        %4518 = vmatpush1.bf16.msra.mxu0 %v3693
        %4519 = vmatprep.subr.bf16.mxu0 %v3696
        %4520 = vmatpush1.bf16.msra.mxu0 %v3695
        %4521 = vmatprep.subr.bf16.mxu0 %v3698
        %4522 = vmatpush1.bf16.msra.mxu0 %v3697
        %4523 = vmatprep.subr.bf16.mxu0 %v3700
        %4524 = vmatpush1.bf16.msra.mxu0 %v3699
        %4525 = vmatprep.subr.bf16.mxu0 %v3702
        %4526 = vmatpush1.bf16.msra.mxu0 %v3701
        %4527 = vmatprep.subr.bf16.mxu0 %v3704
        %4528 = vmatpush1.bf16.msra.mxu0 %v3703
        %4529 = vmatprep.mubr.bf16.mxu0 %v2348
        %4530 = vmatmul.mubr.bf16.gmra.mrb[0].mxu0 %v2347
        %v4531 = vpop.f32.mrb[0].mxu0
        %v4532 = vadd.f32 %v4491, %v4531
        %v4533 = vpop.f32.mrb[0].mxu0
        %v4534 = vadd.f32 %v4493, %v4533
        %v4535 = vpop.f32.mrb[0].mxu0
        %v4536 = vpop.f32.mrb[0].mxu0
        %4537 = vdwg.mxu0
        %4538 = vmatprep.subr.bf16.mxu0 %v3706
        %4539 = vmatpush1.bf16.msra.mxu0 %v3705
        %4540 = vmatprep.subr.bf16.mxu0 %v3708
        %4541 = vmatpush1.bf16.msra.mxu0 %v3707
        %4542 = vmatprep.subr.bf16.mxu0 %v3710
        %4543 = vmatpush1.bf16.msra.mxu0 %v3709
        %4544 = vmatprep.subr.bf16.mxu0 %v3712
        %4545 = vmatpush1.bf16.msra.mxu0 %v3711
        %4546 = vmatprep.subr.bf16.mxu0 %v3714
        %4547 = vmatpush1.bf16.msra.mxu0 %v3713
        %4548 = vmatprep.subr.bf16.mxu0 %v3716
        %4549 = vmatpush1.bf16.msra.mxu0 %v3715
        %4550 = vmatprep.subr.bf16.mxu0 %v3718
        %4551 = vmatpush1.bf16.msra.mxu0 %v3717
        %4552 = vmatprep.subr.bf16.mxu0 %v3720
        %4553 = vmatpush1.bf16.msra.mxu0 %v3719
        %4554 = vmatprep.subr.bf16.mxu0 %v3722
        %4555 = vmatpush1.bf16.msra.mxu0 %v3721
        %4556 = vmatprep.subr.bf16.mxu0 %v3724
        %4557 = vmatpush1.bf16.msra.mxu0 %v3723
        %4558 = vmatprep.subr.bf16.mxu0 %v3726
        %4559 = vmatpush1.bf16.msra.mxu0 %v3725
        %4560 = vmatprep.subr.bf16.mxu0 %v3728
        %4561 = vmatpush1.bf16.msra.mxu0 %v3727
        %4562 = vmatprep.subr.bf16.mxu0 %v3730
        %4563 = vmatpush1.bf16.msra.mxu0 %v3729
        %4564 = vmatprep.subr.bf16.mxu0 %v3732
        %4565 = vmatpush1.bf16.msra.mxu0 %v3731
        %4566 = vmatprep.subr.bf16.mxu0 %v3734
        %4567 = vmatpush1.bf16.msra.mxu0 %v3733
        %4568 = vmatprep.subr.bf16.mxu0 %v3736
        %4569 = vmatpush1.bf16.msra.mxu0 %v3735
        %4570 = vmatprep.mubr.bf16.mxu0 %v2350
        %4571 = vmatmul.mubr.bf16.gmra.mrb[0].mxu0 %v2349
        %v4572 = vpop.f32.mrb[0].mxu0
        %v4573 = vadd.f32 %v4532, %v4572
        %v4574 = vpop.f32.mrb[0].mxu0
        %v4575 = vadd.f32 %v4534, %v4574
        %v4576 = vpop.f32.mrb[0].mxu0
        %v4577 = vpop.f32.mrb[0].mxu0
        %4578 = vdwg.mxu0
        %4579 = vmatprep.subr.bf16.mxu0 %v3738
        %4580 = vmatpush1.bf16.msra.mxu0 %v3737
        %4581 = vmatprep.subr.bf16.mxu0 %v3740
        %4582 = vmatpush1.bf16.msra.mxu0 %v3739
        %4583 = vmatprep.subr.bf16.mxu0 %v3742
        %4584 = vmatpush1.bf16.msra.mxu0 %v3741
        %4585 = vmatprep.subr.bf16.mxu0 %v3744
        %4586 = vmatpush1.bf16.msra.mxu0 %v3743
        %4587 = vmatprep.subr.bf16.mxu0 %v3746
        %4588 = vmatpush1.bf16.msra.mxu0 %v3745
        %4589 = vmatprep.subr.bf16.mxu0 %v3748
        %4590 = vmatpush1.bf16.msra.mxu0 %v3747
        %4591 = vmatprep.subr.bf16.mxu0 %v3750
        %4592 = vmatpush1.bf16.msra.mxu0 %v3749
        %4593 = vmatprep.subr.bf16.mxu0 %v3752
        %4594 = vmatpush1.bf16.msra.mxu0 %v3751
        %4595 = vmatprep.subr.bf16.mxu0 %v3754
        %4596 = vmatpush1.bf16.msra.mxu0 %v3753
        %4597 = vmatprep.subr.bf16.mxu0 %v3756
        %4598 = vmatpush1.bf16.msra.mxu0 %v3755
        %4599 = vmatprep.subr.bf16.mxu0 %v3758
        %4600 = vmatpush1.bf16.msra.mxu0 %v3757
        %4601 = vmatprep.subr.bf16.mxu0 %v3760
        %4602 = vmatpush1.bf16.msra.mxu0 %v3759
        %4603 = vmatprep.subr.bf16.mxu0 %v3762
        %4604 = vmatpush1.bf16.msra.mxu0 %v3761
        %4605 = vmatprep.subr.bf16.mxu0 %v3764
        %4606 = vmatpush1.bf16.msra.mxu0 %v3763
        %4607 = vmatprep.subr.bf16.mxu0 %v3766
        %4608 = vmatpush1.bf16.msra.mxu0 %v3765
        %4609 = vmatprep.subr.bf16.mxu0 %v3768
        %4610 = vmatpush1.bf16.msra.mxu0 %v3767
        %4611 = vmatprep.mubr.bf16.mxu0 %v2352
        %4612 = vmatmul.mubr.bf16.gmra.mrb[0].mxu0 %v2351
        %v4613 = vpop.f32.mrb[0].mxu0
        %v4614 = vadd.f32 %v4573, %v4613
        %v4615 = vpop.f32.mrb[0].mxu0
        %v4616 = vadd.f32 %v4575, %v4615
        %v4617 = vpop.f32.mrb[0].mxu0
        %v4618 = vpop.f32.mrb[0].mxu0
        %4619 = vdwg.mxu0
        %4620 = vmatprep.subr.bf16.mxu0 %v3770
        %4621 = vmatpush1.bf16.msra.mxu0 %v3769
        %4622 = vmatprep.subr.bf16.mxu0 %v3772
        %4623 = vmatpush1.bf16.msra.mxu0 %v3771
        %4624 = vmatprep.subr.bf16.mxu0 %v3774
        %4625 = vmatpush1.bf16.msra.mxu0 %v3773
        %4626 = vmatprep.subr.bf16.mxu0 %v3776
        %4627 = vmatpush1.bf16.msra.mxu0 %v3775
        %4628 = vmatprep.subr.bf16.mxu0 %v3778
        %4629 = vmatpush1.bf16.msra.mxu0 %v3777
        %4630 = vmatprep.subr.bf16.mxu0 %v3780
        %4631 = vmatpush1.bf16.msra.mxu0 %v3779
        %4632 = vmatprep.subr.bf16.mxu0 %v3782
        %4633 = vmatpush1.bf16.msra.mxu0 %v3781
        %4634 = vmatprep.subr.bf16.mxu0 %v3784
        %4635 = vmatpush1.bf16.msra.mxu0 %v3783
        %4636 = vmatprep.subr.bf16.mxu0 %v3786
        %4637 = vmatpush1.bf16.msra.mxu0 %v3785
        %4638 = vmatprep.subr.bf16.mxu0 %v3788
        %4639 = vmatpush1.bf16.msra.mxu0 %v3787
        %4640 = vmatprep.subr.bf16.mxu0 %v3790
        %4641 = vmatpush1.bf16.msra.mxu0 %v3789
        %4642 = vmatprep.subr.bf16.mxu0 %v3792
        %4643 = vmatpush1.bf16.msra.mxu0 %v3791
        %4644 = vmatprep.subr.bf16.mxu0 %v3794
        %4645 = vmatpush1.bf16.msra.mxu0 %v3793
        %4646 = vmatprep.subr.bf16.mxu0 %v3796
        %4647 = vmatpush1.bf16.msra.mxu0 %v3795
        %4648 = vmatprep.subr.bf16.mxu0 %v3798
        %4649 = vmatpush1.bf16.msra.mxu0 %v3797
        %4650 = vmatprep.subr.bf16.mxu0 %v3800
        %4651 = vmatpush1.bf16.msra.mxu0 %v3799
        %4652 = vmatprep.mubr.bf16.mxu0 %v2354
        %4653 = vmatmul.mubr.bf16.gmra.mrb[0].mxu0 %v2353
        %v4654 = vpop.f32.mrb[0].mxu0
        %v4655 = vadd.f32 %v4614, %v4654
        %v4656 = vpop.f32.mrb[0].mxu0
        %v4657 = vadd.f32 %v4616, %v4656
        %v4658 = vpop.f32.mrb[0].mxu0
        %v4659 = vpop.f32.mrb[0].mxu0
        %4660 = vdwg.mxu0
        %4661 = vmatprep.subr.bf16.mxu0 %v3802
        %4662 = vmatpush1.bf16.msra.mxu0 %v3801
        %4663 = vmatprep.subr.bf16.mxu0 %v3804
        %4664 = vmatpush1.bf16.msra.mxu0 %v3803
        %4665 = vmatprep.subr.bf16.mxu0 %v3806
        %4666 = vmatpush1.bf16.msra.mxu0 %v3805
        %4667 = vmatprep.subr.bf16.mxu0 %v3808
        %4668 = vmatpush1.bf16.msra.mxu0 %v3807
        %4669 = vmatprep.subr.bf16.mxu0 %v3810
        %4670 = vmatpush1.bf16.msra.mxu0 %v3809
        %4671 = vmatprep.subr.bf16.mxu0 %v3812
        %4672 = vmatpush1.bf16.msra.mxu0 %v3811
        %4673 = vmatprep.subr.bf16.mxu0 %v3814
        %4674 = vmatpush1.bf16.msra.mxu0 %v3813
        %4675 = vmatprep.subr.bf16.mxu0 %v3816
        %4676 = vmatpush1.bf16.msra.mxu0 %v3815
        %4677 = vmatprep.subr.bf16.mxu0 %v3818
        %4678 = vmatpush1.bf16.msra.mxu0 %v3817
        %4679 = vmatprep.subr.bf16.mxu0 %v3820
        %4680 = vmatpush1.bf16.msra.mxu0 %v3819
        %4681 = vmatprep.subr.bf16.mxu0 %v3822
        %4682 = vmatpush1.bf16.msra.mxu0 %v3821
        %4683 = vmatprep.subr.bf16.mxu0 %v3824
        %4684 = vmatpush1.bf16.msra.mxu0 %v3823
        %4685 = vmatprep.subr.bf16.mxu0 %v3826
        %4686 = vmatpush1.bf16.msra.mxu0 %v3825
        %4687 = vmatprep.subr.bf16.mxu0 %v3828
        %4688 = vmatpush1.bf16.msra.mxu0 %v3827
        %4689 = vmatprep.subr.bf16.mxu0 %v3830
        %4690 = vmatpush1.bf16.msra.mxu0 %v3829
        %4691 = vmatprep.subr.bf16.mxu0 %v3832
        %4692 = vmatpush1.bf16.msra.mxu0 %v3831
        %4693 = vmatprep.mubr.bf16.mxu0 %v2356
        %4694 = vmatmul.mubr.bf16.gmra.mrb[0].mxu0 %v2355
        %v4695 = vpop.f32.mrb[0].mxu0
        %v4696 = vadd.f32 %v4655, %v4695
        %v4697 = vpop.f32.mrb[0].mxu0
        %v4698 = vadd.f32 %v4657, %v4697
        %v4699 = vpop.f32.mrb[0].mxu0
        %v4700 = vpop.f32.mrb[0].mxu0
        %4701 = vdwg.mxu0
        %4702 = vmatprep.subr.bf16.mxu0 %v3834
        %4703 = vmatpush1.bf16.msra.mxu0 %v3833
        %4704 = vmatprep.subr.bf16.mxu0 %v3836
        %4705 = vmatpush1.bf16.msra.mxu0 %v3835
        %4706 = vmatprep.subr.bf16.mxu0 %v3838
        %4707 = vmatpush1.bf16.msra.mxu0 %v3837
        %4708 = vmatprep.subr.bf16.mxu0 %v3840
        %4709 = vmatpush1.bf16.msra.mxu0 %v3839
        %4710 = vmatprep.subr.bf16.mxu0 %v3842
        %4711 = vmatpush1.bf16.msra.mxu0 %v3841
        %4712 = vmatprep.subr.bf16.mxu0 %v3844
        %4713 = vmatpush1.bf16.msra.mxu0 %v3843
        %4714 = vmatprep.subr.bf16.mxu0 %v3846
        %4715 = vmatpush1.bf16.msra.mxu0 %v3845
        %4716 = vmatprep.subr.bf16.mxu0 %v3848
        %4717 = vmatpush1.bf16.msra.mxu0 %v3847
        %4718 = vmatprep.subr.bf16.mxu0 %v3850
        %4719 = vmatpush1.bf16.msra.mxu0 %v3849
        %4720 = vmatprep.subr.bf16.mxu0 %v3852
        %4721 = vmatpush1.bf16.msra.mxu0 %v3851
        %4722 = vmatprep.subr.bf16.mxu0 %v3854
        %4723 = vmatpush1.bf16.msra.mxu0 %v3853
        %4724 = vmatprep.subr.bf16.mxu0 %v3856
        %4725 = vmatpush1.bf16.msra.mxu0 %v3855
        %4726 = vmatprep.subr.bf16.mxu0 %v3858
        %4727 = vmatpush1.bf16.msra.mxu0 %v3857
        %4728 = vmatprep.subr.bf16.mxu0 %v3860
        %4729 = vmatpush1.bf16.msra.mxu0 %v3859
        %4730 = vmatprep.subr.bf16.mxu0 %v3862
        %4731 = vmatpush1.bf16.msra.mxu0 %v3861
        %4732 = vmatprep.subr.bf16.mxu0 %v3864
        %4733 = vmatpush1.bf16.msra.mxu0 %v3863
        %4734 = vmatprep.mubr.bf16.mxu0 %v2358
        %4735 = vmatmul.mubr.bf16.gmra.mrb[0].mxu0 %v2357
        %v4736 = vpop.f32.mrb[0].mxu0
        %v4737 = vadd.f32 %v4696, %v4736
        %v4738 = vpop.f32.mrb[0].mxu0
        %v4739 = vadd.f32 %v4698, %v4738
        %v4740 = vpop.f32.mrb[0].mxu0
        %v4741 = vpop.f32.mrb[0].mxu0
        %4742 = vdwg.mxu0
        %4743 = vmatprep.subr.bf16.mxu0 %v3866
        %4744 = vmatpush1.bf16.msra.mxu0 %v3865
        %4745 = vmatprep.subr.bf16.mxu0 %v3868
        %4746 = vmatpush1.bf16.msra.mxu0 %v3867
        %4747 = vmatprep.subr.bf16.mxu0 %v3870
        %4748 = vmatpush1.bf16.msra.mxu0 %v3869
        %4749 = vmatprep.subr.bf16.mxu0 %v3872
        %4750 = vmatpush1.bf16.msra.mxu0 %v3871
        %4751 = vmatprep.subr.bf16.mxu0 %v3874
        %4752 = vmatpush1.bf16.msra.mxu0 %v3873
        %4753 = vmatprep.subr.bf16.mxu0 %v3876
        %4754 = vmatpush1.bf16.msra.mxu0 %v3875
        %4755 = vmatprep.subr.bf16.mxu0 %v3878
        %4756 = vmatpush1.bf16.msra.mxu0 %v3877
        %4757 = vmatprep.subr.bf16.mxu0 %v3880
        %4758 = vmatpush1.bf16.msra.mxu0 %v3879
        %4759 = vmatprep.subr.bf16.mxu0 %v3882
        %4760 = vmatpush1.bf16.msra.mxu0 %v3881
        %4761 = vmatprep.subr.bf16.mxu0 %v3884
        %4762 = vmatpush1.bf16.msra.mxu0 %v3883
        %4763 = vmatprep.subr.bf16.mxu0 %v3886
        %4764 = vmatpush1.bf16.msra.mxu0 %v3885
        %4765 = vmatprep.subr.bf16.mxu0 %v3888
        %4766 = vmatpush1.bf16.msra.mxu0 %v3887
        %4767 = vmatprep.subr.bf16.mxu0 %v3890
        %4768 = vmatpush1.bf16.msra.mxu0 %v3889
        %4769 = vmatprep.subr.bf16.mxu0 %v3892
        %4770 = vmatpush1.bf16.msra.mxu0 %v3891
        %4771 = vmatprep.subr.bf16.mxu0 %v3894
        %4772 = vmatpush1.bf16.msra.mxu0 %v3893
        %4773 = vmatprep.subr.bf16.mxu0 %v3896
        %4774 = vmatpush1.bf16.msra.mxu0 %v3895
        %4775 = vmatprep.mubr.bf16.mxu0 %v2360
        %4776 = vmatmul.mubr.bf16.gmra.mrb[0].mxu0 %v2359
        %v4777 = vpop.f32.mrb[0].mxu0
        %v4778 = vadd.f32 %v4737, %v4777
        %v4779 = vpop.f32.mrb[0].mxu0
        %v4780 = vadd.f32 %v4739, %v4779
        %v4781 = vpop.f32.mrb[0].mxu0
        %v4782 = vpop.f32.mrb[0].mxu0
        %4783 = vdwg.mxu0
        %v4784 = vmax.f32 %v4778, 0.0
        %v4785 = vmax.f32 %v4780, 0.0
        %v4786 = vld [vmem:[#allocation19] sm:$0xf]
        %v4787 = vld [vmem:[#allocation19 + $0x4] sm:$0xf]
        %v4788 = vld [vmem:[#allocation19 + $0x8] sm:$0xf]
        %v4789 = vld [vmem:[#allocation19 + $0xc] sm:$0xf]
        %v4790 = vld [vmem:[#allocation19 + $0x10] sm:$0xf]
        %v4791 = vld [vmem:[#allocation19 + $0x14] sm:$0xf]
        %v4792 = vld [vmem:[#allocation19 + $0x18] sm:$0xf]
        %v4793 = vld [vmem:[#allocation19 + $0x1c] sm:$0xf]
        %v4794 = vld [vmem:[#allocation19 + $0x20] sm:$0xf]
        %v4795 = vld [vmem:[#allocation19 + $0x24] sm:$0xf]
        %v4796 = vld [vmem:[#allocation19 + $0x28] sm:$0xf]
        %v4797 = vld [vmem:[#allocation19 + $0x2c] sm:$0xf]
        %v4798 = vld [vmem:[#allocation19 + $0x30] sm:$0xf]
        %v4799 = vld [vmem:[#allocation19 + $0x34] sm:$0xf]
        %v4800 = vld [vmem:[#allocation19 + $0x38] sm:$0xf]
        %v4801 = vld [vmem:[#allocation19 + $0x3c] sm:$0xf]
        %v4802 = vld [vmem:[#allocation19 + $0x40] sm:$0xf]
        %v4803 = vld [vmem:[#allocation19 + $0x44] sm:$0xf]
        %v4804 = vld [vmem:[#allocation19 + $0x48] sm:$0xf]
        %v4805 = vld [vmem:[#allocation19 + $0x4c] sm:$0xf]
        %v4806 = vld [vmem:[#allocation19 + $0x50] sm:$0xf]
        %v4807 = vld [vmem:[#allocation19 + $0x54] sm:$0xf]
        %v4808 = vld [vmem:[#allocation19 + $0x58] sm:$0xf]
        %v4809 = vld [vmem:[#allocation19 + $0x5c] sm:$0xf]
        %v4810 = vld [vmem:[#allocation19 + $0x60] sm:$0xf]
        %v4811 = vld [vmem:[#allocation19 + $0x64] sm:$0xf]
        %v4812 = vld [vmem:[#allocation19 + $0x68] sm:$0xf]
        %v4813 = vld [vmem:[#allocation19 + $0x6c] sm:$0xf]
        %v4814 = vld [vmem:[#allocation19 + $0x70] sm:$0xf]
        %v4815 = vld [vmem:[#allocation19 + $0x74] sm:$0xf]
        %v4816 = vld [vmem:[#allocation19 + $0x78] sm:$0xf]
        %v4817 = vld [vmem:[#allocation19 + $0x7c] sm:$0xf]
        %v4818 = vpack.c.bf16 %v4784, %v4784
        %v4819 = vpack.c.bf16 %v4785, %v4785
        %v4852 = vunpack.c.l.b16 %v4786
        %v4853 = vunpack.c.l.b16 %v4787
        %v4854 = vunpack.c.l.b16 %v4788
        %v4855 = vunpack.c.l.b16 %v4789
        %v4856 = vunpack.c.l.b16 %v4790
        %v4857 = vunpack.c.l.b16 %v4791
        %v4858 = vunpack.c.l.b16 %v4792
        %v4859 = vunpack.c.l.b16 %v4793
        %v4860 = vunpack.c.l.b16 %v4794
        %v4861 = vunpack.c.l.b16 %v4795
        %v4862 = vunpack.c.l.b16 %v4796
        %v4863 = vunpack.c.l.b16 %v4797
        %v4864 = vunpack.c.l.b16 %v4798
        %v4865 = vunpack.c.l.b16 %v4799
        %v4866 = vunpack.c.l.b16 %v4800
        %v4867 = vunpack.c.l.b16 %v4801
        %v4868 = vunpack.c.l.b16 %v4802
        %v4869 = vunpack.c.l.b16 %v4803
        %v4870 = vunpack.c.l.b16 %v4804
        %v4871 = vunpack.c.l.b16 %v4805
        %v4872 = vunpack.c.l.b16 %v4806
        %v4873 = vunpack.c.l.b16 %v4807
        %v4874 = vunpack.c.l.b16 %v4808
        %v4875 = vunpack.c.l.b16 %v4809
        %v4876 = vunpack.c.l.b16 %v4810
        %v4877 = vunpack.c.l.b16 %v4811
        %v4878 = vunpack.c.l.b16 %v4812
        %v4879 = vunpack.c.l.b16 %v4813
        %v4880 = vunpack.c.l.b16 %v4814
        %v4881 = vunpack.c.l.b16 %v4815
        %v4882 = vunpack.c.l.b16 %v4816
        %v4883 = vunpack.c.l.b16 %v4817
        %v4884 = vpack.c.b16 %v4853, %v4852
        %v4885 = vpack.c.b16 %v4855, %v4854
        %v4886 = vpack.c.b16 %v4857, %v4856
        %v4887 = vpack.c.b16 %v4859, %v4858
        %v4888 = vpack.c.b16 %v4861, %v4860
        %v4889 = vpack.c.b16 %v4863, %v4862
        %v4890 = vpack.c.b16 %v4865, %v4864
        %v4891 = vpack.c.b16 %v4867, %v4866
        %v4892 = vpack.c.b16 %v4869, %v4868
        %v4893 = vpack.c.b16 %v4871, %v4870
        %v4894 = vpack.c.b16 %v4873, %v4872
        %v4895 = vpack.c.b16 %v4875, %v4874
        %v4896 = vpack.c.b16 %v4877, %v4876
        %v4897 = vpack.c.b16 %v4879, %v4878
        %v4898 = vpack.c.b16 %v4881, %v4880
        %v4899 = vpack.c.b16 %v4883, %v4882
        %4916 = vmatprep.subr.bf16.mxu0 0
        %4917 = vmatpush1.bf16.msra.mxu0 %v4884
        %4918 = vmatprep.subr.bf16.mxu0 0
        %4919 = vmatpush1.bf16.msra.mxu0 %v4885
        %4920 = vmatprep.subr.bf16.mxu0 0
        %4921 = vmatpush1.bf16.msra.mxu0 %v4886
        %4922 = vmatprep.subr.bf16.mxu0 0
        %4923 = vmatpush1.bf16.msra.mxu0 %v4887
        %4924 = vmatprep.subr.bf16.mxu0 0
        %4925 = vmatpush1.bf16.msra.mxu0 %v4888
        %4926 = vmatprep.subr.bf16.mxu0 0
        %4927 = vmatpush1.bf16.msra.mxu0 %v4889
        %4928 = vmatprep.subr.bf16.mxu0 0
        %4929 = vmatpush1.bf16.msra.mxu0 %v4890
        %4930 = vmatprep.subr.bf16.mxu0 0
        %4931 = vmatpush1.bf16.msra.mxu0 %v4891
        %4932 = vmatprep.subr.bf16.mxu0 0
        %4933 = vmatpush1.bf16.msra.mxu0 %v4892
        %4934 = vmatprep.subr.bf16.mxu0 0
        %4935 = vmatpush1.bf16.msra.mxu0 %v4893
        %4936 = vmatprep.subr.bf16.mxu0 0
        %4937 = vmatpush1.bf16.msra.mxu0 %v4894
        %4938 = vmatprep.subr.bf16.mxu0 0
        %4939 = vmatpush1.bf16.msra.mxu0 %v4895
        %4940 = vmatprep.subr.bf16.mxu0 0
        %4941 = vmatpush1.bf16.msra.mxu0 %v4896
        %4942 = vmatprep.subr.bf16.mxu0 0
        %4943 = vmatpush1.bf16.msra.mxu0 %v4897
        %4944 = vmatprep.subr.bf16.mxu0 0
        %4945 = vmatpush1.bf16.msra.mxu0 %v4898
        %4946 = vmatprep.subr.bf16.mxu0 0
        %4947 = vmatpush1.bf16.msra.mxu0 %v4899
        %4948 = vmatprep.mubr.bf16.mxu0 %v4819
        %4949 = vmatmul.mubr.bf16.gmra.mrb[0].mxu0 %v4818
        %v4950 = vpop.f32.mrb[0].mxu0
        %v4951 = vadd.f32 %v523, %v4950
        %v4952 = vpop.f32.mrb[0].mxu0
        %v4953 = vpop.f32.mrb[0].mxu0
        %v4954 = vpop.f32.mrb[0].mxu0
        %4955 = vdwg.mxu0
        %4956 = vst [vmem:[%s512] sm:$0x1] %v4951
        %s4957 = sand.u32 %s275, 1
        %s4958 = scalar_lea.sflag [#allocation7], %s4957
        %s4959 = sand.u32 %s275, 1
        %s4960 = scalar_lea.vmem [#allocation22], %s4959
        // Predicated region
        $region105: #{simple_cnn_forward.1} parent=63 // pred_check
          %p4961 = pneg %p285
        $region106: #{simple_cnn_forward.1} parent=63 // pred_check_branch
          %4963 = sbr.rel (%p4961) target = $region108
        $region107: #{simple_cnn_forward.1} parent=63 // pred_region
          %s4965 = ssub.s32 16, 16
          %4966 = vsyncadd %s4958, %s4965
          %s4967 = smul.addr %s31, 16
          %s4968 = scalar_lea.hbm %s11, %s4967
          %s4970 = sshll.u32 %s4960, 4
          %s4971 = int_to_ptr.vmem [resolvable:$true] %s4970
          %4973 = dma.vmem_to_hbm [thread:$0]  %s4971, 16, %s4968, %s4958
        $region108: #{simple_cnn_forward.1} parent=63 // pred_fallthru
          _
      $region64: #{simple_cnn_forward.1} parent=5 // pred_fallthru
        _
      %p4974 = scmp.le.s32.totalorder 2, %s26
      // Predicated region
      $region109: #{simple_cnn_forward.1} parent=5 // pred_check
        %p4975 = pneg %p4974
      $region110: #{simple_cnn_forward.1} parent=5 // pred_check_branch
        %4977 = sbr.rel (%p4975) target = $region112
      $region111: #{simple_cnn_forward.1} parent=5 // pred_region
        %s4978 = ssub.s32 %s26, 2
        // Predicated region
        $region113: #{simple_cnn_forward.1} parent=111 // pred_check
          %p4979 = pneg %p291
        $region114: #{simple_cnn_forward.1} parent=111 // pred_check_branch
          %4981 = sbr.rel (%p4979) target = $region116
        $region115: #{simple_cnn_forward.1} parent=111 // pred_region
          %s4982 = sand.u32 %s276, 1
          %s4983 = scalar_lea.sflag [#allocation7], %s4982
          %s4984 = sand.u32 %s276, 1
          %s4985 = scalar_lea.vmem [#allocation22], %s4984
          %4986 = dma.done %s4983, 16
        $region116: #{simple_cnn_forward.1} parent=111 // pred_fallthru
          _
      $region112: #{simple_cnn_forward.1} parent=5 // pred_fallthru
        _
    $region6: #{simple_cnn_forward.1} parent=1 // loop_footer
      %s30 = sadd.s32 1, %s26
    $region7: #{simple_cnn_forward.1} parent=1 // loop_footer_branch
      %25 = sbr.rel target = $region3
    $region8: #{simple_cnn_forward.1} parent=1 // loop_exit
      _
    %4987 = vsyncpa [#allocation6], 1
    %s4988 = scalar_lea.sflag [#allocation6], 1
    %4989 = vsyncpa %s4988, 1
    %4990 = vsyncpa [#allocation9], 1
    %4991 = vsyncpa [#allocation12], 1
    %4992 = vsyncpa [#allocation15], 1
    %4993 = vsyncpa [#allocation18], 1
    %4994 = vsyncpa [#allocation21], 1
    %4995 = vsyncpa [#allocation7], 1
    %s4996 = scalar_lea.sflag [#allocation7], 1
    %4997 = vsyncpa %s4996, 1

</llo_original>
